<compile_context>
chip_gen: v7x
topology: tpu7x:2x2x1
jax: 0.10.0
libtpu: 0.0.40
codegen_flags: <defaults>
</compile_context>

<pallas_src>
import functools
from typing import NamedTuple

import jax
import jax.numpy as jnp
from jax.experimental import pallas as pl
from jax.experimental.pallas import tpu as pltpu

LN_EPS = 1e-5        # PyTorch nn.LayerNorm default
L2_EPS = 1e-12       # PyTorch F.normalize default


def _round_up(x, m):
    return (x + m - 1) // m * m


# ----------------------------------------------------------------------------
# One-time hardware probe (import time, not per call).
# ----------------------------------------------------------------------------
def _detect_tpu():
    kind = ""
    try:
        dev = jax.devices()[0]
        if dev.platform == "tpu":
            kind = str(getattr(dev, "device_kind", "")).lower()
    except Exception:
        pass
    num_tc = 2 if "v7" in kind else 1                       # TCs per chip
    # Packed bf16 VPU exists on v6e/v7x; be conservative on older parts.
    bf16_vpu = not any(v in kind for v in ("v2", "v3", "v4", "v5"))
    vmem_cap = 64 * 1024 * 1024 if "v7" in kind else 128 * 1024 * 1024
    try:
        vmem_cap = int(getattr(pltpu.get_tpu_info(), "vmem_capacity_bytes",
                               vmem_cap))
    except Exception:
        pass
    return kind, vmem_cap, num_tc, bf16_vpu


_TPU_KIND, _VMEM_CAP, _NUM_TC, _BF16_VPU = _detect_tpu()


# ----------------------------------------------------------------------------
# Kernel
# ----------------------------------------------------------------------------
def _ln_silu(h, gamma, beta, elem_dtype):
    """LayerNorm (single pass, biased var, f32 stats) + SiLU.

    h: (TB, F) f32 matmul accumulator.  The post-statistics affine and SiLU
    run in `elem_dtype` (bf16 on v6e/v7x -> half the VPU passes and the
    result feeds the next MXU dot directly; f32 on v5e).
    """
    f = h.shape[-1]
    s = jnp.sum(h, axis=-1, keepdims=True)
    ss = jnp.sum(h * h, axis=-1, keepdims=True)
    mean = s * (1.0 / f)
    var = ss * (1.0 / f) - mean * mean
    inv = jax.lax.rsqrt(var + LN_EPS)
    y = ((h - mean) * inv).astype(elem_dtype) * gamma.astype(elem_dtype) \
        + beta.astype(elem_dtype)
    return y * jax.nn.sigmoid(y)


def corr_kernel(x_ref, y_ref,
                w1x_ref, w1y_ref, b1_ref, g1_ref, be1_ref,
                w2_ref, b2_ref, g2_ref, be2_ref,
                w3_ref, b3_ref,
                o_ref, *, elem_dtype):
    # bf16 MXU operands, f32 accumulation.
    x = x_ref[...].astype(jnp.bfloat16)                      # (TB, Lp)
    y = y_ref[...].astype(jnp.bfloat16)                      # (TB, Lp)

    # --- Linear(2L -> 1024) as split matmul (no concat) + LN + SiLU ---
    h = (jnp.dot(x, w1x_ref[...], preferred_element_type=jnp.float32)
         + jnp.dot(y, w1y_ref[...], preferred_element_type=jnp.float32)
         + b1_ref[...])
    h = _ln_silu(h, g1_ref[...], be1_ref[...], elem_dtype)
    # Dropout(0.1): identity in eval mode.

    # --- Linear(1024 -> 512) + LN + SiLU ---
    h = jnp.dot(h.astype(jnp.bfloat16), w2_ref[...],
                preferred_element_type=jnp.float32) + b2_ref[...]
    h = _ln_silu(h, g2_ref[...], be2_ref[...], elem_dtype)
    # Dropout(0.05): identity in eval mode.

    # --- Linear(512 -> L) + Tanh (f32; tanh goes to the EUP slot) ---
    h = jnp.dot(h.astype(jnp.bfloat16), w3_ref[...],
                preferred_element_type=jnp.float32) + b3_ref[...]
    h = jnp.tanh(h)

    # --- L2 normalize along the feature dim (f32; padded cols are exactly 0)
    sumsq = jnp.sum(h * h, axis=-1, keepdims=True)
    inv = jax.lax.rsqrt(jnp.maximum(sumsq, L2_EPS * L2_EPS))
    o_ref[...] = (h * inv).astype(o_ref.dtype)


# ----------------------------------------------------------------------------
# One-time parameter packing (off the per-call path)
# ----------------------------------------------------------------------------
class PreparedParams(NamedTuple):
    w1x: jax.Array
    w1y: jax.Array
    b1: jax.Array
    g1: jax.Array
    be1: jax.Array
    w2: jax.Array
    b2: jax.Array
    g2: jax.Array
    be2: jax.Array
    w3: jax.Array
    b3: jax.Array
    L: int
    Lp: int
    D1: int
    D2: int


def prepare_params(params):
    """Split/cast/pad the module weights once.  Call this once per model."""
    (w1, b1, g1, be1, w2, b2, g2, be2, w3, b3) = params
    d_in, D1 = w1.shape
    D2 = w2.shape[1]
    L = w3.shape[1]
    assert d_in == 2 * L
    Lp = _round_up(L, 128)                       # lane-dense feature dim

    w1x = w1[:L].astype(jnp.bfloat16)
    w1y = w1[L:].astype(jnp.bfloat16)
    w3b = w3.astype(jnp.bfloat16)
    b3f = b3.astype(jnp.float32).reshape(1, L)
    if Lp != L:
        w1x = jnp.pad(w1x, ((0, Lp - L), (0, 0)))    # zero rows: x_pad @ w = x @ w
        w1y = jnp.pad(w1y, ((0, Lp - L), (0, 0)))
        w3b = jnp.pad(w3b, ((0, 0), (0, Lp - L)))    # zero cols -> tanh(0)=0
        b3f = jnp.pad(b3f, ((0, 0), (0, Lp - L)))

    prep = PreparedParams(
        w1x=w1x, w1y=w1y,
        b1=b1.astype(jnp.float32).reshape(1, D1),
        g1=g1.astype(jnp.float32).reshape(1, D1),
        be1=be1.astype(jnp.float32).reshape(1, D1),
        w2=w2.astype(jnp.bfloat16),
        b2=b2.astype(jnp.float32).reshape(1, D2),
        g2=g2.astype(jnp.float32).reshape(1, D2),
        be2=be2.astype(jnp.float32).reshape(1, D2),
        w3=w3b, b3=b3f, L=L, Lp=Lp, D1=D1, D2=D2)
    # Materialize once here so the cost never shows up on the forward path.
    jax.block_until_ready([prep.w1x, prep.w1y, prep.w2, prep.w3])
    return prep


# ----------------------------------------------------------------------------
# pallas_call builder (cached per shape/tile/dtype) and forward wrapper
# ----------------------------------------------------------------------------
@functools.lru_cache(maxsize=None)
def _build_forward(B, L, Lp, D1, D2, tb, in_dtype_name, elem_dtype_name,
                   vmem_limit):
    Bp = _round_up(B, tb)
    in_dtype = jnp.dtype(in_dtype_name)
    elem_dtype = jnp.dtype(elem_dtype_name)
    kernel = functools.partial(corr_kernel, elem_dtype=elem_dtype)

    row_spec = lambda shape: pl.BlockSpec(shape, lambda i: (i, 0))
    # Constant index_map -> the block never changes across grid steps, so it
    # is DMA'd once and stays resident in VMEM.
    const_spec = lambda shape: pl.BlockSpec(shape, lambda i: (0, 0))

    call = pl.pallas_call(
        kernel,
        out_shape=jax.ShapeDtypeStruct((Bp, Lp), in_dtype),
        grid_spec=pltpu.PrefetchScalarGridSpec(
            num_scalar_prefetch=0,
            grid=(Bp // tb,),
            in_specs=[
                row_spec((tb, Lp)),            # X tile
                row_spec((tb, Lp)),            # Y tile
                const_spec((Lp, D1)),          # w1[:L]   (bf16)
                const_spec((Lp, D1)),          # w1[L:]   (bf16)
                const_spec((1, D1)),           # b1
                const_spec((1, D1)),           # gamma1
                const_spec((1, D1)),           # beta1
                const_spec((D1, D2)),          # w2       (bf16)
                const_spec((1, D2)),           # b2
                const_spec((1, D2)),           # gamma2
                const_spec((1, D2)),           # beta2
                const_spec((D2, Lp)),          # w3       (bf16)
                const_spec((1, Lp)),           # b3
            ],
            out_specs=row_spec((tb, Lp)),
        ),
        compiler_params=pltpu.CompilerParams(
            dimension_semantics=("parallel",),
            vmem_limit_bytes=int(vmem_limit)),
    )

    def fwd(x, y, *ps):
        pad_b, pad_l = Bp - B, Lp - L
        if pad_b or pad_l:
            x = jnp.pad(x, ((0, pad_b), (0, pad_l)))
            y = jnp.pad(y, ((0, pad_b), (0, pad_l)))
        out = call(x, y, *ps)
        return out[:B, :L]

    return jax.jit(fwd)


def _choose_tb(B, tile_b):
    """Generation-aware batch tile.

    v5e/v6e (1 TC): one tile of round_up(B,16) rows for small batches (no
    forced 2-step split).  v7x (2 TCs): split into >=2 parallel steps only
    when each core gets a non-trivial MXU tile (B >= 512).
    """
    if _NUM_TC >= 2 and B >= 2 * 256:
        target = _round_up((B + _NUM_TC - 1) // _NUM_TC, 16)
    else:
        target = _round_up(B, 16)
    return max(16, min(_round_up(int(tile_b), 16), target))


def miyawaki_clip_correlation(X_lat, Y_lat, prep, *, tile_b=512):
    """Pallas forward pass.  X_lat, Y_lat: (B, L); prep = prepare_params(...).

    Inputs may be float32 or bfloat16 (bf16 inputs halve the per-tile DMA on
    bandwidth-limited parts); the kernel casts MXU operands to bf16 itself.
    """
    B, L = X_lat.shape
    assert Y_lat.shape == (B, L) and L == prep.L

    tb = _choose_tb(B, tile_b)
    # Cap the VMEM request below physical VMEM (48 MiB on v7x, 64 MiB on
    # v5e/v6e) to leave headroom for compiler-internal scratch.
    vmem_limit = min(64 * 1024 * 1024, (_VMEM_CAP * 3) // 4)
    elem_name = "bfloat16" if _BF16_VPU else "float32"

    fwd = _build_forward(B, L, prep.Lp, prep.D1, prep.D2, tb,
                         jnp.dtype(X_lat.dtype).name, elem_name, vmem_limit)
    return fwd(X_lat, Y_lat,
               prep.w1x, prep.w1y, prep.b1, prep.g1, prep.be1,
               prep.w2, prep.b2, prep.g2, prep.be2, prep.w3, prep.b3)


# ----------------------------------------------------------------------------
# Synthetic parameters + pure-JAX reference (matches PyTorch semantics)
# ----------------------------------------------------------------------------
def init_params(key, latent_dim):
    ks = jax.random.split(key, 6)
    d_in = latent_dim * 2
    scale = lambda fan_in: 1.0 / jnp.sqrt(jnp.float32(fan_in))
    w1 = jax.random.normal(ks[0], (d_in, 1024), jnp.float32) * scale(d_in)
    b1 = jax.random.normal(ks[1], (1, 1024), jnp.float32) * 0.01
    g1 = jnp.ones((1, 1024), jnp.float32)
    be1 = jnp.zeros((1, 1024), jnp.float32)
    w2 = jax.random.normal(ks[2], (1024, 512), jnp.float32) * scale(1024)
    b2 = jax.random.normal(ks[3], (1, 512), jnp.float32) * 0.01
    g2 = jnp.ones((1, 512), jnp.float32)
    be2 = jnp.zeros((1, 512), jnp.float32)
    w3 = jax.random.normal(ks[4], (512, latent_dim), jnp.float32) * scale(512)
    b3 = jax.random.normal(ks[5], (1, latent_dim), jnp.float32) * 0.01
    return (w1, b1, g1, be1, w2, b2, g2, be2, w3, b3)


def reference_forward(X_lat, Y_lat, params):
    (w1, b1, g1, be1, w2, b2, g2, be2, w3, b3) = params

    def ln(h, g, be):
        m = jnp.mean(h, axis=-1, keepdims=True)
        v = jnp.mean((h - m) ** 2, axis=-1, keepdims=True)
        return (h - m) * jax.lax.rsqrt(v + LN_EPS) * g + be

    x = jnp.concatenate([X_lat, Y_lat], axis=1)
    h = ln(x @ w1 + b1, g1, be1)
    h = h * jax.nn.sigmoid(h)
    h = ln(h @ w2 + b2, g2, be2)
    h = h * jax.nn.sigmoid(h)
    h = jnp.tanh(h @ w3 + b3)
    n = jnp.maximum(jnp.linalg.norm(h, axis=1, keepdims=True), L2_EPS)
    return h / n


if __name__ == "__main__":
    latent_dim = 96    # not a multiple of 128 -> exercises feature padding
    batch = 40         # not a multiple of 16  -> exercises batch padding

    key = jax.random.PRNGKey(0)
    kx, ky, kp = jax.random.split(key, 3)
    X_lat = jax.random.normal(kx, (batch, latent_dim), jnp.float32)
    Y_lat = jax.random.normal(ky, (batch, latent_dim), jnp.float32)

    raw = init_params(kp, latent_dim)
    prep = prepare_params(raw)                     # one-time packing

    # Default path: single (48, 128) tile, one grid step.
    out = miyawaki_clip_correlation(X_lat, Y_lat, prep)
    out = jax.block_until_ready(out)

    # Small-tile path: tb=16 -> 3 grid steps (exercises the pipelined grid).
    out_tiled = miyawaki_clip_correlation(X_lat, Y_lat, prep, tile_b=16)
    out_tiled = jax.block_until_ready(out_tiled)

    ref = reference_forward(X_lat, Y_lat, raw)
    assert out.shape == (batch, latent_dim)
    # Rows are unit-norm (norm computed in f32 inside the kernel).
    assert jnp.allclose(jnp.linalg.norm(out, axis=1), 1.0, atol=1e-4)
    # bf16 MXU operands (+ bf16 LN/SiLU on v6e/v7x) vs fp32 reference.
    assert jnp.allclose(out, ref, atol=3e-2, rtol=3e-2), "mismatch vs reference"
    assert jnp.allclose(out_tiled, ref, atol=3e-2, rtol=3e-2), \
        "mismatch vs reference (tiled path)"

    print("KERNEL_OK")
</pallas_src>

<mosaic_0001>
module attributes {stable_mosaic.version = 11 : i64} {
  func.func @corr_kernel(%arg0: i32, %arg1: memref<48x128xf32, #tpu.memory_space<vmem>>, %arg2: memref<48x128xf32, #tpu.memory_space<vmem>>, %arg3: memref<128x1024xbf16, #tpu.memory_space<vmem>>, %arg4: memref<128x1024xbf16, #tpu.memory_space<vmem>>, %arg5: memref<1x1024xf32, #tpu.memory_space<vmem>>, %arg6: memref<1x1024xf32, #tpu.memory_space<vmem>>, %arg7: memref<1x1024xf32, #tpu.memory_space<vmem>>, %arg8: memref<1024x512xbf16, #tpu.memory_space<vmem>>, %arg9: memref<1x512xf32, #tpu.memory_space<vmem>>, %arg10: memref<1x512xf32, #tpu.memory_space<vmem>>, %arg11: memref<1x512xf32, #tpu.memory_space<vmem>>, %arg12: memref<512x128xbf16, #tpu.memory_space<vmem>>, %arg13: memref<1x128xf32, #tpu.memory_space<vmem>>, %arg14: memref<48x128xf32, #tpu.memory_space<vmem>>) attributes {dimension_semantics = [#tpu.dimension_semantics<parallel>], iteration_bounds = array<i64: 1>, scalar_prefetch = 0 : i64, scratch_operands = 0 : i64, tpu.core_type = #tpu.core_type<tc>, window_params = [{transform_indices = @transform_0, window_bounds = array<i64: 48, 128>}, {transform_indices = @transform_1, window_bounds = array<i64: 48, 128>}, {pipeline_mode = #tpu.pipeline_mode<synchronous>, transform_indices = @transform_2, window_bounds = array<i64: 128, 1024>}, {pipeline_mode = #tpu.pipeline_mode<synchronous>, transform_indices = @transform_3, window_bounds = array<i64: 128, 1024>}, {pipeline_mode = #tpu.pipeline_mode<synchronous>, transform_indices = @transform_4, window_bounds = array<i64: 1, 1024>}, {pipeline_mode = #tpu.pipeline_mode<synchronous>, transform_indices = @transform_5, window_bounds = array<i64: 1, 1024>}, {pipeline_mode = #tpu.pipeline_mode<synchronous>, transform_indices = @transform_6, window_bounds = array<i64: 1, 1024>}, {pipeline_mode = #tpu.pipeline_mode<synchronous>, transform_indices = @transform_7, window_bounds = array<i64: 1024, 512>}, {pipeline_mode = #tpu.pipeline_mode<synchronous>, transform_indices = @transform_8, window_bounds = array<i64: 1, 512>}, {pipeline_mode = #tpu.pipeline_mode<synchronous>, transform_indices = @transform_9, window_bounds = array<i64: 1, 512>}, {pipeline_mode = #tpu.pipeline_mode<synchronous>, transform_indices = @transform_10, window_bounds = array<i64: 1, 512>}, {pipeline_mode = #tpu.pipeline_mode<synchronous>, transform_indices = @transform_11, window_bounds = array<i64: 512, 128>}, {pipeline_mode = #tpu.pipeline_mode<synchronous>, transform_indices = @transform_12, window_bounds = array<i64: 1, 128>}, {transform_indices = @transform_13, window_bounds = array<i64: 48, 128>}]} {
    %c0 = arith.constant 0 : index
    %c0_0 = arith.constant 0 : index
    %0 = vector.load %arg1[%c0, %c0_0] : memref<48x128xf32, #tpu.memory_space<vmem>>, vector<48x128xf32>
    %1 = arith.truncf %0 : vector<48x128xf32> to vector<48x128xbf16>
    %c0_1 = arith.constant 0 : index
    %c0_2 = arith.constant 0 : index
    %2 = vector.load %arg2[%c0_1, %c0_2] : memref<48x128xf32, #tpu.memory_space<vmem>>, vector<48x128xf32>
    %3 = arith.truncf %2 : vector<48x128xf32> to vector<48x128xbf16>
    %c0_3 = arith.constant 0 : index
    %c0_4 = arith.constant 0 : index
    %4 = vector.load %arg3[%c0_3, %c0_4] : memref<128x1024xbf16, #tpu.memory_space<vmem>>, vector<128x1024xbf16>
    %cst = arith.constant dense<0.000000e+00> : vector<48x1024xf32>
    %5 = tpu.matmul %1, %4, %cst {dimension_numbers = #tpu.dot_dimension_numbers<[1], [0], [0], [1], [0, 0, 1, 1], [], []>} : vector<48x128xbf16>, vector<128x1024xbf16>, vector<48x1024xf32> -> vector<48x1024xf32>
    %c0_5 = arith.constant 0 : index
    %c0_6 = arith.constant 0 : index
    %6 = vector.load %arg4[%c0_5, %c0_6] : memref<128x1024xbf16, #tpu.memory_space<vmem>>, vector<128x1024xbf16>
    %cst_7 = arith.constant dense<0.000000e+00> : vector<48x1024xf32>
    %7 = tpu.matmul %3, %6, %cst_7 {dimension_numbers = #tpu.dot_dimension_numbers<[1], [0], [0], [1], [0, 0, 1, 1], [], []>} : vector<48x128xbf16>, vector<128x1024xbf16>, vector<48x1024xf32> -> vector<48x1024xf32>
    %8 = arith.addf %5, %7 : vector<48x1024xf32>
    %c0_8 = arith.constant 0 : index
    %c0_9 = arith.constant 0 : index
    %9 = vector.load %arg5[%c0_8, %c0_9] : memref<1x1024xf32, #tpu.memory_space<vmem>>, vector<1x1024xf32>
    %10 = vector.broadcast %9 : vector<1x1024xf32> to vector<48x1024xf32>
    %11 = arith.addf %8, %10 : vector<48x1024xf32>
    %c0_10 = arith.constant 0 : index
    %c0_11 = arith.constant 0 : index
    %12 = vector.load %arg6[%c0_10, %c0_11] : memref<1x1024xf32, #tpu.memory_space<vmem>>, vector<1x1024xf32>
    %c0_12 = arith.constant 0 : index
    %c0_13 = arith.constant 0 : index
    %13 = vector.load %arg7[%c0_12, %c0_13] : memref<1x1024xf32, #tpu.memory_space<vmem>>, vector<1x1024xf32>
    %cst_14 = arith.constant dense<0.000000e+00> : vector<48xf32>
    %14 = vector.multi_reduction <add>, %11, %cst_14 [1] : vector<48x1024xf32> to vector<48xf32>
    %15 = vector.shape_cast %14 : vector<48xf32> to vector<48x1xf32>
    %16 = arith.mulf %11, %11 : vector<48x1024xf32>
    %cst_15 = arith.constant dense<0.000000e+00> : vector<48xf32>
    %17 = vector.multi_reduction <add>, %16, %cst_15 [1] : vector<48x1024xf32> to vector<48xf32>
    %18 = vector.shape_cast %17 : vector<48xf32> to vector<48x1xf32>
    %cst_16 = arith.constant 9.765625E-4 : f32
    %19 = vector.broadcast %cst_16 : f32 to vector<48x1xf32>
    %20 = arith.mulf %15, %19 : vector<48x1xf32>
    %cst_17 = arith.constant 9.765625E-4 : f32
    %21 = vector.broadcast %cst_17 : f32 to vector<48x1xf32>
    %22 = arith.mulf %18, %21 : vector<48x1xf32>
    %23 = arith.mulf %20, %20 : vector<48x1xf32>
    %24 = arith.subf %22, %23 : vector<48x1xf32>
    %cst_18 = arith.constant 9.99999974E-6 : f32
    %25 = vector.broadcast %cst_18 : f32 to vector<48x1xf32>
    %26 = arith.addf %24, %25 : vector<48x1xf32>
    %27 = math.rsqrt %26 : vector<48x1xf32>
    %28 = vector.broadcast %20 : vector<48x1xf32> to vector<48x1024xf32>
    %29 = arith.subf %11, %28 : vector<48x1024xf32>
    %30 = vector.broadcast %27 : vector<48x1xf32> to vector<48x1024xf32>
    %31 = arith.mulf %29, %30 : vector<48x1024xf32>
    %32 = arith.truncf %31 : vector<48x1024xf32> to vector<48x1024xbf16>
    %33 = arith.truncf %12 : vector<1x1024xf32> to vector<1x1024xbf16>
    %34 = vector.broadcast %33 : vector<1x1024xbf16> to vector<48x1024xbf16>
    %35 = arith.mulf %32, %34 : vector<48x1024xbf16>
    %36 = arith.truncf %13 : vector<1x1024xf32> to vector<1x1024xbf16>
    %37 = vector.broadcast %36 : vector<1x1024xbf16> to vector<48x1024xbf16>
    %38 = arith.addf %35, %37 : vector<48x1024xbf16>
    %39 = arith.negf %38 : vector<48x1024xbf16>
    %40 = math.exp %39 : vector<48x1024xbf16>
    %cst_19 = arith.constant 1.000000e+00 : bf16
    %41 = vector.broadcast %cst_19 : bf16 to vector<48x1024xbf16>
    %42 = arith.addf %41, %40 : vector<48x1024xbf16>
    %43 = arith.divf %41, %42 : vector<48x1024xbf16>
    %44 = arith.mulf %38, %43 : vector<48x1024xbf16>
    %c0_20 = arith.constant 0 : index
    %c0_21 = arith.constant 0 : index
    %45 = vector.load %arg8[%c0_20, %c0_21] : memref<1024x512xbf16, #tpu.memory_space<vmem>>, vector<1024x512xbf16>
    %cst_22 = arith.constant dense<0.000000e+00> : vector<48x512xf32>
    %46 = tpu.matmul %44, %45, %cst_22 {dimension_numbers = #tpu.dot_dimension_numbers<[1], [0], [0], [1], [0, 0, 1, 1], [], []>} : vector<48x1024xbf16>, vector<1024x512xbf16>, vector<48x512xf32> -> vector<48x512xf32>
    %c0_23 = arith.constant 0 : index
    %c0_24 = arith.constant 0 : index
    %47 = vector.load %arg9[%c0_23, %c0_24] : memref<1x512xf32, #tpu.memory_space<vmem>>, vector<1x512xf32>
    %48 = vector.broadcast %47 : vector<1x512xf32> to vector<48x512xf32>
    %49 = arith.addf %46, %48 : vector<48x512xf32>
    %c0_25 = arith.constant 0 : index
    %c0_26 = arith.constant 0 : index
    %50 = vector.load %arg10[%c0_25, %c0_26] : memref<1x512xf32, #tpu.memory_space<vmem>>, vector<1x512xf32>
    %c0_27 = arith.constant 0 : index
    %c0_28 = arith.constant 0 : index
    %51 = vector.load %arg11[%c0_27, %c0_28] : memref<1x512xf32, #tpu.memory_space<vmem>>, vector<1x512xf32>
    %cst_29 = arith.constant dense<0.000000e+00> : vector<48xf32>
    %52 = vector.multi_reduction <add>, %49, %cst_29 [1] : vector<48x512xf32> to vector<48xf32>
    %53 = vector.shape_cast %52 : vector<48xf32> to vector<48x1xf32>
    %54 = arith.mulf %49, %49 : vector<48x512xf32>
    %cst_30 = arith.constant dense<0.000000e+00> : vector<48xf32>
    %55 = vector.multi_reduction <add>, %54, %cst_30 [1] : vector<48x512xf32> to vector<48xf32>
    %56 = vector.shape_cast %55 : vector<48xf32> to vector<48x1xf32>
    %cst_31 = arith.constant 0.001953125 : f32
    %57 = vector.broadcast %cst_31 : f32 to vector<48x1xf32>
    %58 = arith.mulf %53, %57 : vector<48x1xf32>
    %cst_32 = arith.constant 0.001953125 : f32
    %59 = vector.broadcast %cst_32 : f32 to vector<48x1xf32>
    %60 = arith.mulf %56, %59 : vector<48x1xf32>
    %61 = arith.mulf %58, %58 : vector<48x1xf32>
    %62 = arith.subf %60, %61 : vector<48x1xf32>
    %cst_33 = arith.constant 9.99999974E-6 : f32
    %63 = vector.broadcast %cst_33 : f32 to vector<48x1xf32>
    %64 = arith.addf %62, %63 : vector<48x1xf32>
    %65 = math.rsqrt %64 : vector<48x1xf32>
    %66 = vector.broadcast %58 : vector<48x1xf32> to vector<48x512xf32>
    %67 = arith.subf %49, %66 : vector<48x512xf32>
    %68 = vector.broadcast %65 : vector<48x1xf32> to vector<48x512xf32>
    %69 = arith.mulf %67, %68 : vector<48x512xf32>
    %70 = arith.truncf %69 : vector<48x512xf32> to vector<48x512xbf16>
    %71 = arith.truncf %50 : vector<1x512xf32> to vector<1x512xbf16>
    %72 = vector.broadcast %71 : vector<1x512xbf16> to vector<48x512xbf16>
    %73 = arith.mulf %70, %72 : vector<48x512xbf16>
    %74 = arith.truncf %51 : vector<1x512xf32> to vector<1x512xbf16>
    %75 = vector.broadcast %74 : vector<1x512xbf16> to vector<48x512xbf16>
    %76 = arith.addf %73, %75 : vector<48x512xbf16>
    %77 = arith.negf %76 : vector<48x512xbf16>
    %78 = math.exp %77 : vector<48x512xbf16>
    %cst_34 = arith.constant 1.000000e+00 : bf16
    %79 = vector.broadcast %cst_34 : bf16 to vector<48x512xbf16>
    %80 = arith.addf %79, %78 : vector<48x512xbf16>
    %81 = arith.divf %79, %80 : vector<48x512xbf16>
    %82 = arith.mulf %76, %81 : vector<48x512xbf16>
    %c0_35 = arith.constant 0 : index
    %c0_36 = arith.constant 0 : index
    %83 = vector.load %arg12[%c0_35, %c0_36] : memref<512x128xbf16, #tpu.memory_space<vmem>>, vector<512x128xbf16>
    %cst_37 = arith.constant dense<0.000000e+00> : vector<48x128xf32>
    %84 = tpu.matmul %82, %83, %cst_37 {dimension_numbers = #tpu.dot_dimension_numbers<[1], [0], [0], [1], [0, 0, 1, 1], [], []>} : vector<48x512xbf16>, vector<512x128xbf16>, vector<48x128xf32> -> vector<48x128xf32>
    %c0_38 = arith.constant 0 : index
    %c0_39 = arith.constant 0 : index
    %85 = vector.load %arg13[%c0_38, %c0_39] : memref<1x128xf32, #tpu.memory_space<vmem>>, vector<1x128xf32>
    %86 = vector.broadcast %85 : vector<1x128xf32> to vector<48x128xf32>
    %87 = arith.addf %84, %86 : vector<48x128xf32>
    %88 = math.tanh %87 : vector<48x128xf32>
    %89 = arith.mulf %88, %88 : vector<48x128xf32>
    %cst_40 = arith.constant dense<0.000000e+00> : vector<48xf32>
    %90 = vector.multi_reduction <add>, %89, %cst_40 [1] : vector<48x128xf32> to vector<48xf32>
    %91 = vector.shape_cast %90 : vector<48xf32> to vector<48x1xf32>
    %cst_41 = arith.constant 1.000000e-24 : f32
    %92 = vector.broadcast %cst_41 : f32 to vector<48x1xf32>
    %93 = arith.maximumf %91, %92 : vector<48x1xf32>
    %94 = math.rsqrt %93 : vector<48x1xf32>
    %95 = vector.broadcast %94 : vector<48x1xf32> to vector<48x128xf32>
    %96 = arith.mulf %88, %95 : vector<48x128xf32>
    %c0_42 = arith.constant 0 : index
    %c0_43 = arith.constant 0 : index
    %97 = vector.load %arg14[%c0_42, %c0_43] : memref<48x128xf32, #tpu.memory_space<vmem>>, vector<48x128xf32>
    tpu.vector_store %arg14[%c0_42, %c0_43], %96 {strides = array<i32>} : memref<48x128xf32, #tpu.memory_space<vmem>>, vector<48x128xf32>,
    return
  }
  func.func @transform_0(%arg0: i32) -> (i32, i32) {
    %c0_i32 = arith.constant 0 : i32
    %c0_i32_0 = arith.constant 0 : i32
    return %arg0, %c0_i32 : i32, i32
  }
  func.func @transform_1(%arg0: i32) -> (i32, i32) {
    %c0_i32 = arith.constant 0 : i32
    %c0_i32_0 = arith.constant 0 : i32
    return %arg0, %c0_i32 : i32, i32
  }
  func.func @transform_2(%arg0: i32) -> (i32, i32) {
    %c0_i32 = arith.constant 0 : i32
    %c0_i32_0 = arith.constant 0 : i32
    %c0_i32_1 = arith.constant 0 : i32
    return %c0_i32, %c0_i32_0 : i32, i32
  }
  func.func @transform_3(%arg0: i32) -> (i32, i32) {
    %c0_i32 = arith.constant 0 : i32
    %c0_i32_0 = arith.constant 0 : i32
    %c0_i32_1 = arith.constant 0 : i32
    return %c0_i32, %c0_i32_0 : i32, i32
  }
  func.func @transform_4(%arg0: i32) -> (i32, i32) {
    %c0_i32 = arith.constant 0 : i32
    %c0_i32_0 = arith.constant 0 : i32
    %c0_i32_1 = arith.constant 0 : i32
    return %c0_i32, %c0_i32_0 : i32, i32
  }
  func.func @transform_5(%arg0: i32) -> (i32, i32) {
    %c0_i32 = arith.constant 0 : i32
    %c0_i32_0 = arith.constant 0 : i32
    %c0_i32_1 = arith.constant 0 : i32
    return %c0_i32, %c0_i32_0 : i32, i32
  }
  func.func @transform_6(%arg0: i32) -> (i32, i32) {
    %c0_i32 = arith.constant 0 : i32
    %c0_i32_0 = arith.constant 0 : i32
    %c0_i32_1 = arith.constant 0 : i32
    return %c0_i32, %c0_i32_0 : i32, i32
  }
  func.func @transform_7(%arg0: i32) -> (i32, i32) {
    %c0_i32 = arith.constant 0 : i32
    %c0_i32_0 = arith.constant 0 : i32
    %c0_i32_1 = arith.constant 0 : i32
    return %c0_i32, %c0_i32_0 : i32, i32
  }
  func.func @transform_8(%arg0: i32) -> (i32, i32) {
    %c0_i32 = arith.constant 0 : i32
    %c0_i32_0 = arith.constant 0 : i32
    %c0_i32_1 = arith.constant 0 : i32
    return %c0_i32, %c0_i32_0 : i32, i32
  }
  func.func @transform_9(%arg0: i32) -> (i32, i32) {
    %c0_i32 = arith.constant 0 : i32
    %c0_i32_0 = arith.constant 0 : i32
    %c0_i32_1 = arith.constant 0 : i32
    return %c0_i32, %c0_i32_0 : i32, i32
  }
  func.func @transform_10(%arg0: i32) -> (i32, i32) {
    %c0_i32 = arith.constant 0 : i32
    %c0_i32_0 = arith.constant 0 : i32
    %c0_i32_1 = arith.constant 0 : i32
    return %c0_i32, %c0_i32_0 : i32, i32
  }
  func.func @transform_11(%arg0: i32) -> (i32, i32) {
    %c0_i32 = arith.constant 0 : i32
    %c0_i32_0 = arith.constant 0 : i32
    %c0_i32_1 = arith.constant 0 : i32
    return %c0_i32, %c0_i32_0 : i32, i32
  }
  func.func @transform_12(%arg0: i32) -> (i32, i32) {
    %c0_i32 = arith.constant 0 : i32
    %c0_i32_0 = arith.constant 0 : i32
    %c0_i32_1 = arith.constant 0 : i32
    return %c0_i32, %c0_i32_0 : i32, i32
  }
  func.func @transform_13(%arg0: i32) -> (i32, i32) {
    %c0_i32 = arith.constant 0 : i32
    %c0_i32_0 = arith.constant 0 : i32
    return %arg0, %c0_i32 : i32, i32
  }
}

</mosaic_0001>

<llo_original>
// kernel: fwd.1
$region0: #{fwd.1}
  #allocation0 [shape = 'u32[]', space=smem, size = 0x4, offset = 0x4, fixed_abs, tag = 'smem constant byte address 0x4 - core index']
  #allocation1 [shape = 'u32[144,128]{1,0:T(1,128)}', space=vmem, size = 0x12000, scoped, tag = 'internal scratch']
  %s0 = inlined_call_operand.hbm [shape: f32[48,128], index: 0, kind: input, shape index: {}]
  %s1 = inlined_call_operand.hbm [shape: f32[48,128], index: 1, kind: input, shape index: {}]
  %s2 = inlined_call_operand.hbm [shape: bf16[128,1024], index: 2, kind: input, shape index: {}]
  %s3 = inlined_call_operand.hbm [shape: bf16[128,1024], index: 3, kind: input, shape index: {}]
  %s4 = inlined_call_operand.hbm [shape: f32[1,1024], index: 4, kind: input, shape index: {}]
  %s5 = inlined_call_operand.hbm [shape: f32[1,1024], index: 5, kind: input, shape index: {}]
  %s6 = inlined_call_operand.hbm [shape: f32[1,1024], index: 6, kind: input, shape index: {}]
  %s7 = inlined_call_operand.hbm [shape: bf16[1024,512], index: 7, kind: input, shape index: {}]
  %s8 = inlined_call_operand.hbm [shape: f32[1,512], index: 8, kind: input, shape index: {}]
  %s9 = inlined_call_operand.hbm [shape: f32[1,512], index: 9, kind: input, shape index: {}]
  %s10 = inlined_call_operand.hbm [shape: f32[1,512], index: 10, kind: input, shape index: {}]
  %s11 = inlined_call_operand.hbm [shape: bf16[512,128], index: 11, kind: input, shape index: {}]
  %s12 = inlined_call_operand.hbm [shape: f32[1,128], index: 12, kind: input, shape index: {}]
  %s13 = inlined_call_operand.hbm [shape: f32[48,128], index: 13, kind: output, shape index: {}]
  %s14 = sld [smem:[#allocation0]]
  $region114: #{fwd.1} parent=0
    _
  %s16 = ssub.s32 1, %s14
  %s17 = scalar_select 0, %s16, %s14
  $region1: #{fwd.1} parent=0
    #allocation2 [shape = 'u8[24576]{0}', space=vmem, size = 0x6000, scoped, tag = 'input window, operand 0, single buffered']
    #allocation3 [shape = 's32[1]{0}', space=sflag, size = 0x4, scoped, tag = 'scoped memory for fwd.1']
    #allocation4 [shape = 's32[1]{0}', space=sflag, size = 0x4, scoped, tag = 'scoped memory for fwd.1']
    #allocation5 [shape = 'u8[24576]{0}', space=vmem, size = 0x6000, scoped, tag = 'input window, operand 1, single buffered']
    #allocation6 [shape = 's32[1]{0}', space=sflag, size = 0x4, scoped, tag = 'scoped memory for fwd.1']
    #allocation7 [shape = 'u8[262144]{0}', space=vmem, size = 0x40000, scoped, tag = 'input window, operand 2, single buffered']
    #allocation8 [shape = 'u8[262144]{0}', space=vmem, size = 0x40000, scoped, tag = 'input window, operand 3, single buffered']
    #allocation9 [shape = 's32[1]{0}', space=sflag, size = 0x4, scoped, tag = 'scoped memory for fwd.1']
    #allocation10 [shape = 'u8[4096]{0}', space=vmem, size = 0x1000, scoped, tag = 'input window, operand 4, single buffered']
    #allocation11 [shape = 'u8[4096]{0}', space=vmem, size = 0x1000, scoped, tag = 'input window, operand 5, single buffered']
    #allocation12 [shape = 's32[1]{0}', space=sflag, size = 0x4, scoped, tag = 'scoped memory for fwd.1']
    #allocation13 [shape = 'u8[4096]{0}', space=vmem, size = 0x1000, scoped, tag = 'input window, operand 6, single buffered']
    #allocation14 [shape = 'u8[1048576]{0}', space=vmem, size = 0x100000, scoped, tag = 'input window, operand 7, single buffered']
    #allocation15 [shape = 's32[1]{0}', space=sflag, size = 0x4, scoped, tag = 'scoped memory for fwd.1']
    #allocation16 [shape = 'u8[2048]{0}', space=vmem, size = 0x800, scoped, tag = 'input window, operand 8, single buffered']
    #allocation17 [shape = 'u8[2048]{0}', space=vmem, size = 0x800, scoped, tag = 'input window, operand 9, single buffered']
    #allocation18 [shape = 's32[1]{0}', space=sflag, size = 0x4, scoped, tag = 'scoped memory for fwd.1']
    #allocation19 [shape = 'u8[2048]{0}', space=vmem, size = 0x800, scoped, tag = 'input window, operand 10, single buffered']
    #allocation20 [shape = 'u8[131072]{0}', space=vmem, size = 0x20000, scoped, tag = 'input window, operand 11, single buffered']
    #allocation21 [shape = 's32[1]{0}', space=sflag, size = 0x4, scoped, tag = 'scoped memory for fwd.1']
    #allocation22 [shape = 'u8[512]{0}', space=vmem, size = 0x400, scoped, tag = 'input window, operand 12, single buffered']
    #allocation23 [shape = 'u8[24576]{0}', space=vmem, size = 0x6000, scoped, tag = 'output window, operand 0, single buffered']
    %18 = vsyncpa [#allocation3], 0
    %19 = vsyncpa [#allocation6], 0
    %20 = vsyncpa [#allocation9], 0
    %21 = vsyncpa [#allocation12], 0
    %22 = vsyncpa [#allocation15], 0
    %23 = vsyncpa [#allocation18], 0
    %24 = vsyncpa [#allocation21], 0
    %25 = vsyncpa [#allocation4], 0
    // Predicated region
    $region2: #{fwd.1} parent=1 // pred_check
      _
    $region3: #{fwd.1} parent=1 // pred_check_branch
      %27 = sbr.rel (0) target = $region5
    $region4: #{fwd.1} parent=1 // pred_region
      %s29 = ssub.s32 768, 768
      %30 = vsyncadd [#allocation3], %s29
      %s31 = sshll.u32 [#allocation2], 4
      %s32 = int_to_ptr.vmem [resolvable:$true] %s31
      %37 = dma.hbm_to_vmem [thread:$0]  %s0, 768, %s32, [#allocation3], 128, 128, 8
    $region5: #{fwd.1} parent=1 // pred_fallthru
      _
    // Predicated region
    $region6: #{fwd.1} parent=1 // pred_check
      _
    $region7: #{fwd.1} parent=1 // pred_check_branch
      %39 = sbr.rel (0) target = $region9
    $region8: #{fwd.1} parent=1 // pred_region
      %s41 = ssub.s32 768, 768
      %42 = vsyncadd [#allocation6], %s41
      %s43 = sshll.u32 [#allocation5], 4
      %s44 = int_to_ptr.vmem [resolvable:$true] %s43
      %49 = dma.hbm_to_vmem [thread:$0]  %s1, 768, %s44, [#allocation6], 128, 128, 8
    $region9: #{fwd.1} parent=1 // pred_fallthru
      _
    // Predicated region
    $region10: #{fwd.1} parent=1 // pred_check
      _
    $region11: #{fwd.1} parent=1 // pred_check_branch
      %51 = sbr.rel (0) target = $region13
    $region12: #{fwd.1} parent=1 // pred_region
      %s53 = ssub.s32 8192, 8192
      %54 = vsyncadd [#allocation6], %s53
      %s55 = sshll.u32 [#allocation7], 4
      %s56 = int_to_ptr.vmem [resolvable:$true] %s55
      %61 = dma.hbm_to_vmem [thread:$0]  %s2, 8192, %s56, [#allocation6], 512, 512, 32
    $region13: #{fwd.1} parent=1 // pred_fallthru
      _
    // Predicated region
    $region14: #{fwd.1} parent=1 // pred_check
      _
    $region15: #{fwd.1} parent=1 // pred_check_branch
      %63 = sbr.rel (0) target = $region17
    $region16: #{fwd.1} parent=1 // pred_region
      %s65 = ssub.s32 8192, 8192
      %66 = vsyncadd [#allocation9], %s65
      %s67 = sshll.u32 [#allocation8], 4
      %s68 = int_to_ptr.vmem [resolvable:$true] %s67
      %73 = dma.hbm_to_vmem [thread:$0]  %s3, 8192, %s68, [#allocation9], 512, 512, 32
    $region17: #{fwd.1} parent=1 // pred_fallthru
      _
    // Predicated region
    $region18: #{fwd.1} parent=1 // pred_check
      _
    $region19: #{fwd.1} parent=1 // pred_check_branch
      %75 = sbr.rel (0) target = $region21
    $region20: #{fwd.1} parent=1 // pred_region
      %s77 = ssub.s32 128, 128
      %78 = vsyncadd [#allocation9], %s77
      %s80 = sshll.u32 [#allocation10], 4
      %s81 = int_to_ptr.vmem [resolvable:$true] %s80
      %83 = dma.hbm_to_vmem [thread:$0]  %s4, 128, %s81, [#allocation9]
    $region21: #{fwd.1} parent=1 // pred_fallthru
      _
    // Predicated region
    $region22: #{fwd.1} parent=1 // pred_check
      _
    $region23: #{fwd.1} parent=1 // pred_check_branch
      %85 = sbr.rel (0) target = $region25
    $region24: #{fwd.1} parent=1 // pred_region
      %s87 = ssub.s32 128, 128
      %88 = vsyncadd [#allocation12], %s87
      %s90 = sshll.u32 [#allocation11], 4
      %s91 = int_to_ptr.vmem [resolvable:$true] %s90
      %93 = dma.hbm_to_vmem [thread:$0]  %s5, 128, %s91, [#allocation12]
    $region25: #{fwd.1} parent=1 // pred_fallthru
      _
    // Predicated region
    $region26: #{fwd.1} parent=1 // pred_check
      _
    $region27: #{fwd.1} parent=1 // pred_check_branch
      %95 = sbr.rel (0) target = $region29
    $region28: #{fwd.1} parent=1 // pred_region
      %s97 = ssub.s32 128, 128
      %98 = vsyncadd [#allocation12], %s97
      %s100 = sshll.u32 [#allocation13], 4
      %s101 = int_to_ptr.vmem [resolvable:$true] %s100
      %103 = dma.hbm_to_vmem [thread:$0]  %s6, 128, %s101, [#allocation12]
    $region29: #{fwd.1} parent=1 // pred_fallthru
      _
    // Predicated region
    $region30: #{fwd.1} parent=1 // pred_check
      _
    $region31: #{fwd.1} parent=1 // pred_check_branch
      %105 = sbr.rel (0) target = $region33
    $region32: #{fwd.1} parent=1 // pred_region
      %s107 = ssub.s32 32768, 32768
      %108 = vsyncadd [#allocation15], %s107
      %s109 = sshll.u32 [#allocation14], 4
      %s110 = int_to_ptr.vmem [resolvable:$true] %s109
      %115 = dma.hbm_to_vmem [thread:$0]  %s7, 32768, %s110, [#allocation15], 256, 256, 16
    $region33: #{fwd.1} parent=1 // pred_fallthru
      _
    // Predicated region
    $region34: #{fwd.1} parent=1 // pred_check
      _
    $region35: #{fwd.1} parent=1 // pred_check_branch
      %117 = sbr.rel (0) target = $region37
    $region36: #{fwd.1} parent=1 // pred_region
      %s119 = ssub.s32 64, 64
      %120 = vsyncadd [#allocation15], %s119
      %s122 = sshll.u32 [#allocation16], 4
      %s123 = int_to_ptr.vmem [resolvable:$true] %s122
      %125 = dma.hbm_to_vmem [thread:$0]  %s8, 64, %s123, [#allocation15]
    $region37: #{fwd.1} parent=1 // pred_fallthru
      _
    // Predicated region
    $region38: #{fwd.1} parent=1 // pred_check
      _
    $region39: #{fwd.1} parent=1 // pred_check_branch
      %127 = sbr.rel (0) target = $region41
    $region40: #{fwd.1} parent=1 // pred_region
      %s129 = ssub.s32 64, 64
      %130 = vsyncadd [#allocation18], %s129
      %s132 = sshll.u32 [#allocation17], 4
      %s133 = int_to_ptr.vmem [resolvable:$true] %s132
      %135 = dma.hbm_to_vmem [thread:$0]  %s9, 64, %s133, [#allocation18]
    $region41: #{fwd.1} parent=1 // pred_fallthru
      _
    // Predicated region
    $region42: #{fwd.1} parent=1 // pred_check
      _
    $region43: #{fwd.1} parent=1 // pred_check_branch
      %137 = sbr.rel (0) target = $region45
    $region44: #{fwd.1} parent=1 // pred_region
      %s139 = ssub.s32 64, 64
      %140 = vsyncadd [#allocation18], %s139
      %s142 = sshll.u32 [#allocation19], 4
      %s143 = int_to_ptr.vmem [resolvable:$true] %s142
      %145 = dma.hbm_to_vmem [thread:$0]  %s10, 64, %s143, [#allocation18]
    $region45: #{fwd.1} parent=1 // pred_fallthru
      _
    // Predicated region
    $region46: #{fwd.1} parent=1 // pred_check
      _
    $region47: #{fwd.1} parent=1 // pred_check_branch
      %147 = sbr.rel (0) target = $region49
    $region48: #{fwd.1} parent=1 // pred_region
      %s149 = ssub.s32 4096, 4096
      %150 = vsyncadd [#allocation21], %s149
      %s151 = sshll.u32 [#allocation20], 4
      %s152 = int_to_ptr.vmem [resolvable:$true] %s151
      %157 = dma.hbm_to_vmem [thread:$0]  %s11, 4096, %s152, [#allocation21], 64, 64, 4
    $region49: #{fwd.1} parent=1 // pred_fallthru
      _
    // Predicated region
    $region50: #{fwd.1} parent=1 // pred_check
      _
    $region51: #{fwd.1} parent=1 // pred_check_branch
      %159 = sbr.rel (0) target = $region53
    $region52: #{fwd.1} parent=1 // pred_region
      %s161 = ssub.s32 16, 16
      %162 = vsyncadd [#allocation21], %s161
      %s164 = sshll.u32 [#allocation22], 4
      %s165 = int_to_ptr.vmem [resolvable:$true] %s164
      %167 = dma.hbm_to_vmem [thread:$0]  %s12, 16, %s165, [#allocation21]
    $region53: #{fwd.1} parent=1 // pred_fallthru
      _
    // Predicated region
    $region54: #{fwd.1} parent=1 // pred_check
      _
    $region55: #{fwd.1} parent=1 // pred_check_branch
      %169 = sbr.rel (0) target = $region57
    $region56: #{fwd.1} parent=1 // pred_region
      %170 = dma.done [#allocation3], 768
    $region57: #{fwd.1} parent=1 // pred_fallthru
      _
    // Predicated region
    $region58: #{fwd.1} parent=1 // pred_check
      _
    $region59: #{fwd.1} parent=1 // pred_check_branch
      %172 = sbr.rel (0) target = $region61
    $region60: #{fwd.1} parent=1 // pred_region
      %173 = dma.done [#allocation6], 768
    $region61: #{fwd.1} parent=1 // pred_fallthru
      _
    // Predicated region
    $region62: #{fwd.1} parent=1 // pred_check
      _
    $region63: #{fwd.1} parent=1 // pred_check_branch
      %175 = sbr.rel (0) target = $region65
    $region64: #{fwd.1} parent=1 // pred_region
      %176 = dma.done [#allocation6], 8192
    $region65: #{fwd.1} parent=1 // pred_fallthru
      _
    // Predicated region
    $region66: #{fwd.1} parent=1 // pred_check
      _
    $region67: #{fwd.1} parent=1 // pred_check_branch
      %178 = sbr.rel (0) target = $region69
    $region68: #{fwd.1} parent=1 // pred_region
      %179 = dma.done [#allocation9], 8192
    $region69: #{fwd.1} parent=1 // pred_fallthru
      _
    // Predicated region
    $region70: #{fwd.1} parent=1 // pred_check
      _
    $region71: #{fwd.1} parent=1 // pred_check_branch
      %181 = sbr.rel (0) target = $region73
    $region72: #{fwd.1} parent=1 // pred_region
      %182 = dma.done [#allocation9], 128
    $region73: #{fwd.1} parent=1 // pred_fallthru
      _
    // Predicated region
    $region74: #{fwd.1} parent=1 // pred_check
      _
    $region75: #{fwd.1} parent=1 // pred_check_branch
      %184 = sbr.rel (0) target = $region77
    $region76: #{fwd.1} parent=1 // pred_region
      %185 = dma.done [#allocation12], 128
    $region77: #{fwd.1} parent=1 // pred_fallthru
      _
    // Predicated region
    $region78: #{fwd.1} parent=1 // pred_check
      _
    $region79: #{fwd.1} parent=1 // pred_check_branch
      %187 = sbr.rel (0) target = $region81
    $region80: #{fwd.1} parent=1 // pred_region
      %188 = dma.done [#allocation12], 128
    $region81: #{fwd.1} parent=1 // pred_fallthru
      _
    // Predicated region
    $region82: #{fwd.1} parent=1 // pred_check
      _
    $region83: #{fwd.1} parent=1 // pred_check_branch
      %190 = sbr.rel (0) target = $region85
    $region84: #{fwd.1} parent=1 // pred_region
      %191 = dma.done [#allocation15], 32768
    $region85: #{fwd.1} parent=1 // pred_fallthru
      _
    // Predicated region
    $region86: #{fwd.1} parent=1 // pred_check
      _
    $region87: #{fwd.1} parent=1 // pred_check_branch
      %193 = sbr.rel (0) target = $region89
    $region88: #{fwd.1} parent=1 // pred_region
      %194 = dma.done [#allocation15], 64
    $region89: #{fwd.1} parent=1 // pred_fallthru
      _
    // Predicated region
    $region90: #{fwd.1} parent=1 // pred_check
      _
    $region91: #{fwd.1} parent=1 // pred_check_branch
      %196 = sbr.rel (0) target = $region93
    $region92: #{fwd.1} parent=1 // pred_region
      %197 = dma.done [#allocation18], 64
    $region93: #{fwd.1} parent=1 // pred_fallthru
      _
    // Predicated region
    $region94: #{fwd.1} parent=1 // pred_check
      _
    $region95: #{fwd.1} parent=1 // pred_check_branch
      %199 = sbr.rel (0) target = $region97
    $region96: #{fwd.1} parent=1 // pred_region
      %200 = dma.done [#allocation18], 64
    $region97: #{fwd.1} parent=1 // pred_fallthru
      _
    // Predicated region
    $region98: #{fwd.1} parent=1 // pred_check
      _
    $region99: #{fwd.1} parent=1 // pred_check_branch
      %202 = sbr.rel (0) target = $region101
    $region100: #{fwd.1} parent=1 // pred_region
      %203 = dma.done [#allocation21], 4096
    $region101: #{fwd.1} parent=1 // pred_fallthru
      _
    // Predicated region
    $region102: #{fwd.1} parent=1 // pred_check
      _
    $region103: #{fwd.1} parent=1 // pred_check_branch
      %205 = sbr.rel (0) target = $region105
    $region104: #{fwd.1} parent=1 // pred_region
      %206 = dma.done [#allocation21], 16
    $region105: #{fwd.1} parent=1 // pred_fallthru
      _
    %v209 = vld [vmem:[#allocation2] sm:$0xff]
    %v210 = vld [vmem:[#allocation2 + $0x8] sm:$0xff]
    %v211 = vld [vmem:[#allocation2 + $0x10] sm:$0xff]
    %v212 = vld [vmem:[#allocation2 + $0x18] sm:$0xff]
    %v213 = vld [vmem:[#allocation2 + $0x20] sm:$0xff]
    %v214 = vld [vmem:[#allocation2 + $0x28] sm:$0xff]
    %v215 = vpack.c.bf16 %v210, %v209
    %v216 = vpack.c.bf16 %v212, %v211
    %v217 = vpack.c.bf16 %v214, %v213
    %v218 = vld [vmem:[#allocation5] sm:$0xff]
    %v219 = vld [vmem:[#allocation5 + $0x8] sm:$0xff]
    %v220 = vld [vmem:[#allocation5 + $0x10] sm:$0xff]
    %v221 = vld [vmem:[#allocation5 + $0x18] sm:$0xff]
    %v222 = vld [vmem:[#allocation5 + $0x20] sm:$0xff]
    %v223 = vld [vmem:[#allocation5 + $0x28] sm:$0xff]
    %v224 = vpack.c.bf16 %v219, %v218
    %v225 = vpack.c.bf16 %v221, %v220
    %v226 = vpack.c.bf16 %v223, %v222
    %v227 = vld [vmem:[#allocation7] sm:$0xff]
    %v228 = vld [vmem:[#allocation7 + $0x8] sm:$0xff]
    %v229 = vld [vmem:[#allocation7 + $0x10] sm:$0xff]
    %v230 = vld [vmem:[#allocation7 + $0x18] sm:$0xff]
    %v231 = vld [vmem:[#allocation7 + $0x20] sm:$0xff]
    %v232 = vld [vmem:[#allocation7 + $0x28] sm:$0xff]
    %v233 = vld [vmem:[#allocation7 + $0x30] sm:$0xff]
    %v234 = vld [vmem:[#allocation7 + $0x38] sm:$0xff]
    %v235 = vld [vmem:[#allocation7 + $0x40] sm:$0xff]
    %v236 = vld [vmem:[#allocation7 + $0x48] sm:$0xff]
    %v237 = vld [vmem:[#allocation7 + $0x50] sm:$0xff]
    %v238 = vld [vmem:[#allocation7 + $0x58] sm:$0xff]
    %v239 = vld [vmem:[#allocation7 + $0x60] sm:$0xff]
    %v240 = vld [vmem:[#allocation7 + $0x68] sm:$0xff]
    %v241 = vld [vmem:[#allocation7 + $0x70] sm:$0xff]
    %v242 = vld [vmem:[#allocation7 + $0x78] sm:$0xff]
    %v243 = vld [vmem:[#allocation7 + $0x80] sm:$0xff]
    %v244 = vld [vmem:[#allocation7 + $0x88] sm:$0xff]
    %v245 = vld [vmem:[#allocation7 + $0x90] sm:$0xff]
    %v246 = vld [vmem:[#allocation7 + $0x98] sm:$0xff]
    %v247 = vld [vmem:[#allocation7 + $0xa0] sm:$0xff]
    %v248 = vld [vmem:[#allocation7 + $0xa8] sm:$0xff]
    %v249 = vld [vmem:[#allocation7 + $0xb0] sm:$0xff]
    %v250 = vld [vmem:[#allocation7 + $0xb8] sm:$0xff]
    %v251 = vld [vmem:[#allocation7 + $0xc0] sm:$0xff]
    %v252 = vld [vmem:[#allocation7 + $0xc8] sm:$0xff]
    %v253 = vld [vmem:[#allocation7 + $0xd0] sm:$0xff]
    %v254 = vld [vmem:[#allocation7 + $0xd8] sm:$0xff]
    %v255 = vld [vmem:[#allocation7 + $0xe0] sm:$0xff]
    %v256 = vld [vmem:[#allocation7 + $0xe8] sm:$0xff]
    %v257 = vld [vmem:[#allocation7 + $0xf0] sm:$0xff]
    %v258 = vld [vmem:[#allocation7 + $0xf8] sm:$0xff]
    %v259 = vld [vmem:[#allocation7 + $0x100] sm:$0xff]
    %v260 = vld [vmem:[#allocation7 + $0x108] sm:$0xff]
    %v261 = vld [vmem:[#allocation7 + $0x110] sm:$0xff]
    %v262 = vld [vmem:[#allocation7 + $0x118] sm:$0xff]
    %v263 = vld [vmem:[#allocation7 + $0x120] sm:$0xff]
    %v264 = vld [vmem:[#allocation7 + $0x128] sm:$0xff]
    %v265 = vld [vmem:[#allocation7 + $0x130] sm:$0xff]
    %v266 = vld [vmem:[#allocation7 + $0x138] sm:$0xff]
    %v267 = vld [vmem:[#allocation7 + $0x140] sm:$0xff]
    %v268 = vld [vmem:[#allocation7 + $0x148] sm:$0xff]
    %v269 = vld [vmem:[#allocation7 + $0x150] sm:$0xff]
    %v270 = vld [vmem:[#allocation7 + $0x158] sm:$0xff]
    %v271 = vld [vmem:[#allocation7 + $0x160] sm:$0xff]
    %v272 = vld [vmem:[#allocation7 + $0x168] sm:$0xff]
    %v273 = vld [vmem:[#allocation7 + $0x170] sm:$0xff]
    %v274 = vld [vmem:[#allocation7 + $0x178] sm:$0xff]
    %v275 = vld [vmem:[#allocation7 + $0x180] sm:$0xff]
    %v276 = vld [vmem:[#allocation7 + $0x188] sm:$0xff]
    %v277 = vld [vmem:[#allocation7 + $0x190] sm:$0xff]
    %v278 = vld [vmem:[#allocation7 + $0x198] sm:$0xff]
    %v279 = vld [vmem:[#allocation7 + $0x1a0] sm:$0xff]
    %v280 = vld [vmem:[#allocation7 + $0x1a8] sm:$0xff]
    %v281 = vld [vmem:[#allocation7 + $0x1b0] sm:$0xff]
    %v282 = vld [vmem:[#allocation7 + $0x1b8] sm:$0xff]
    %v283 = vld [vmem:[#allocation7 + $0x1c0] sm:$0xff]
    %v284 = vld [vmem:[#allocation7 + $0x1c8] sm:$0xff]
    %v285 = vld [vmem:[#allocation7 + $0x1d0] sm:$0xff]
    %v286 = vld [vmem:[#allocation7 + $0x1d8] sm:$0xff]
    %v287 = vld [vmem:[#allocation7 + $0x1e0] sm:$0xff]
    %v288 = vld [vmem:[#allocation7 + $0x1e8] sm:$0xff]
    %v289 = vld [vmem:[#allocation7 + $0x1f0] sm:$0xff]
    %v290 = vld [vmem:[#allocation7 + $0x1f8] sm:$0xff]
    %v291 = vld [vmem:[#allocation8] sm:$0xff]
    %v292 = vld [vmem:[#allocation8 + $0x8] sm:$0xff]
    %v293 = vld [vmem:[#allocation8 + $0x10] sm:$0xff]
    %v294 = vld [vmem:[#allocation8 + $0x18] sm:$0xff]
    %v295 = vld [vmem:[#allocation8 + $0x20] sm:$0xff]
    %v296 = vld [vmem:[#allocation8 + $0x28] sm:$0xff]
    %v297 = vld [vmem:[#allocation8 + $0x30] sm:$0xff]
    %v298 = vld [vmem:[#allocation8 + $0x38] sm:$0xff]
    %v299 = vld [vmem:[#allocation8 + $0x40] sm:$0xff]
    %v300 = vld [vmem:[#allocation8 + $0x48] sm:$0xff]
    %v301 = vld [vmem:[#allocation8 + $0x50] sm:$0xff]
    %v302 = vld [vmem:[#allocation8 + $0x58] sm:$0xff]
    %v303 = vld [vmem:[#allocation8 + $0x60] sm:$0xff]
    %v304 = vld [vmem:[#allocation8 + $0x68] sm:$0xff]
    %v305 = vld [vmem:[#allocation8 + $0x70] sm:$0xff]
    %v306 = vld [vmem:[#allocation8 + $0x78] sm:$0xff]
    %v307 = vld [vmem:[#allocation8 + $0x80] sm:$0xff]
    %v308 = vld [vmem:[#allocation8 + $0x88] sm:$0xff]
    %v309 = vld [vmem:[#allocation8 + $0x90] sm:$0xff]
    %v310 = vld [vmem:[#allocation8 + $0x98] sm:$0xff]
    %v311 = vld [vmem:[#allocation8 + $0xa0] sm:$0xff]
    %v312 = vld [vmem:[#allocation8 + $0xa8] sm:$0xff]
    %v313 = vld [vmem:[#allocation8 + $0xb0] sm:$0xff]
    %v314 = vld [vmem:[#allocation8 + $0xb8] sm:$0xff]
    %v315 = vld [vmem:[#allocation8 + $0xc0] sm:$0xff]
    %v316 = vld [vmem:[#allocation8 + $0xc8] sm:$0xff]
    %v317 = vld [vmem:[#allocation8 + $0xd0] sm:$0xff]
    %v318 = vld [vmem:[#allocation8 + $0xd8] sm:$0xff]
    %v319 = vld [vmem:[#allocation8 + $0xe0] sm:$0xff]
    %v320 = vld [vmem:[#allocation8 + $0xe8] sm:$0xff]
    %v321 = vld [vmem:[#allocation8 + $0xf0] sm:$0xff]
    %v322 = vld [vmem:[#allocation8 + $0xf8] sm:$0xff]
    %v323 = vld [vmem:[#allocation8 + $0x100] sm:$0xff]
    %v324 = vld [vmem:[#allocation8 + $0x108] sm:$0xff]
    %v325 = vld [vmem:[#allocation8 + $0x110] sm:$0xff]
    %v326 = vld [vmem:[#allocation8 + $0x118] sm:$0xff]
    %v327 = vld [vmem:[#allocation8 + $0x120] sm:$0xff]
    %v328 = vld [vmem:[#allocation8 + $0x128] sm:$0xff]
    %v329 = vld [vmem:[#allocation8 + $0x130] sm:$0xff]
    %v330 = vld [vmem:[#allocation8 + $0x138] sm:$0xff]
    %v331 = vld [vmem:[#allocation8 + $0x140] sm:$0xff]
    %v332 = vld [vmem:[#allocation8 + $0x148] sm:$0xff]
    %v333 = vld [vmem:[#allocation8 + $0x150] sm:$0xff]
    %v334 = vld [vmem:[#allocation8 + $0x158] sm:$0xff]
    %v335 = vld [vmem:[#allocation8 + $0x160] sm:$0xff]
    %v336 = vld [vmem:[#allocation8 + $0x168] sm:$0xff]
    %v337 = vld [vmem:[#allocation8 + $0x170] sm:$0xff]
    %v338 = vld [vmem:[#allocation8 + $0x178] sm:$0xff]
    %v339 = vld [vmem:[#allocation8 + $0x180] sm:$0xff]
    %v340 = vld [vmem:[#allocation8 + $0x188] sm:$0xff]
    %v341 = vld [vmem:[#allocation8 + $0x190] sm:$0xff]
    %v342 = vld [vmem:[#allocation8 + $0x198] sm:$0xff]
    %v343 = vld [vmem:[#allocation8 + $0x1a0] sm:$0xff]
    %v344 = vld [vmem:[#allocation8 + $0x1a8] sm:$0xff]
    %v345 = vld [vmem:[#allocation8 + $0x1b0] sm:$0xff]
    %v346 = vld [vmem:[#allocation8 + $0x1b8] sm:$0xff]
    %v347 = vld [vmem:[#allocation8 + $0x1c0] sm:$0xff]
    %v348 = vld [vmem:[#allocation8 + $0x1c8] sm:$0xff]
    %v349 = vld [vmem:[#allocation8 + $0x1d0] sm:$0xff]
    %v350 = vld [vmem:[#allocation8 + $0x1d8] sm:$0xff]
    %v351 = vld [vmem:[#allocation8 + $0x1e0] sm:$0xff]
    %v352 = vld [vmem:[#allocation8 + $0x1e8] sm:$0xff]
    %v353 = vld [vmem:[#allocation8 + $0x1f0] sm:$0xff]
    %v354 = vld [vmem:[#allocation8 + $0x1f8] sm:$0xff]
    %v419 = vunpack.c.l.b16 %v291
    %v420 = vunpack.c.h.b16 %v291
    %v421 = vunpack.c.l.b16 %v292
    %v422 = vunpack.c.h.b16 %v292
    %v423 = vunpack.c.l.b16 %v293
    %v424 = vunpack.c.h.b16 %v293
    %v425 = vunpack.c.l.b16 %v294
    %v426 = vunpack.c.h.b16 %v294
    %v427 = vunpack.c.l.b16 %v295
    %v428 = vunpack.c.h.b16 %v295
    %v429 = vunpack.c.l.b16 %v296
    %v430 = vunpack.c.h.b16 %v296
    %v431 = vunpack.c.l.b16 %v297
    %v432 = vunpack.c.h.b16 %v297
    %v433 = vunpack.c.l.b16 %v298
    %v434 = vunpack.c.h.b16 %v298
    %v435 = vunpack.c.l.b16 %v299
    %v436 = vunpack.c.h.b16 %v299
    %v437 = vunpack.c.l.b16 %v300
    %v438 = vunpack.c.h.b16 %v300
    %v439 = vunpack.c.l.b16 %v301
    %v440 = vunpack.c.h.b16 %v301
    %v441 = vunpack.c.l.b16 %v302
    %v442 = vunpack.c.h.b16 %v302
    %v443 = vunpack.c.l.b16 %v303
    %v444 = vunpack.c.h.b16 %v303
    %v445 = vunpack.c.l.b16 %v304
    %v446 = vunpack.c.h.b16 %v304
    %v447 = vunpack.c.l.b16 %v305
    %v448 = vunpack.c.h.b16 %v305
    %v449 = vunpack.c.l.b16 %v306
    %v450 = vunpack.c.h.b16 %v306
    %v451 = vunpack.c.l.b16 %v307
    %v452 = vunpack.c.h.b16 %v307
    %v453 = vunpack.c.l.b16 %v308
    %v454 = vunpack.c.h.b16 %v308
    %v455 = vunpack.c.l.b16 %v309
    %v456 = vunpack.c.h.b16 %v309
    %v457 = vunpack.c.l.b16 %v310
    %v458 = vunpack.c.h.b16 %v310
    %v459 = vunpack.c.l.b16 %v311
    %v460 = vunpack.c.h.b16 %v311
    %v461 = vunpack.c.l.b16 %v312
    %v462 = vunpack.c.h.b16 %v312
    %v463 = vunpack.c.l.b16 %v313
    %v464 = vunpack.c.h.b16 %v313
    %v465 = vunpack.c.l.b16 %v314
    %v466 = vunpack.c.h.b16 %v314
    %v467 = vunpack.c.l.b16 %v315
    %v468 = vunpack.c.h.b16 %v315
    %v469 = vunpack.c.l.b16 %v316
    %v470 = vunpack.c.h.b16 %v316
    %v471 = vunpack.c.l.b16 %v317
    %v472 = vunpack.c.h.b16 %v317
    %v473 = vunpack.c.l.b16 %v318
    %v474 = vunpack.c.h.b16 %v318
    %v475 = vunpack.c.l.b16 %v319
    %v476 = vunpack.c.h.b16 %v319
    %v477 = vunpack.c.l.b16 %v320
    %v478 = vunpack.c.h.b16 %v320
    %v479 = vunpack.c.l.b16 %v321
    %v480 = vunpack.c.h.b16 %v321
    %v481 = vunpack.c.l.b16 %v322
    %v482 = vunpack.c.h.b16 %v322
    %v483 = vunpack.c.l.b16 %v323
    %v484 = vunpack.c.h.b16 %v323
    %v485 = vunpack.c.l.b16 %v324
    %v486 = vunpack.c.h.b16 %v324
    %v487 = vunpack.c.l.b16 %v325
    %v488 = vunpack.c.h.b16 %v325
    %v489 = vunpack.c.l.b16 %v326
    %v490 = vunpack.c.h.b16 %v326
    %v491 = vunpack.c.l.b16 %v327
    %v492 = vunpack.c.h.b16 %v327
    %v493 = vunpack.c.l.b16 %v328
    %v494 = vunpack.c.h.b16 %v328
    %v495 = vunpack.c.l.b16 %v329
    %v496 = vunpack.c.h.b16 %v329
    %v497 = vunpack.c.l.b16 %v330
    %v498 = vunpack.c.h.b16 %v330
    %v499 = vunpack.c.l.b16 %v331
    %v500 = vunpack.c.h.b16 %v331
    %v501 = vunpack.c.l.b16 %v332
    %v502 = vunpack.c.h.b16 %v332
    %v503 = vunpack.c.l.b16 %v333
    %v504 = vunpack.c.h.b16 %v333
    %v505 = vunpack.c.l.b16 %v334
    %v506 = vunpack.c.h.b16 %v334
    %v507 = vunpack.c.l.b16 %v335
    %v508 = vunpack.c.h.b16 %v335
    %v509 = vunpack.c.l.b16 %v336
    %v510 = vunpack.c.h.b16 %v336
    %v511 = vunpack.c.l.b16 %v337
    %v512 = vunpack.c.h.b16 %v337
    %v513 = vunpack.c.l.b16 %v338
    %v514 = vunpack.c.h.b16 %v338
    %v515 = vunpack.c.l.b16 %v339
    %v516 = vunpack.c.h.b16 %v339
    %v517 = vunpack.c.l.b16 %v340
    %v518 = vunpack.c.h.b16 %v340
    %v519 = vunpack.c.l.b16 %v341
    %v520 = vunpack.c.h.b16 %v341
    %v521 = vunpack.c.l.b16 %v342
    %v522 = vunpack.c.h.b16 %v342
    %v523 = vunpack.c.l.b16 %v343
    %v524 = vunpack.c.h.b16 %v343
    %v525 = vunpack.c.l.b16 %v344
    %v526 = vunpack.c.h.b16 %v344
    %v527 = vunpack.c.l.b16 %v345
    %v528 = vunpack.c.h.b16 %v345
    %v529 = vunpack.c.l.b16 %v346
    %v530 = vunpack.c.h.b16 %v346
    %v531 = vunpack.c.l.b16 %v347
    %v532 = vunpack.c.h.b16 %v347
    %v533 = vunpack.c.l.b16 %v348
    %v534 = vunpack.c.h.b16 %v348
    %v535 = vunpack.c.l.b16 %v349
    %v536 = vunpack.c.h.b16 %v349
    %v537 = vunpack.c.l.b16 %v350
    %v538 = vunpack.c.h.b16 %v350
    %v539 = vunpack.c.l.b16 %v351
    %v540 = vunpack.c.h.b16 %v351
    %v541 = vunpack.c.l.b16 %v352
    %v542 = vunpack.c.h.b16 %v352
    %v543 = vunpack.c.l.b16 %v353
    %v544 = vunpack.c.h.b16 %v353
    %v545 = vunpack.c.l.b16 %v354
    %v546 = vunpack.c.h.b16 %v354
    %v547 = vpack.c.b16 %v427, %v419
    %v548 = vpack.c.b16 %v428, %v420
    %v549 = vpack.c.b16 %v429, %v421
    %v550 = vpack.c.b16 %v430, %v422
    %v551 = vpack.c.b16 %v431, %v423
    %v552 = vpack.c.b16 %v432, %v424
    %v553 = vpack.c.b16 %v433, %v425
    %v554 = vpack.c.b16 %v434, %v426
    %v555 = vpack.c.b16 %v443, %v435
    %v556 = vpack.c.b16 %v444, %v436
    %v557 = vpack.c.b16 %v445, %v437
    %v558 = vpack.c.b16 %v446, %v438
    %v559 = vpack.c.b16 %v447, %v439
    %v560 = vpack.c.b16 %v448, %v440
    %v561 = vpack.c.b16 %v449, %v441
    %v562 = vpack.c.b16 %v450, %v442
    %v563 = vpack.c.b16 %v459, %v451
    %v564 = vpack.c.b16 %v460, %v452
    %v565 = vpack.c.b16 %v461, %v453
    %v566 = vpack.c.b16 %v462, %v454
    %v567 = vpack.c.b16 %v463, %v455
    %v568 = vpack.c.b16 %v464, %v456
    %v569 = vpack.c.b16 %v465, %v457
    %v570 = vpack.c.b16 %v466, %v458
    %v571 = vpack.c.b16 %v475, %v467
    %v572 = vpack.c.b16 %v476, %v468
    %v573 = vpack.c.b16 %v477, %v469
    %v574 = vpack.c.b16 %v478, %v470
    %v575 = vpack.c.b16 %v479, %v471
    %v576 = vpack.c.b16 %v480, %v472
    %v577 = vpack.c.b16 %v481, %v473
    %v578 = vpack.c.b16 %v482, %v474
    %v579 = vpack.c.b16 %v491, %v483
    %v580 = vpack.c.b16 %v492, %v484
    %v581 = vpack.c.b16 %v493, %v485
    %v582 = vpack.c.b16 %v494, %v486
    %v583 = vpack.c.b16 %v495, %v487
    %v584 = vpack.c.b16 %v496, %v488
    %v585 = vpack.c.b16 %v497, %v489
    %v586 = vpack.c.b16 %v498, %v490
    %v587 = vpack.c.b16 %v507, %v499
    %v588 = vpack.c.b16 %v508, %v500
    %v589 = vpack.c.b16 %v509, %v501
    %v590 = vpack.c.b16 %v510, %v502
    %v591 = vpack.c.b16 %v511, %v503
    %v592 = vpack.c.b16 %v512, %v504
    %v593 = vpack.c.b16 %v513, %v505
    %v594 = vpack.c.b16 %v514, %v506
    %v595 = vpack.c.b16 %v523, %v515
    %v596 = vpack.c.b16 %v524, %v516
    %v597 = vpack.c.b16 %v525, %v517
    %v598 = vpack.c.b16 %v526, %v518
    %v599 = vpack.c.b16 %v527, %v519
    %v600 = vpack.c.b16 %v528, %v520
    %v601 = vpack.c.b16 %v529, %v521
    %v602 = vpack.c.b16 %v530, %v522
    %v603 = vpack.c.b16 %v539, %v531
    %v604 = vpack.c.b16 %v540, %v532
    %v605 = vpack.c.b16 %v541, %v533
    %v606 = vpack.c.b16 %v542, %v534
    %v607 = vpack.c.b16 %v543, %v535
    %v608 = vpack.c.b16 %v544, %v536
    %v609 = vpack.c.b16 %v545, %v537
    %v610 = vpack.c.b16 %v546, %v538
    %675 = vmatprep.subr.bf16.mxu0 %v548
    %676 = vmatpush1.bf16.msra.mxu0 %v547
    %677 = vmatprep.subr.bf16.mxu0 %v556
    %678 = vmatpush1.bf16.msra.mxu0 %v555
    %679 = vmatprep.subr.bf16.mxu0 %v564
    %680 = vmatpush1.bf16.msra.mxu0 %v563
    %681 = vmatprep.subr.bf16.mxu0 %v572
    %682 = vmatpush1.bf16.msra.mxu0 %v571
    %683 = vmatprep.subr.bf16.mxu0 %v580
    %684 = vmatpush1.bf16.msra.mxu0 %v579
    %685 = vmatprep.subr.bf16.mxu0 %v588
    %686 = vmatpush1.bf16.msra.mxu0 %v587
    %687 = vmatprep.subr.bf16.mxu0 %v596
    %688 = vmatpush1.bf16.msra.mxu0 %v595
    %689 = vmatprep.subr.bf16.mxu0 %v604
    %690 = vmatpush1.bf16.msra.mxu0 %v603
    %691 = vmatprep.subr.bf16.mxu0 0
    %692 = vmatpush1.bf16.msra.mxu0 0
    %693 = vmatprep.subr.bf16.mxu0 0
    %694 = vmatpush1.bf16.msra.mxu0 0
    %695 = vmatprep.subr.bf16.mxu0 0
    %696 = vmatpush1.bf16.msra.mxu0 0
    %697 = vmatprep.subr.bf16.mxu0 0
    %698 = vmatpush1.bf16.msra.mxu0 0
    %699 = vmatprep.subr.bf16.mxu0 0
    %700 = vmatpush1.bf16.msra.mxu0 0
    %701 = vmatprep.subr.bf16.mxu0 0
    %702 = vmatpush1.bf16.msra.mxu0 0
    %703 = vmatprep.subr.bf16.mxu0 0
    %704 = vmatpush1.bf16.msra.mxu0 0
    %705 = vmatprep.subr.bf16.mxu0 0
    %706 = vmatpush1.bf16.msra.mxu0 0
    %707 = vmatprep.mubr.bf16.mxu0 0
    %708 = vmatmul.mubr.bf16.gmra.mrb[0].mxu0 %v224
    %v709 = vpop.f32.mrb[0].mxu0
    %v710 = vadd.f32 0.0, %v709
    %v711 = vpop.f32.mrb[0].mxu0
    %v712 = vadd.f32 0.0, %v711
    %v713 = vpop.f32.mrb[0].mxu0
    %v714 = vadd.f32 0.0, %v713
    %v715 = vpop.f32.mrb[0].mxu0
    %v716 = vadd.f32 0.0, %v715
    %717 = vmatprep.mubr.bf16.mxu0 0
    %718 = vmatmul.mubr.bf16.gmra.mrb[0].mxu0 %v225
    %v719 = vpop.f32.mrb[0].mxu0
    %v720 = vadd.f32 0.0, %v719
    %v721 = vpop.f32.mrb[0].mxu0
    %v722 = vadd.f32 0.0, %v721
    %v723 = vpop.f32.mrb[0].mxu0
    %v724 = vadd.f32 0.0, %v723
    %v725 = vpop.f32.mrb[0].mxu0
    %v726 = vadd.f32 0.0, %v725
    %727 = vmatprep.mubr.bf16.mxu0 0
    %728 = vmatmul.mubr.bf16.gmra.mrb[0].mxu0 %v226
    %v729 = vpop.f32.mrb[0].mxu0
    %v730 = vadd.f32 0.0, %v729
    %v731 = vpop.f32.mrb[0].mxu0
    %v732 = vadd.f32 0.0, %v731
    %v733 = vpop.f32.mrb[0].mxu0
    %v734 = vadd.f32 0.0, %v733
    %v735 = vpop.f32.mrb[0].mxu0
    %v736 = vadd.f32 0.0, %v735
    %737 = vdwg.mxu0
    %738 = vmatprep.subr.bf16.mxu0 %v550
    %739 = vmatpush1.bf16.msra.mxu0 %v549
    %740 = vmatprep.subr.bf16.mxu0 %v558
    %741 = vmatpush1.bf16.msra.mxu0 %v557
    %742 = vmatprep.subr.bf16.mxu0 %v566
    %743 = vmatpush1.bf16.msra.mxu0 %v565
    %744 = vmatprep.subr.bf16.mxu0 %v574
    %745 = vmatpush1.bf16.msra.mxu0 %v573
    %746 = vmatprep.subr.bf16.mxu0 %v582
    %747 = vmatpush1.bf16.msra.mxu0 %v581
    %748 = vmatprep.subr.bf16.mxu0 %v590
    %749 = vmatpush1.bf16.msra.mxu0 %v589
    %750 = vmatprep.subr.bf16.mxu0 %v598
    %751 = vmatpush1.bf16.msra.mxu0 %v597
    %752 = vmatprep.subr.bf16.mxu0 %v606
    %753 = vmatpush1.bf16.msra.mxu0 %v605
    %754 = vmatprep.subr.bf16.mxu0 0
    %755 = vmatpush1.bf16.msra.mxu0 0
    %756 = vmatprep.subr.bf16.mxu0 0
    %757 = vmatpush1.bf16.msra.mxu0 0
    %758 = vmatprep.subr.bf16.mxu0 0
    %759 = vmatpush1.bf16.msra.mxu0 0
    %760 = vmatprep.subr.bf16.mxu0 0
    %761 = vmatpush1.bf16.msra.mxu0 0
    %762 = vmatprep.subr.bf16.mxu0 0
    %763 = vmatpush1.bf16.msra.mxu0 0
    %764 = vmatprep.subr.bf16.mxu0 0
    %765 = vmatpush1.bf16.msra.mxu0 0
    %766 = vmatprep.subr.bf16.mxu0 0
    %767 = vmatpush1.bf16.msra.mxu0 0
    %768 = vmatprep.subr.bf16.mxu0 0
    %769 = vmatpush1.bf16.msra.mxu0 0
    %770 = vmatprep.mubr.bf16.mxu0 0
    %771 = vmatmul.mubr.bf16.gmra.mrb[0].mxu0 %v224
    %v772 = vpop.f32.mrb[0].mxu0
    %v773 = vadd.f32 0.0, %v772
    %v774 = vpop.f32.mrb[0].mxu0
    %v775 = vadd.f32 0.0, %v774
    %v776 = vpop.f32.mrb[0].mxu0
    %v777 = vadd.f32 0.0, %v776
    %v778 = vpop.f32.mrb[0].mxu0
    %v779 = vadd.f32 0.0, %v778
    %780 = vmatprep.mubr.bf16.mxu0 0
    %781 = vmatmul.mubr.bf16.gmra.mrb[0].mxu0 %v225
    %v782 = vpop.f32.mrb[0].mxu0
    %v783 = vadd.f32 0.0, %v782
    %v784 = vpop.f32.mrb[0].mxu0
    %v785 = vadd.f32 0.0, %v784
    %v786 = vpop.f32.mrb[0].mxu0
    %v787 = vadd.f32 0.0, %v786
    %v788 = vpop.f32.mrb[0].mxu0
    %v789 = vadd.f32 0.0, %v788
    %790 = vmatprep.mubr.bf16.mxu0 0
    %791 = vmatmul.mubr.bf16.gmra.mrb[0].mxu0 %v226
    %v792 = vpop.f32.mrb[0].mxu0
    %v793 = vadd.f32 0.0, %v792
    %v794 = vpop.f32.mrb[0].mxu0
    %v795 = vadd.f32 0.0, %v794
    %v796 = vpop.f32.mrb[0].mxu0
    %v797 = vadd.f32 0.0, %v796
    %v798 = vpop.f32.mrb[0].mxu0
    %v799 = vadd.f32 0.0, %v798
    %800 = vdwg.mxu0
    %801 = vmatprep.subr.bf16.mxu0 %v552
    %802 = vmatpush1.bf16.msra.mxu0 %v551
    %803 = vmatprep.subr.bf16.mxu0 %v560
    %804 = vmatpush1.bf16.msra.mxu0 %v559
    %805 = vmatprep.subr.bf16.mxu0 %v568
    %806 = vmatpush1.bf16.msra.mxu0 %v567
    %807 = vmatprep.subr.bf16.mxu0 %v576
    %808 = vmatpush1.bf16.msra.mxu0 %v575
    %809 = vmatprep.subr.bf16.mxu0 %v584
    %810 = vmatpush1.bf16.msra.mxu0 %v583
    %811 = vmatprep.subr.bf16.mxu0 %v592
    %812 = vmatpush1.bf16.msra.mxu0 %v591
    %813 = vmatprep.subr.bf16.mxu0 %v600
    %814 = vmatpush1.bf16.msra.mxu0 %v599
    %815 = vmatprep.subr.bf16.mxu0 %v608
    %816 = vmatpush1.bf16.msra.mxu0 %v607
    %817 = vmatprep.subr.bf16.mxu0 0
    %818 = vmatpush1.bf16.msra.mxu0 0
    %819 = vmatprep.subr.bf16.mxu0 0
    %820 = vmatpush1.bf16.msra.mxu0 0
    %821 = vmatprep.subr.bf16.mxu0 0
    %822 = vmatpush1.bf16.msra.mxu0 0
    %823 = vmatprep.subr.bf16.mxu0 0
    %824 = vmatpush1.bf16.msra.mxu0 0
    %825 = vmatprep.subr.bf16.mxu0 0
    %826 = vmatpush1.bf16.msra.mxu0 0
    %827 = vmatprep.subr.bf16.mxu0 0
    %828 = vmatpush1.bf16.msra.mxu0 0
    %829 = vmatprep.subr.bf16.mxu0 0
    %830 = vmatpush1.bf16.msra.mxu0 0
    %831 = vmatprep.subr.bf16.mxu0 0
    %832 = vmatpush1.bf16.msra.mxu0 0
    %833 = vmatprep.mubr.bf16.mxu0 0
    %834 = vmatmul.mubr.bf16.gmra.mrb[0].mxu0 %v224
    %v835 = vpop.f32.mrb[0].mxu0
    %v836 = vadd.f32 0.0, %v835
    %v837 = vpop.f32.mrb[0].mxu0
    %v838 = vadd.f32 0.0, %v837
    %v839 = vpop.f32.mrb[0].mxu0
    %v840 = vadd.f32 0.0, %v839
    %v841 = vpop.f32.mrb[0].mxu0
    %v842 = vadd.f32 0.0, %v841
    %843 = vmatprep.mubr.bf16.mxu0 0
    %844 = vmatmul.mubr.bf16.gmra.mrb[0].mxu0 %v225
    %v845 = vpop.f32.mrb[0].mxu0
    %v846 = vadd.f32 0.0, %v845
    %v847 = vpop.f32.mrb[0].mxu0
    %v848 = vadd.f32 0.0, %v847
    %v849 = vpop.f32.mrb[0].mxu0
    %v850 = vadd.f32 0.0, %v849
    %v851 = vpop.f32.mrb[0].mxu0
    %v852 = vadd.f32 0.0, %v851
    %853 = vmatprep.mubr.bf16.mxu0 0
    %854 = vmatmul.mubr.bf16.gmra.mrb[0].mxu0 %v226
    %v855 = vpop.f32.mrb[0].mxu0
    %v856 = vadd.f32 0.0, %v855
    %v857 = vpop.f32.mrb[0].mxu0
    %v858 = vadd.f32 0.0, %v857
    %v859 = vpop.f32.mrb[0].mxu0
    %v860 = vadd.f32 0.0, %v859
    %v861 = vpop.f32.mrb[0].mxu0
    %v862 = vadd.f32 0.0, %v861
    %863 = vdwg.mxu0
    %864 = vmatprep.subr.bf16.mxu0 %v554
    %865 = vmatpush1.bf16.msra.mxu0 %v553
    %866 = vmatprep.subr.bf16.mxu0 %v562
    %867 = vmatpush1.bf16.msra.mxu0 %v561
    %868 = vmatprep.subr.bf16.mxu0 %v570
    %869 = vmatpush1.bf16.msra.mxu0 %v569
    %870 = vmatprep.subr.bf16.mxu0 %v578
    %871 = vmatpush1.bf16.msra.mxu0 %v577
    %872 = vmatprep.subr.bf16.mxu0 %v586
    %873 = vmatpush1.bf16.msra.mxu0 %v585
    %874 = vmatprep.subr.bf16.mxu0 %v594
    %875 = vmatpush1.bf16.msra.mxu0 %v593
    %876 = vmatprep.subr.bf16.mxu0 %v602
    %877 = vmatpush1.bf16.msra.mxu0 %v601
    %878 = vmatprep.subr.bf16.mxu0 %v610
    %879 = vmatpush1.bf16.msra.mxu0 %v609
    %880 = vmatprep.subr.bf16.mxu0 0
    %881 = vmatpush1.bf16.msra.mxu0 0
    %882 = vmatprep.subr.bf16.mxu0 0
    %883 = vmatpush1.bf16.msra.mxu0 0
    %884 = vmatprep.subr.bf16.mxu0 0
    %885 = vmatpush1.bf16.msra.mxu0 0
    %886 = vmatprep.subr.bf16.mxu0 0
    %887 = vmatpush1.bf16.msra.mxu0 0
    %888 = vmatprep.subr.bf16.mxu0 0
    %889 = vmatpush1.bf16.msra.mxu0 0
    %890 = vmatprep.subr.bf16.mxu0 0
    %891 = vmatpush1.bf16.msra.mxu0 0
    %892 = vmatprep.subr.bf16.mxu0 0
    %893 = vmatpush1.bf16.msra.mxu0 0
    %894 = vmatprep.subr.bf16.mxu0 0
    %895 = vmatpush1.bf16.msra.mxu0 0
    %896 = vmatprep.mubr.bf16.mxu0 0
    %897 = vmatmul.mubr.bf16.gmra.mrb[0].mxu0 %v224
    %v898 = vpop.f32.mrb[0].mxu0
    %v899 = vadd.f32 0.0, %v898
    %v900 = vpop.f32.mrb[0].mxu0
    %v901 = vadd.f32 0.0, %v900
    %v902 = vpop.f32.mrb[0].mxu0
    %v903 = vadd.f32 0.0, %v902
    %v904 = vpop.f32.mrb[0].mxu0
    %v905 = vadd.f32 0.0, %v904
    %906 = vmatprep.mubr.bf16.mxu0 0
    %907 = vmatmul.mubr.bf16.gmra.mrb[0].mxu0 %v225
    %v908 = vpop.f32.mrb[0].mxu0
    %v909 = vadd.f32 0.0, %v908
    %v910 = vpop.f32.mrb[0].mxu0
    %v911 = vadd.f32 0.0, %v910
    %v912 = vpop.f32.mrb[0].mxu0
    %v913 = vadd.f32 0.0, %v912
    %v914 = vpop.f32.mrb[0].mxu0
    %v915 = vadd.f32 0.0, %v914
    %916 = vmatprep.mubr.bf16.mxu0 0
    %917 = vmatmul.mubr.bf16.gmra.mrb[0].mxu0 %v226
    %v918 = vpop.f32.mrb[0].mxu0
    %v919 = vadd.f32 0.0, %v918
    %v920 = vpop.f32.mrb[0].mxu0
    %v921 = vadd.f32 0.0, %v920
    %v922 = vpop.f32.mrb[0].mxu0
    %v923 = vadd.f32 0.0, %v922
    %v924 = vpop.f32.mrb[0].mxu0
    %v925 = vadd.f32 0.0, %v924
    %926 = vdwg.mxu0
    %v991 = vunpack.c.l.b16 %v227
    %v992 = vunpack.c.h.b16 %v227
    %v993 = vunpack.c.l.b16 %v228
    %v994 = vunpack.c.h.b16 %v228
    %v995 = vunpack.c.l.b16 %v229
    %v996 = vunpack.c.h.b16 %v229
    %v997 = vunpack.c.l.b16 %v230
    %v998 = vunpack.c.h.b16 %v230
    %v999 = vunpack.c.l.b16 %v231
    %v1000 = vunpack.c.h.b16 %v231
    %v1001 = vunpack.c.l.b16 %v232
    %v1002 = vunpack.c.h.b16 %v232
    %v1003 = vunpack.c.l.b16 %v233
    %v1004 = vunpack.c.h.b16 %v233
    %v1005 = vunpack.c.l.b16 %v234
    %v1006 = vunpack.c.h.b16 %v234
    %v1007 = vunpack.c.l.b16 %v235
    %v1008 = vunpack.c.h.b16 %v235
    %v1009 = vunpack.c.l.b16 %v236
    %v1010 = vunpack.c.h.b16 %v236
    %v1011 = vunpack.c.l.b16 %v237
    %v1012 = vunpack.c.h.b16 %v237
    %v1013 = vunpack.c.l.b16 %v238
    %v1014 = vunpack.c.h.b16 %v238
    %v1015 = vunpack.c.l.b16 %v239
    %v1016 = vunpack.c.h.b16 %v239
    %v1017 = vunpack.c.l.b16 %v240
    %v1018 = vunpack.c.h.b16 %v240
    %v1019 = vunpack.c.l.b16 %v241
    %v1020 = vunpack.c.h.b16 %v241
    %v1021 = vunpack.c.l.b16 %v242
    %v1022 = vunpack.c.h.b16 %v242
    %v1023 = vunpack.c.l.b16 %v243
    %v1024 = vunpack.c.h.b16 %v243
    %v1025 = vunpack.c.l.b16 %v244
    %v1026 = vunpack.c.h.b16 %v244
    %v1027 = vunpack.c.l.b16 %v245
    %v1028 = vunpack.c.h.b16 %v245
    %v1029 = vunpack.c.l.b16 %v246
    %v1030 = vunpack.c.h.b16 %v246
    %v1031 = vunpack.c.l.b16 %v247
    %v1032 = vunpack.c.h.b16 %v247
    %v1033 = vunpack.c.l.b16 %v248
    %v1034 = vunpack.c.h.b16 %v248
    %v1035 = vunpack.c.l.b16 %v249
    %v1036 = vunpack.c.h.b16 %v249
    %v1037 = vunpack.c.l.b16 %v250
    %v1038 = vunpack.c.h.b16 %v250
    %v1039 = vunpack.c.l.b16 %v251
    %v1040 = vunpack.c.h.b16 %v251
    %v1041 = vunpack.c.l.b16 %v252
    %v1042 = vunpack.c.h.b16 %v252
    %v1043 = vunpack.c.l.b16 %v253
    %v1044 = vunpack.c.h.b16 %v253
    %v1045 = vunpack.c.l.b16 %v254
    %v1046 = vunpack.c.h.b16 %v254
    %v1047 = vunpack.c.l.b16 %v255
    %v1048 = vunpack.c.h.b16 %v255
    %v1049 = vunpack.c.l.b16 %v256
    %v1050 = vunpack.c.h.b16 %v256
    %v1051 = vunpack.c.l.b16 %v257
    %v1052 = vunpack.c.h.b16 %v257
    %v1053 = vunpack.c.l.b16 %v258
    %v1054 = vunpack.c.h.b16 %v258
    %v1055 = vunpack.c.l.b16 %v259
    %v1056 = vunpack.c.h.b16 %v259
    %v1057 = vunpack.c.l.b16 %v260
    %v1058 = vunpack.c.h.b16 %v260
    %v1059 = vunpack.c.l.b16 %v261
    %v1060 = vunpack.c.h.b16 %v261
    %v1061 = vunpack.c.l.b16 %v262
    %v1062 = vunpack.c.h.b16 %v262
    %v1063 = vunpack.c.l.b16 %v263
    %v1064 = vunpack.c.h.b16 %v263
    %v1065 = vunpack.c.l.b16 %v264
    %v1066 = vunpack.c.h.b16 %v264
    %v1067 = vunpack.c.l.b16 %v265
    %v1068 = vunpack.c.h.b16 %v265
    %v1069 = vunpack.c.l.b16 %v266
    %v1070 = vunpack.c.h.b16 %v266
    %v1071 = vunpack.c.l.b16 %v267
    %v1072 = vunpack.c.h.b16 %v267
    %v1073 = vunpack.c.l.b16 %v268
    %v1074 = vunpack.c.h.b16 %v268
    %v1075 = vunpack.c.l.b16 %v269
    %v1076 = vunpack.c.h.b16 %v269
    %v1077 = vunpack.c.l.b16 %v270
    %v1078 = vunpack.c.h.b16 %v270
    %v1079 = vunpack.c.l.b16 %v271
    %v1080 = vunpack.c.h.b16 %v271
    %v1081 = vunpack.c.l.b16 %v272
    %v1082 = vunpack.c.h.b16 %v272
    %v1083 = vunpack.c.l.b16 %v273
    %v1084 = vunpack.c.h.b16 %v273
    %v1085 = vunpack.c.l.b16 %v274
    %v1086 = vunpack.c.h.b16 %v274
    %v1087 = vunpack.c.l.b16 %v275
    %v1088 = vunpack.c.h.b16 %v275
    %v1089 = vunpack.c.l.b16 %v276
    %v1090 = vunpack.c.h.b16 %v276
    %v1091 = vunpack.c.l.b16 %v277
    %v1092 = vunpack.c.h.b16 %v277
    %v1093 = vunpack.c.l.b16 %v278
    %v1094 = vunpack.c.h.b16 %v278
    %v1095 = vunpack.c.l.b16 %v279
    %v1096 = vunpack.c.h.b16 %v279
    %v1097 = vunpack.c.l.b16 %v280
    %v1098 = vunpack.c.h.b16 %v280
    %v1099 = vunpack.c.l.b16 %v281
    %v1100 = vunpack.c.h.b16 %v281
    %v1101 = vunpack.c.l.b16 %v282
    %v1102 = vunpack.c.h.b16 %v282
    %v1103 = vunpack.c.l.b16 %v283
    %v1104 = vunpack.c.h.b16 %v283
    %v1105 = vunpack.c.l.b16 %v284
    %v1106 = vunpack.c.h.b16 %v284
    %v1107 = vunpack.c.l.b16 %v285
    %v1108 = vunpack.c.h.b16 %v285
    %v1109 = vunpack.c.l.b16 %v286
    %v1110 = vunpack.c.h.b16 %v286
    %v1111 = vunpack.c.l.b16 %v287
    %v1112 = vunpack.c.h.b16 %v287
    %v1113 = vunpack.c.l.b16 %v288
    %v1114 = vunpack.c.h.b16 %v288
    %v1115 = vunpack.c.l.b16 %v289
    %v1116 = vunpack.c.h.b16 %v289
    %v1117 = vunpack.c.l.b16 %v290
    %v1118 = vunpack.c.h.b16 %v290
    %v1119 = vpack.c.b16 %v999, %v991
    %v1120 = vpack.c.b16 %v1000, %v992
    %v1121 = vpack.c.b16 %v1001, %v993
    %v1122 = vpack.c.b16 %v1002, %v994
    %v1123 = vpack.c.b16 %v1003, %v995
    %v1124 = vpack.c.b16 %v1004, %v996
    %v1125 = vpack.c.b16 %v1005, %v997
    %v1126 = vpack.c.b16 %v1006, %v998
    %v1127 = vpack.c.b16 %v1015, %v1007
    %v1128 = vpack.c.b16 %v1016, %v1008
    %v1129 = vpack.c.b16 %v1017, %v1009
    %v1130 = vpack.c.b16 %v1018, %v1010
    %v1131 = vpack.c.b16 %v1019, %v1011
    %v1132 = vpack.c.b16 %v1020, %v1012
    %v1133 = vpack.c.b16 %v1021, %v1013
    %v1134 = vpack.c.b16 %v1022, %v1014
    %v1135 = vpack.c.b16 %v1031, %v1023
    %v1136 = vpack.c.b16 %v1032, %v1024
    %v1137 = vpack.c.b16 %v1033, %v1025
    %v1138 = vpack.c.b16 %v1034, %v1026
    %v1139 = vpack.c.b16 %v1035, %v1027
    %v1140 = vpack.c.b16 %v1036, %v1028
    %v1141 = vpack.c.b16 %v1037, %v1029
    %v1142 = vpack.c.b16 %v1038, %v1030
    %v1143 = vpack.c.b16 %v1047, %v1039
    %v1144 = vpack.c.b16 %v1048, %v1040
    %v1145 = vpack.c.b16 %v1049, %v1041
    %v1146 = vpack.c.b16 %v1050, %v1042
    %v1147 = vpack.c.b16 %v1051, %v1043
    %v1148 = vpack.c.b16 %v1052, %v1044
    %v1149 = vpack.c.b16 %v1053, %v1045
    %v1150 = vpack.c.b16 %v1054, %v1046
    %v1151 = vpack.c.b16 %v1063, %v1055
    %v1152 = vpack.c.b16 %v1064, %v1056
    %v1153 = vpack.c.b16 %v1065, %v1057
    %v1154 = vpack.c.b16 %v1066, %v1058
    %v1155 = vpack.c.b16 %v1067, %v1059
    %v1156 = vpack.c.b16 %v1068, %v1060
    %v1157 = vpack.c.b16 %v1069, %v1061
    %v1158 = vpack.c.b16 %v1070, %v1062
    %v1159 = vpack.c.b16 %v1079, %v1071
    %v1160 = vpack.c.b16 %v1080, %v1072
    %v1161 = vpack.c.b16 %v1081, %v1073
    %v1162 = vpack.c.b16 %v1082, %v1074
    %v1163 = vpack.c.b16 %v1083, %v1075
    %v1164 = vpack.c.b16 %v1084, %v1076
    %v1165 = vpack.c.b16 %v1085, %v1077
    %v1166 = vpack.c.b16 %v1086, %v1078
    %v1167 = vpack.c.b16 %v1095, %v1087
    %v1168 = vpack.c.b16 %v1096, %v1088
    %v1169 = vpack.c.b16 %v1097, %v1089
    %v1170 = vpack.c.b16 %v1098, %v1090
    %v1171 = vpack.c.b16 %v1099, %v1091
    %v1172 = vpack.c.b16 %v1100, %v1092
    %v1173 = vpack.c.b16 %v1101, %v1093
    %v1174 = vpack.c.b16 %v1102, %v1094
    %v1175 = vpack.c.b16 %v1111, %v1103
    %v1176 = vpack.c.b16 %v1112, %v1104
    %v1177 = vpack.c.b16 %v1113, %v1105
    %v1178 = vpack.c.b16 %v1114, %v1106
    %v1179 = vpack.c.b16 %v1115, %v1107
    %v1180 = vpack.c.b16 %v1116, %v1108
    %v1181 = vpack.c.b16 %v1117, %v1109
    %v1182 = vpack.c.b16 %v1118, %v1110
    %1247 = vmatprep.subr.bf16.mxu0 %v1120
    %1248 = vmatpush1.bf16.msra.mxu0 %v1119
    %1249 = vmatprep.subr.bf16.mxu0 %v1128
    %1250 = vmatpush1.bf16.msra.mxu0 %v1127
    %1251 = vmatprep.subr.bf16.mxu0 %v1136
    %1252 = vmatpush1.bf16.msra.mxu0 %v1135
    %1253 = vmatprep.subr.bf16.mxu0 %v1144
    %1254 = vmatpush1.bf16.msra.mxu0 %v1143
    %1255 = vmatprep.subr.bf16.mxu0 %v1152
    %1256 = vmatpush1.bf16.msra.mxu0 %v1151
    %1257 = vmatprep.subr.bf16.mxu0 %v1160
    %1258 = vmatpush1.bf16.msra.mxu0 %v1159
    %1259 = vmatprep.subr.bf16.mxu0 %v1168
    %1260 = vmatpush1.bf16.msra.mxu0 %v1167
    %1261 = vmatprep.subr.bf16.mxu0 %v1176
    %1262 = vmatpush1.bf16.msra.mxu0 %v1175
    %1263 = vmatprep.subr.bf16.mxu0 0
    %1264 = vmatpush1.bf16.msra.mxu0 0
    %1265 = vmatprep.subr.bf16.mxu0 0
    %1266 = vmatpush1.bf16.msra.mxu0 0
    %1267 = vmatprep.subr.bf16.mxu0 0
    %1268 = vmatpush1.bf16.msra.mxu0 0
    %1269 = vmatprep.subr.bf16.mxu0 0
    %1270 = vmatpush1.bf16.msra.mxu0 0
    %1271 = vmatprep.subr.bf16.mxu0 0
    %1272 = vmatpush1.bf16.msra.mxu0 0
    %1273 = vmatprep.subr.bf16.mxu0 0
    %1274 = vmatpush1.bf16.msra.mxu0 0
    %1275 = vmatprep.subr.bf16.mxu0 0
    %1276 = vmatpush1.bf16.msra.mxu0 0
    %1277 = vmatprep.subr.bf16.mxu0 0
    %1278 = vmatpush1.bf16.msra.mxu0 0
    %1279 = vmatprep.mubr.bf16.mxu0 0
    %1280 = vmatmul.mubr.bf16.gmra.mrb[0].mxu0 %v215
    %v1281 = vpop.f32.mrb[0].mxu0
    %v1282 = vadd.f32 %v710, %v1281
    %v1283 = vpop.f32.mrb[0].mxu0
    %v1284 = vadd.f32 %v712, %v1283
    %v1285 = vpop.f32.mrb[0].mxu0
    %v1286 = vadd.f32 %v714, %v1285
    %v1287 = vpop.f32.mrb[0].mxu0
    %v1288 = vadd.f32 %v716, %v1287
    %1289 = vmatprep.mubr.bf16.mxu0 0
    %1290 = vmatmul.mubr.bf16.gmra.mrb[0].mxu0 %v216
    %v1291 = vpop.f32.mrb[0].mxu0
    %v1292 = vadd.f32 %v720, %v1291
    %v1293 = vpop.f32.mrb[0].mxu0
    %v1294 = vadd.f32 %v722, %v1293
    %v1295 = vpop.f32.mrb[0].mxu0
    %v1296 = vadd.f32 %v724, %v1295
    %v1297 = vpop.f32.mrb[0].mxu0
    %v1298 = vadd.f32 %v726, %v1297
    %1299 = vmatprep.mubr.bf16.mxu0 0
    %1300 = vmatmul.mubr.bf16.gmra.mrb[0].mxu0 %v217
    %v1301 = vpop.f32.mrb[0].mxu0
    %v1302 = vadd.f32 %v730, %v1301
    %v1303 = vpop.f32.mrb[0].mxu0
    %v1304 = vadd.f32 %v732, %v1303
    %v1305 = vpop.f32.mrb[0].mxu0
    %v1306 = vadd.f32 %v734, %v1305
    %v1307 = vpop.f32.mrb[0].mxu0
    %v1308 = vadd.f32 %v736, %v1307
    %1309 = vdwg.mxu0
    %1310 = vmatprep.subr.bf16.mxu0 %v1122
    %1311 = vmatpush1.bf16.msra.mxu0 %v1121
    %1312 = vmatprep.subr.bf16.mxu0 %v1130
    %1313 = vmatpush1.bf16.msra.mxu0 %v1129
    %1314 = vmatprep.subr.bf16.mxu0 %v1138
    %1315 = vmatpush1.bf16.msra.mxu0 %v1137
    %1316 = vmatprep.subr.bf16.mxu0 %v1146
    %1317 = vmatpush1.bf16.msra.mxu0 %v1145
    %1318 = vmatprep.subr.bf16.mxu0 %v1154
    %1319 = vmatpush1.bf16.msra.mxu0 %v1153
    %1320 = vmatprep.subr.bf16.mxu0 %v1162
    %1321 = vmatpush1.bf16.msra.mxu0 %v1161
    %1322 = vmatprep.subr.bf16.mxu0 %v1170
    %1323 = vmatpush1.bf16.msra.mxu0 %v1169
    %1324 = vmatprep.subr.bf16.mxu0 %v1178
    %1325 = vmatpush1.bf16.msra.mxu0 %v1177
    %1326 = vmatprep.subr.bf16.mxu0 0
    %1327 = vmatpush1.bf16.msra.mxu0 0
    %1328 = vmatprep.subr.bf16.mxu0 0
    %1329 = vmatpush1.bf16.msra.mxu0 0
    %1330 = vmatprep.subr.bf16.mxu0 0
    %1331 = vmatpush1.bf16.msra.mxu0 0
    %1332 = vmatprep.subr.bf16.mxu0 0
    %1333 = vmatpush1.bf16.msra.mxu0 0
    %1334 = vmatprep.subr.bf16.mxu0 0
    %1335 = vmatpush1.bf16.msra.mxu0 0
    %1336 = vmatprep.subr.bf16.mxu0 0
    %1337 = vmatpush1.bf16.msra.mxu0 0
    %1338 = vmatprep.subr.bf16.mxu0 0
    %1339 = vmatpush1.bf16.msra.mxu0 0
    %1340 = vmatprep.subr.bf16.mxu0 0
    %1341 = vmatpush1.bf16.msra.mxu0 0
    %1342 = vmatprep.mubr.bf16.mxu0 0
    %1343 = vmatmul.mubr.bf16.gmra.mrb[0].mxu0 %v215
    %v1344 = vpop.f32.mrb[0].mxu0
    %v1345 = vadd.f32 %v773, %v1344
    %v1346 = vpop.f32.mrb[0].mxu0
    %v1347 = vadd.f32 %v775, %v1346
    %v1348 = vpop.f32.mrb[0].mxu0
    %v1349 = vadd.f32 %v777, %v1348
    %v1350 = vpop.f32.mrb[0].mxu0
    %v1351 = vadd.f32 %v779, %v1350
    %1352 = vmatprep.mubr.bf16.mxu0 0
    %1353 = vmatmul.mubr.bf16.gmra.mrb[0].mxu0 %v216
    %v1354 = vpop.f32.mrb[0].mxu0
    %v1355 = vadd.f32 %v783, %v1354
    %v1356 = vpop.f32.mrb[0].mxu0
    %v1357 = vadd.f32 %v785, %v1356
    %v1358 = vpop.f32.mrb[0].mxu0
    %v1359 = vadd.f32 %v787, %v1358
    %v1360 = vpop.f32.mrb[0].mxu0
    %v1361 = vadd.f32 %v789, %v1360
    %1362 = vmatprep.mubr.bf16.mxu0 0
    %1363 = vmatmul.mubr.bf16.gmra.mrb[0].mxu0 %v217
    %v1364 = vpop.f32.mrb[0].mxu0
    %v1365 = vadd.f32 %v793, %v1364
    %v1366 = vpop.f32.mrb[0].mxu0
    %v1367 = vadd.f32 %v795, %v1366
    %v1368 = vpop.f32.mrb[0].mxu0
    %v1369 = vadd.f32 %v797, %v1368
    %v1370 = vpop.f32.mrb[0].mxu0
    %v1371 = vadd.f32 %v799, %v1370
    %1372 = vdwg.mxu0
    %1373 = vmatprep.subr.bf16.mxu0 %v1124
    %1374 = vmatpush1.bf16.msra.mxu0 %v1123
    %1375 = vmatprep.subr.bf16.mxu0 %v1132
    %1376 = vmatpush1.bf16.msra.mxu0 %v1131
    %1377 = vmatprep.subr.bf16.mxu0 %v1140
    %1378 = vmatpush1.bf16.msra.mxu0 %v1139
    %1379 = vmatprep.subr.bf16.mxu0 %v1148
    %1380 = vmatpush1.bf16.msra.mxu0 %v1147
    %1381 = vmatprep.subr.bf16.mxu0 %v1156
    %1382 = vmatpush1.bf16.msra.mxu0 %v1155
    %1383 = vmatprep.subr.bf16.mxu0 %v1164
    %1384 = vmatpush1.bf16.msra.mxu0 %v1163
    %1385 = vmatprep.subr.bf16.mxu0 %v1172
    %1386 = vmatpush1.bf16.msra.mxu0 %v1171
    %1387 = vmatprep.subr.bf16.mxu0 %v1180
    %1388 = vmatpush1.bf16.msra.mxu0 %v1179
    %1389 = vmatprep.subr.bf16.mxu0 0
    %1390 = vmatpush1.bf16.msra.mxu0 0
    %1391 = vmatprep.subr.bf16.mxu0 0
    %1392 = vmatpush1.bf16.msra.mxu0 0
    %1393 = vmatprep.subr.bf16.mxu0 0
    %1394 = vmatpush1.bf16.msra.mxu0 0
    %1395 = vmatprep.subr.bf16.mxu0 0
    %1396 = vmatpush1.bf16.msra.mxu0 0
    %1397 = vmatprep.subr.bf16.mxu0 0
    %1398 = vmatpush1.bf16.msra.mxu0 0
    %1399 = vmatprep.subr.bf16.mxu0 0
    %1400 = vmatpush1.bf16.msra.mxu0 0
    %1401 = vmatprep.subr.bf16.mxu0 0
    %1402 = vmatpush1.bf16.msra.mxu0 0
    %1403 = vmatprep.subr.bf16.mxu0 0
    %1404 = vmatpush1.bf16.msra.mxu0 0
    %1405 = vmatprep.mubr.bf16.mxu0 0
    %1406 = vmatmul.mubr.bf16.gmra.mrb[0].mxu0 %v215
    %v1407 = vpop.f32.mrb[0].mxu0
    %v1408 = vadd.f32 %v836, %v1407
    %v1409 = vpop.f32.mrb[0].mxu0
    %v1410 = vadd.f32 %v838, %v1409
    %v1411 = vpop.f32.mrb[0].mxu0
    %v1412 = vadd.f32 %v840, %v1411
    %v1413 = vpop.f32.mrb[0].mxu0
    %v1414 = vadd.f32 %v842, %v1413
    %1415 = vmatprep.mubr.bf16.mxu0 0
    %1416 = vmatmul.mubr.bf16.gmra.mrb[0].mxu0 %v216
    %v1417 = vpop.f32.mrb[0].mxu0
    %v1418 = vadd.f32 %v846, %v1417
    %v1419 = vpop.f32.mrb[0].mxu0
    %v1420 = vadd.f32 %v848, %v1419
    %v1421 = vpop.f32.mrb[0].mxu0
    %v1422 = vadd.f32 %v850, %v1421
    %v1423 = vpop.f32.mrb[0].mxu0
    %v1424 = vadd.f32 %v852, %v1423
    %1425 = vmatprep.mubr.bf16.mxu0 0
    %1426 = vmatmul.mubr.bf16.gmra.mrb[0].mxu0 %v217
    %v1427 = vpop.f32.mrb[0].mxu0
    %v1428 = vadd.f32 %v856, %v1427
    %v1429 = vpop.f32.mrb[0].mxu0
    %v1430 = vadd.f32 %v858, %v1429
    %v1431 = vpop.f32.mrb[0].mxu0
    %v1432 = vadd.f32 %v860, %v1431
    %v1433 = vpop.f32.mrb[0].mxu0
    %v1434 = vadd.f32 %v862, %v1433
    %1435 = vdwg.mxu0
    %1436 = vmatprep.subr.bf16.mxu0 %v1126
    %1437 = vmatpush1.bf16.msra.mxu0 %v1125
    %1438 = vmatprep.subr.bf16.mxu0 %v1134
    %1439 = vmatpush1.bf16.msra.mxu0 %v1133
    %1440 = vmatprep.subr.bf16.mxu0 %v1142
    %1441 = vmatpush1.bf16.msra.mxu0 %v1141
    %1442 = vmatprep.subr.bf16.mxu0 %v1150
    %1443 = vmatpush1.bf16.msra.mxu0 %v1149
    %1444 = vmatprep.subr.bf16.mxu0 %v1158
    %1445 = vmatpush1.bf16.msra.mxu0 %v1157
    %1446 = vmatprep.subr.bf16.mxu0 %v1166
    %1447 = vmatpush1.bf16.msra.mxu0 %v1165
    %1448 = vmatprep.subr.bf16.mxu0 %v1174
    %1449 = vmatpush1.bf16.msra.mxu0 %v1173
    %1450 = vmatprep.subr.bf16.mxu0 %v1182
    %1451 = vmatpush1.bf16.msra.mxu0 %v1181
    %1452 = vmatprep.subr.bf16.mxu0 0
    %1453 = vmatpush1.bf16.msra.mxu0 0
    %1454 = vmatprep.subr.bf16.mxu0 0
    %1455 = vmatpush1.bf16.msra.mxu0 0
    %1456 = vmatprep.subr.bf16.mxu0 0
    %1457 = vmatpush1.bf16.msra.mxu0 0
    %1458 = vmatprep.subr.bf16.mxu0 0
    %1459 = vmatpush1.bf16.msra.mxu0 0
    %1460 = vmatprep.subr.bf16.mxu0 0
    %1461 = vmatpush1.bf16.msra.mxu0 0
    %1462 = vmatprep.subr.bf16.mxu0 0
    %1463 = vmatpush1.bf16.msra.mxu0 0
    %1464 = vmatprep.subr.bf16.mxu0 0
    %1465 = vmatpush1.bf16.msra.mxu0 0
    %1466 = vmatprep.subr.bf16.mxu0 0
    %1467 = vmatpush1.bf16.msra.mxu0 0
    %1468 = vmatprep.mubr.bf16.mxu0 0
    %1469 = vmatmul.mubr.bf16.gmra.mrb[0].mxu0 %v215
    %v1470 = vpop.f32.mrb[0].mxu0
    %v1471 = vadd.f32 %v899, %v1470
    %v1472 = vpop.f32.mrb[0].mxu0
    %v1473 = vadd.f32 %v901, %v1472
    %v1474 = vpop.f32.mrb[0].mxu0
    %v1475 = vadd.f32 %v903, %v1474
    %v1476 = vpop.f32.mrb[0].mxu0
    %v1477 = vadd.f32 %v905, %v1476
    %1478 = vmatprep.mubr.bf16.mxu0 0
    %1479 = vmatmul.mubr.bf16.gmra.mrb[0].mxu0 %v216
    %v1480 = vpop.f32.mrb[0].mxu0
    %v1481 = vadd.f32 %v909, %v1480
    %v1482 = vpop.f32.mrb[0].mxu0
    %v1483 = vadd.f32 %v911, %v1482
    %v1484 = vpop.f32.mrb[0].mxu0
    %v1485 = vadd.f32 %v913, %v1484
    %v1486 = vpop.f32.mrb[0].mxu0
    %v1487 = vadd.f32 %v915, %v1486
    %1488 = vmatprep.mubr.bf16.mxu0 0
    %1489 = vmatmul.mubr.bf16.gmra.mrb[0].mxu0 %v217
    %v1490 = vpop.f32.mrb[0].mxu0
    %v1491 = vadd.f32 %v919, %v1490
    %v1492 = vpop.f32.mrb[0].mxu0
    %v1493 = vadd.f32 %v921, %v1492
    %v1494 = vpop.f32.mrb[0].mxu0
    %v1495 = vadd.f32 %v923, %v1494
    %v1496 = vpop.f32.mrb[0].mxu0
    %v1497 = vadd.f32 %v925, %v1496
    %1498 = vdwg.mxu0
    %v1499 = vld [vmem:[#allocation10] sm:$0xff]
    %v1501 = vlaneseq
    %v1502 = vshrl.u32 %v1501, 7
    %v1503 = vsub.s32 0, %v1502
    %v1504 = vrot.slane %v1499, %v1503
    %v1505 = vlaneseq
    %v1506 = vshrl.u32 %v1505, 7
    %v1507 = vsub.s32 1, %v1506
    %v1508 = vrot.slane %v1499, %v1507
    %v1509 = vlaneseq
    %v1510 = vshrl.u32 %v1509, 7
    %v1511 = vsub.s32 2, %v1510
    %v1512 = vrot.slane %v1499, %v1511
    %v1513 = vlaneseq
    %v1514 = vshrl.u32 %v1513, 7
    %v1515 = vsub.s32 3, %v1514
    %v1516 = vrot.slane %v1499, %v1515
    %v1517 = vlaneseq
    %v1518 = vshrl.u32 %v1517, 7
    %v1519 = vsub.s32 4, %v1518
    %v1520 = vrot.slane %v1499, %v1519
    %v1521 = vlaneseq
    %v1522 = vshrl.u32 %v1521, 7
    %v1523 = vsub.s32 5, %v1522
    %v1524 = vrot.slane %v1499, %v1523
    %v1525 = vlaneseq
    %v1526 = vshrl.u32 %v1525, 7
    %v1527 = vsub.s32 6, %v1526
    %v1528 = vrot.slane %v1499, %v1527
    %v1529 = vlaneseq
    %v1530 = vshrl.u32 %v1529, 7
    %v1531 = vsub.s32 7, %v1530
    %v1532 = vrot.slane %v1499, %v1531
    %v1541 = vadd.f32 %v1282, %v1504
    %v1542 = vadd.f32 %v1284, %v1508
    %v1543 = vadd.f32 %v1345, %v1512
    %v1544 = vadd.f32 %v1347, %v1516
    %v1545 = vadd.f32 %v1408, %v1520
    %v1546 = vadd.f32 %v1410, %v1524
    %v1547 = vadd.f32 %v1471, %v1528
    %v1548 = vadd.f32 %v1473, %v1532
    %v1549 = vadd.f32 %v1286, %v1504
    %v1550 = vadd.f32 %v1288, %v1508
    %v1551 = vadd.f32 %v1349, %v1512
    %v1552 = vadd.f32 %v1351, %v1516
    %v1553 = vadd.f32 %v1412, %v1520
    %v1554 = vadd.f32 %v1414, %v1524
    %v1555 = vadd.f32 %v1475, %v1528
    %v1556 = vadd.f32 %v1477, %v1532
    %v1557 = vadd.f32 %v1292, %v1504
    %v1558 = vadd.f32 %v1294, %v1508
    %v1559 = vadd.f32 %v1355, %v1512
    %v1560 = vadd.f32 %v1357, %v1516
    %v1561 = vadd.f32 %v1418, %v1520
    %v1562 = vadd.f32 %v1420, %v1524
    %v1563 = vadd.f32 %v1481, %v1528
    %v1564 = vadd.f32 %v1483, %v1532
    %v1565 = vadd.f32 %v1296, %v1504
    %v1566 = vadd.f32 %v1298, %v1508
    %v1567 = vadd.f32 %v1359, %v1512
    %v1568 = vadd.f32 %v1361, %v1516
    %v1569 = vadd.f32 %v1422, %v1520
    %v1570 = vadd.f32 %v1424, %v1524
    %v1571 = vadd.f32 %v1485, %v1528
    %v1572 = vadd.f32 %v1487, %v1532
    %v1573 = vadd.f32 %v1302, %v1504
    %v1574 = vadd.f32 %v1304, %v1508
    %v1575 = vadd.f32 %v1365, %v1512
    %v1576 = vadd.f32 %v1367, %v1516
    %v1577 = vadd.f32 %v1428, %v1520
    %v1578 = vadd.f32 %v1430, %v1524
    %v1579 = vadd.f32 %v1491, %v1528
    %v1580 = vadd.f32 %v1493, %v1532
    %v1581 = vadd.f32 %v1306, %v1504
    %v1582 = vadd.f32 %v1308, %v1508
    %v1583 = vadd.f32 %v1369, %v1512
    %v1584 = vadd.f32 %v1371, %v1516
    %v1585 = vadd.f32 %v1432, %v1520
    %v1586 = vadd.f32 %v1434, %v1524
    %v1587 = vadd.f32 %v1495, %v1528
    %v1588 = vadd.f32 %v1497, %v1532
    %v1589 = vld [vmem:[#allocation11] sm:$0xff]
    %v1590 = vld [vmem:[#allocation13] sm:$0xff]
    %v1591 = vadd.f32 %v1541, %v1542
    %v1592 = vadd.f32 %v1591, %v1543
    %v1593 = vadd.f32 %v1592, %v1544
    %v1594 = vadd.f32 %v1593, %v1545
    %v1595 = vadd.f32 %v1594, %v1546
    %v1596 = vadd.f32 %v1595, %v1547
    %v1597 = vadd.f32 %v1596, %v1548
    %1598 = vadd.xlane.f32.xlu0 %v1597
    %v1599 = vpop.xlane.xlu0 %1598
    %v1600 = vadd.f32 %v1549, %v1550
    %v1601 = vadd.f32 %v1600, %v1551
    %v1602 = vadd.f32 %v1601, %v1552
    %v1603 = vadd.f32 %v1602, %v1553
    %v1604 = vadd.f32 %v1603, %v1554
    %v1605 = vadd.f32 %v1604, %v1555
    %v1606 = vadd.f32 %v1605, %v1556
    %1607 = vadd.xlane.f32.xlu0 %v1606
    %v1608 = vpop.xlane.xlu0 %1607
    %v1609 = vadd.f32 %v1557, %v1558
    %v1610 = vadd.f32 %v1609, %v1559
    %v1611 = vadd.f32 %v1610, %v1560
    %v1612 = vadd.f32 %v1611, %v1561
    %v1613 = vadd.f32 %v1612, %v1562
    %v1614 = vadd.f32 %v1613, %v1563
    %v1615 = vadd.f32 %v1614, %v1564
    %1616 = vadd.xlane.f32.xlu0 %v1615
    %v1617 = vpop.xlane.xlu0 %1616
    %v1618 = vadd.f32 %v1565, %v1566
    %v1619 = vadd.f32 %v1618, %v1567
    %v1620 = vadd.f32 %v1619, %v1568
    %v1621 = vadd.f32 %v1620, %v1569
    %v1622 = vadd.f32 %v1621, %v1570
    %v1623 = vadd.f32 %v1622, %v1571
    %v1624 = vadd.f32 %v1623, %v1572
    %1625 = vadd.xlane.f32.xlu0 %v1624
    %v1626 = vpop.xlane.xlu0 %1625
    %v1627 = vadd.f32 %v1573, %v1574
    %v1628 = vadd.f32 %v1627, %v1575
    %v1629 = vadd.f32 %v1628, %v1576
    %v1630 = vadd.f32 %v1629, %v1577
    %v1631 = vadd.f32 %v1630, %v1578
    %v1632 = vadd.f32 %v1631, %v1579
    %v1633 = vadd.f32 %v1632, %v1580
    %1634 = vadd.xlane.f32.xlu0 %v1633
    %v1635 = vpop.xlane.xlu0 %1634
    %v1636 = vadd.f32 %v1581, %v1582
    %v1637 = vadd.f32 %v1636, %v1583
    %v1638 = vadd.f32 %v1637, %v1584
    %v1639 = vadd.f32 %v1638, %v1585
    %v1640 = vadd.f32 %v1639, %v1586
    %v1641 = vadd.f32 %v1640, %v1587
    %v1642 = vadd.f32 %v1641, %v1588
    %1643 = vadd.xlane.f32.xlu0 %v1642
    %v1644 = vpop.xlane.xlu0 %1643
    %v1645 = vmul.f32 %v1541, %v1541
    %v1646 = vmul.f32 %v1542, %v1542
    %v1647 = vmul.f32 %v1543, %v1543
    %v1648 = vmul.f32 %v1544, %v1544
    %v1649 = vmul.f32 %v1545, %v1545
    %v1650 = vmul.f32 %v1546, %v1546
    %v1651 = vmul.f32 %v1547, %v1547
    %v1652 = vmul.f32 %v1548, %v1548
    %v1653 = vmul.f32 %v1549, %v1549
    %v1654 = vmul.f32 %v1550, %v1550
    %v1655 = vmul.f32 %v1551, %v1551
    %v1656 = vmul.f32 %v1552, %v1552
    %v1657 = vmul.f32 %v1553, %v1553
    %v1658 = vmul.f32 %v1554, %v1554
    %v1659 = vmul.f32 %v1555, %v1555
    %v1660 = vmul.f32 %v1556, %v1556
    %v1661 = vmul.f32 %v1557, %v1557
    %v1662 = vmul.f32 %v1558, %v1558
    %v1663 = vmul.f32 %v1559, %v1559
    %v1664 = vmul.f32 %v1560, %v1560
    %v1665 = vmul.f32 %v1561, %v1561
    %v1666 = vmul.f32 %v1562, %v1562
    %v1667 = vmul.f32 %v1563, %v1563
    %v1668 = vmul.f32 %v1564, %v1564
    %v1669 = vmul.f32 %v1565, %v1565
    %v1670 = vmul.f32 %v1566, %v1566
    %v1671 = vmul.f32 %v1567, %v1567
    %v1672 = vmul.f32 %v1568, %v1568
    %v1673 = vmul.f32 %v1569, %v1569
    %v1674 = vmul.f32 %v1570, %v1570
    %v1675 = vmul.f32 %v1571, %v1571
    %v1676 = vmul.f32 %v1572, %v1572
    %v1677 = vmul.f32 %v1573, %v1573
    %v1678 = vmul.f32 %v1574, %v1574
    %v1679 = vmul.f32 %v1575, %v1575
    %v1680 = vmul.f32 %v1576, %v1576
    %v1681 = vmul.f32 %v1577, %v1577
    %v1682 = vmul.f32 %v1578, %v1578
    %v1683 = vmul.f32 %v1579, %v1579
    %v1684 = vmul.f32 %v1580, %v1580
    %v1685 = vmul.f32 %v1581, %v1581
    %v1686 = vmul.f32 %v1582, %v1582
    %v1687 = vmul.f32 %v1583, %v1583
    %v1688 = vmul.f32 %v1584, %v1584
    %v1689 = vmul.f32 %v1585, %v1585
    %v1690 = vmul.f32 %v1586, %v1586
    %v1691 = vmul.f32 %v1587, %v1587
    %v1692 = vmul.f32 %v1588, %v1588
    %v1693 = vadd.f32 %v1645, %v1646
    %v1694 = vadd.f32 %v1693, %v1647
    %v1695 = vadd.f32 %v1694, %v1648
    %v1696 = vadd.f32 %v1695, %v1649
    %v1697 = vadd.f32 %v1696, %v1650
    %v1698 = vadd.f32 %v1697, %v1651
    %v1699 = vadd.f32 %v1698, %v1652
    %1700 = vadd.xlane.f32.xlu0 %v1699
    %v1701 = vpop.xlane.xlu0 %1700
    %v1702 = vadd.f32 %v1653, %v1654
    %v1703 = vadd.f32 %v1702, %v1655
    %v1704 = vadd.f32 %v1703, %v1656
    %v1705 = vadd.f32 %v1704, %v1657
    %v1706 = vadd.f32 %v1705, %v1658
    %v1707 = vadd.f32 %v1706, %v1659
    %v1708 = vadd.f32 %v1707, %v1660
    %1709 = vadd.xlane.f32.xlu0 %v1708
    %v1710 = vpop.xlane.xlu0 %1709
    %v1711 = vadd.f32 %v1661, %v1662
    %v1712 = vadd.f32 %v1711, %v1663
    %v1713 = vadd.f32 %v1712, %v1664
    %v1714 = vadd.f32 %v1713, %v1665
    %v1715 = vadd.f32 %v1714, %v1666
    %v1716 = vadd.f32 %v1715, %v1667
    %v1717 = vadd.f32 %v1716, %v1668
    %1718 = vadd.xlane.f32.xlu0 %v1717
    %v1719 = vpop.xlane.xlu0 %1718
    %v1720 = vadd.f32 %v1669, %v1670
    %v1721 = vadd.f32 %v1720, %v1671
    %v1722 = vadd.f32 %v1721, %v1672
    %v1723 = vadd.f32 %v1722, %v1673
    %v1724 = vadd.f32 %v1723, %v1674
    %v1725 = vadd.f32 %v1724, %v1675
    %v1726 = vadd.f32 %v1725, %v1676
    %1727 = vadd.xlane.f32.xlu0 %v1726
    %v1728 = vpop.xlane.xlu0 %1727
    %v1729 = vadd.f32 %v1677, %v1678
    %v1730 = vadd.f32 %v1729, %v1679
    %v1731 = vadd.f32 %v1730, %v1680
    %v1732 = vadd.f32 %v1731, %v1681
    %v1733 = vadd.f32 %v1732, %v1682
    %v1734 = vadd.f32 %v1733, %v1683
    %v1735 = vadd.f32 %v1734, %v1684
    %1736 = vadd.xlane.f32.xlu0 %v1735
    %v1737 = vpop.xlane.xlu0 %1736
    %v1738 = vadd.f32 %v1685, %v1686
    %v1739 = vadd.f32 %v1738, %v1687
    %v1740 = vadd.f32 %v1739, %v1688
    %v1741 = vadd.f32 %v1740, %v1689
    %v1742 = vadd.f32 %v1741, %v1690
    %v1743 = vadd.f32 %v1742, %v1691
    %v1744 = vadd.f32 %v1743, %v1692
    %1745 = vadd.xlane.f32.xlu0 %v1744
    %v1746 = vpop.xlane.xlu0 %1745
    %v1747 = vmul.f32 %v1599, 0.0009765625
    %v1748 = vmul.f32 %v1608, 0.0009765625
    %v1749 = vmul.f32 %v1617, 0.0009765625
    %v1750 = vmul.f32 %v1626, 0.0009765625
    %v1751 = vmul.f32 %v1635, 0.0009765625
    %v1752 = vmul.f32 %v1644, 0.0009765625
    %v1753 = vmul.f32 %v1701, 0.0009765625
    %v1754 = vmul.f32 %v1710, 0.0009765625
    %v1755 = vmul.f32 %v1719, 0.0009765625
    %v1756 = vmul.f32 %v1728, 0.0009765625
    %v1757 = vmul.f32 %v1737, 0.0009765625
    %v1758 = vmul.f32 %v1746, 0.0009765625
    %v1759 = vmul.f32 %v1747, %v1747
    %v1760 = vmul.f32 %v1748, %v1748
    %v1761 = vmul.f32 %v1749, %v1749
    %v1762 = vmul.f32 %v1750, %v1750
    %v1763 = vmul.f32 %v1751, %v1751
    %v1764 = vmul.f32 %v1752, %v1752
    %v1765 = vsub.f32 %v1753, %v1759
    %v1766 = vsub.f32 %v1754, %v1760
    %v1767 = vsub.f32 %v1755, %v1761
    %v1768 = vsub.f32 %v1756, %v1762
    %v1769 = vsub.f32 %v1757, %v1763
    %v1770 = vsub.f32 %v1758, %v1764
    %v1771 = vadd.f32 %v1765, 1e-05
    %v1772 = vadd.f32 %v1766, 1e-05
    %v1773 = vadd.f32 %v1767, 1e-05
    %v1774 = vadd.f32 %v1768, 1e-05
    %v1775 = vadd.f32 %v1769, 1e-05
    %v1776 = vadd.f32 %v1770, 1e-05
    %v1777 = vrsqrt.pop %v1771
    %v1778 = vrsqrt.pop %v1772
    %v1779 = vrsqrt.pop %v1773
    %v1780 = vrsqrt.pop %v1774
    %v1781 = vrsqrt.pop %v1775
    %v1782 = vrsqrt.pop %v1776
    %v1783 = vsub.f32 %v1541, %v1747
    %v1784 = vsub.f32 %v1542, %v1747
    %v1785 = vsub.f32 %v1543, %v1747
    %v1786 = vsub.f32 %v1544, %v1747
    %v1787 = vsub.f32 %v1545, %v1747
    %v1788 = vsub.f32 %v1546, %v1747
    %v1789 = vsub.f32 %v1547, %v1747
    %v1790 = vsub.f32 %v1548, %v1747
    %v1791 = vsub.f32 %v1549, %v1748
    %v1792 = vsub.f32 %v1550, %v1748
    %v1793 = vsub.f32 %v1551, %v1748
    %v1794 = vsub.f32 %v1552, %v1748
    %v1795 = vsub.f32 %v1553, %v1748
    %v1796 = vsub.f32 %v1554, %v1748
    %v1797 = vsub.f32 %v1555, %v1748
    %v1798 = vsub.f32 %v1556, %v1748
    %v1799 = vsub.f32 %v1557, %v1749
    %v1800 = vsub.f32 %v1558, %v1749
    %v1801 = vsub.f32 %v1559, %v1749
    %v1802 = vsub.f32 %v1560, %v1749
    %v1803 = vsub.f32 %v1561, %v1749
    %v1804 = vsub.f32 %v1562, %v1749
    %v1805 = vsub.f32 %v1563, %v1749
    %v1806 = vsub.f32 %v1564, %v1749
    %v1807 = vsub.f32 %v1565, %v1750
    %v1808 = vsub.f32 %v1566, %v1750
    %v1809 = vsub.f32 %v1567, %v1750
    %v1810 = vsub.f32 %v1568, %v1750
    %v1811 = vsub.f32 %v1569, %v1750
    %v1812 = vsub.f32 %v1570, %v1750
    %v1813 = vsub.f32 %v1571, %v1750
    %v1814 = vsub.f32 %v1572, %v1750
    %v1815 = vsub.f32 %v1573, %v1751
    %v1816 = vsub.f32 %v1574, %v1751
    %v1817 = vsub.f32 %v1575, %v1751
    %v1818 = vsub.f32 %v1576, %v1751
    %v1819 = vsub.f32 %v1577, %v1751
    %v1820 = vsub.f32 %v1578, %v1751
    %v1821 = vsub.f32 %v1579, %v1751
    %v1822 = vsub.f32 %v1580, %v1751
    %v1823 = vsub.f32 %v1581, %v1752
    %v1824 = vsub.f32 %v1582, %v1752
    %v1825 = vsub.f32 %v1583, %v1752
    %v1826 = vsub.f32 %v1584, %v1752
    %v1827 = vsub.f32 %v1585, %v1752
    %v1828 = vsub.f32 %v1586, %v1752
    %v1829 = vsub.f32 %v1587, %v1752
    %v1830 = vsub.f32 %v1588, %v1752
    %v1831 = vmul.f32 %v1783, %v1777
    %v1832 = vmul.f32 %v1784, %v1777
    %v1833 = vmul.f32 %v1785, %v1777
    %v1834 = vmul.f32 %v1786, %v1777
    %v1835 = vmul.f32 %v1787, %v1777
    %v1836 = vmul.f32 %v1788, %v1777
    %v1837 = vmul.f32 %v1789, %v1777
    %v1838 = vmul.f32 %v1790, %v1777
    %v1839 = vmul.f32 %v1791, %v1778
    %v1840 = vmul.f32 %v1792, %v1778
    %v1841 = vmul.f32 %v1793, %v1778
    %v1842 = vmul.f32 %v1794, %v1778
    %v1843 = vmul.f32 %v1795, %v1778
    %v1844 = vmul.f32 %v1796, %v1778
    %v1845 = vmul.f32 %v1797, %v1778
    %v1846 = vmul.f32 %v1798, %v1778
    %v1847 = vmul.f32 %v1799, %v1779
    %v1848 = vmul.f32 %v1800, %v1779
    %v1849 = vmul.f32 %v1801, %v1779
    %v1850 = vmul.f32 %v1802, %v1779
    %v1851 = vmul.f32 %v1803, %v1779
    %v1852 = vmul.f32 %v1804, %v1779
    %v1853 = vmul.f32 %v1805, %v1779
    %v1854 = vmul.f32 %v1806, %v1779
    %v1855 = vmul.f32 %v1807, %v1780
    %v1856 = vmul.f32 %v1808, %v1780
    %v1857 = vmul.f32 %v1809, %v1780
    %v1858 = vmul.f32 %v1810, %v1780
    %v1859 = vmul.f32 %v1811, %v1780
    %v1860 = vmul.f32 %v1812, %v1780
    %v1861 = vmul.f32 %v1813, %v1780
    %v1862 = vmul.f32 %v1814, %v1780
    %v1863 = vmul.f32 %v1815, %v1781
    %v1864 = vmul.f32 %v1816, %v1781
    %v1865 = vmul.f32 %v1817, %v1781
    %v1866 = vmul.f32 %v1818, %v1781
    %v1867 = vmul.f32 %v1819, %v1781
    %v1868 = vmul.f32 %v1820, %v1781
    %v1869 = vmul.f32 %v1821, %v1781
    %v1870 = vmul.f32 %v1822, %v1781
    %v1871 = vmul.f32 %v1823, %v1782
    %v1872 = vmul.f32 %v1824, %v1782
    %v1873 = vmul.f32 %v1825, %v1782
    %v1874 = vmul.f32 %v1826, %v1782
    %v1875 = vmul.f32 %v1827, %v1782
    %v1876 = vmul.f32 %v1828, %v1782
    %v1877 = vmul.f32 %v1829, %v1782
    %v1878 = vmul.f32 %v1830, %v1782
    %v1879 = vpack.c.bf16 %v1839, %v1831
    %v1880 = vpack.c.bf16 %v1840, %v1832
    %v1881 = vpack.c.bf16 %v1841, %v1833
    %v1882 = vpack.c.bf16 %v1842, %v1834
    %v1883 = vpack.c.bf16 %v1843, %v1835
    %v1884 = vpack.c.bf16 %v1844, %v1836
    %v1885 = vpack.c.bf16 %v1845, %v1837
    %v1886 = vpack.c.bf16 %v1846, %v1838
    %v1887 = vpack.c.bf16 %v1855, %v1847
    %v1888 = vpack.c.bf16 %v1856, %v1848
    %v1889 = vpack.c.bf16 %v1857, %v1849
    %v1890 = vpack.c.bf16 %v1858, %v1850
    %v1891 = vpack.c.bf16 %v1859, %v1851
    %v1892 = vpack.c.bf16 %v1860, %v1852
    %v1893 = vpack.c.bf16 %v1861, %v1853
    %v1894 = vpack.c.bf16 %v1862, %v1854
    %v1895 = vpack.c.bf16 %v1871, %v1863
    %v1896 = vpack.c.bf16 %v1872, %v1864
    %v1897 = vpack.c.bf16 %v1873, %v1865
    %v1898 = vpack.c.bf16 %v1874, %v1866
    %v1899 = vpack.c.bf16 %v1875, %v1867
    %v1900 = vpack.c.bf16 %v1876, %v1868
    %v1901 = vpack.c.bf16 %v1877, %v1869
    %v1902 = vpack.c.bf16 %v1878, %v1870
    %v1904 = vlaneseq
    %v1905 = vshrl.u32 %v1904, 7
    %v1906 = vsub.s32 0, %v1905
    %v1907 = vrot.slane %v1589, %v1906
    %v1908 = vlaneseq
    %v1909 = vshrl.u32 %v1908, 7
    %v1910 = vsub.s32 1, %v1909
    %v1911 = vrot.slane %v1589, %v1910
    %v1912 = vlaneseq
    %v1913 = vshrl.u32 %v1912, 7
    %v1914 = vsub.s32 2, %v1913
    %v1915 = vrot.slane %v1589, %v1914
    %v1916 = vlaneseq
    %v1917 = vshrl.u32 %v1916, 7
    %v1918 = vsub.s32 3, %v1917
    %v1919 = vrot.slane %v1589, %v1918
    %v1920 = vlaneseq
    %v1921 = vshrl.u32 %v1920, 7
    %v1922 = vsub.s32 4, %v1921
    %v1923 = vrot.slane %v1589, %v1922
    %v1924 = vlaneseq
    %v1925 = vshrl.u32 %v1924, 7
    %v1926 = vsub.s32 5, %v1925
    %v1927 = vrot.slane %v1589, %v1926
    %v1928 = vlaneseq
    %v1929 = vshrl.u32 %v1928, 7
    %v1930 = vsub.s32 6, %v1929
    %v1931 = vrot.slane %v1589, %v1930
    %v1932 = vlaneseq
    %v1933 = vshrl.u32 %v1932, 7
    %v1934 = vsub.s32 7, %v1933
    %v1935 = vrot.slane %v1589, %v1934
    %v1944 = vpack.c.bf16 %v1907, %v1907
    %v1945 = vpack.c.bf16 %v1911, %v1911
    %v1946 = vpack.c.bf16 %v1915, %v1915
    %v1947 = vpack.c.bf16 %v1919, %v1919
    %v1948 = vpack.c.bf16 %v1923, %v1923
    %v1949 = vpack.c.bf16 %v1927, %v1927
    %v1950 = vpack.c.bf16 %v1931, %v1931
    %v1951 = vpack.c.bf16 %v1935, %v1935
    %v1953 = vpack.i.b16 %v1944, %v1944
    %v1955 = vlaneseq
    %v1956 = vshrl.u32 %v1955, 7
    %v1957 = vsub.s32 0, %v1956
    %v1958 = vrot.slane %v1953, %v1957
    %v1960 = vpack.i.b16 %v1945, %v1945
    %v1962 = vlaneseq
    %v1963 = vshrl.u32 %v1962, 7
    %v1964 = vsub.s32 0, %v1963
    %v1965 = vrot.slane %v1960, %v1964
    %v1967 = vpack.i.b16 %v1946, %v1946
    %v1969 = vlaneseq
    %v1970 = vshrl.u32 %v1969, 7
    %v1971 = vsub.s32 0, %v1970
    %v1972 = vrot.slane %v1967, %v1971
    %v1974 = vpack.i.b16 %v1947, %v1947
    %v1976 = vlaneseq
    %v1977 = vshrl.u32 %v1976, 7
    %v1978 = vsub.s32 0, %v1977
    %v1979 = vrot.slane %v1974, %v1978
    %v1981 = vpack.i.b16 %v1948, %v1948
    %v1983 = vlaneseq
    %v1984 = vshrl.u32 %v1983, 7
    %v1985 = vsub.s32 0, %v1984
    %v1986 = vrot.slane %v1981, %v1985
    %v1988 = vpack.i.b16 %v1949, %v1949
    %v1990 = vlaneseq
    %v1991 = vshrl.u32 %v1990, 7
    %v1992 = vsub.s32 0, %v1991
    %v1993 = vrot.slane %v1988, %v1992
    %v1995 = vpack.i.b16 %v1950, %v1950
    %v1997 = vlaneseq
    %v1998 = vshrl.u32 %v1997, 7
    %v1999 = vsub.s32 0, %v1998
    %v2000 = vrot.slane %v1995, %v1999
    %v2002 = vpack.i.b16 %v1951, %v1951
    %v2004 = vlaneseq
    %v2005 = vshrl.u32 %v2004, 7
    %v2006 = vsub.s32 0, %v2005
    %v2007 = vrot.slane %v2002, %v2006
    %v2008 = vmul.bf16 %v1879, %v1958
    %v2009 = vmul.bf16 %v1880, %v1965
    %v2010 = vmul.bf16 %v1881, %v1972
    %v2011 = vmul.bf16 %v1882, %v1979
    %v2012 = vmul.bf16 %v1883, %v1986
    %v2013 = vmul.bf16 %v1884, %v1993
    %v2014 = vmul.bf16 %v1885, %v2000
    %v2015 = vmul.bf16 %v1886, %v2007
    %v2016 = vmul.bf16 %v1887, %v1958
    %v2017 = vmul.bf16 %v1888, %v1965
    %v2018 = vmul.bf16 %v1889, %v1972
    %v2019 = vmul.bf16 %v1890, %v1979
    %v2020 = vmul.bf16 %v1891, %v1986
    %v2021 = vmul.bf16 %v1892, %v1993
    %v2022 = vmul.bf16 %v1893, %v2000
    %v2023 = vmul.bf16 %v1894, %v2007
    %v2024 = vmul.bf16 %v1895, %v1958
    %v2025 = vmul.bf16 %v1896, %v1965
    %v2026 = vmul.bf16 %v1897, %v1972
    %v2027 = vmul.bf16 %v1898, %v1979
    %v2028 = vmul.bf16 %v1899, %v1986
    %v2029 = vmul.bf16 %v1900, %v1993
    %v2030 = vmul.bf16 %v1901, %v2000
    %v2031 = vmul.bf16 %v1902, %v2007
    %v2033 = vlaneseq
    %v2034 = vshrl.u32 %v2033, 7
    %v2035 = vsub.s32 0, %v2034
    %v2036 = vrot.slane %v1590, %v2035
    %v2037 = vlaneseq
    %v2038 = vshrl.u32 %v2037, 7
    %v2039 = vsub.s32 1, %v2038
    %v2040 = vrot.slane %v1590, %v2039
    %v2041 = vlaneseq
    %v2042 = vshrl.u32 %v2041, 7
    %v2043 = vsub.s32 2, %v2042
    %v2044 = vrot.slane %v1590, %v2043
    %v2045 = vlaneseq
    %v2046 = vshrl.u32 %v2045, 7
    %v2047 = vsub.s32 3, %v2046
    %v2048 = vrot.slane %v1590, %v2047
    %v2049 = vlaneseq
    %v2050 = vshrl.u32 %v2049, 7
    %v2051 = vsub.s32 4, %v2050
    %v2052 = vrot.slane %v1590, %v2051
    %v2053 = vlaneseq
    %v2054 = vshrl.u32 %v2053, 7
    %v2055 = vsub.s32 5, %v2054
    %v2056 = vrot.slane %v1590, %v2055
    %v2057 = vlaneseq
    %v2058 = vshrl.u32 %v2057, 7
    %v2059 = vsub.s32 6, %v2058
    %v2060 = vrot.slane %v1590, %v2059
    %v2061 = vlaneseq
    %v2062 = vshrl.u32 %v2061, 7
    %v2063 = vsub.s32 7, %v2062
    %v2064 = vrot.slane %v1590, %v2063
    %v2073 = vpack.c.bf16 %v2036, %v2036
    %v2074 = vpack.c.bf16 %v2040, %v2040
    %v2075 = vpack.c.bf16 %v2044, %v2044
    %v2076 = vpack.c.bf16 %v2048, %v2048
    %v2077 = vpack.c.bf16 %v2052, %v2052
    %v2078 = vpack.c.bf16 %v2056, %v2056
    %v2079 = vpack.c.bf16 %v2060, %v2060
    %v2080 = vpack.c.bf16 %v2064, %v2064
    %v2082 = vpack.i.b16 %v2073, %v2073
    %v2084 = vlaneseq
    %v2085 = vshrl.u32 %v2084, 7
    %v2086 = vsub.s32 0, %v2085
    %v2087 = vrot.slane %v2082, %v2086
    %v2089 = vpack.i.b16 %v2074, %v2074
    %v2091 = vlaneseq
    %v2092 = vshrl.u32 %v2091, 7
    %v2093 = vsub.s32 0, %v2092
    %v2094 = vrot.slane %v2089, %v2093
    %v2096 = vpack.i.b16 %v2075, %v2075
    %v2098 = vlaneseq
    %v2099 = vshrl.u32 %v2098, 7
    %v2100 = vsub.s32 0, %v2099
    %v2101 = vrot.slane %v2096, %v2100
    %v2103 = vpack.i.b16 %v2076, %v2076
    %v2105 = vlaneseq
    %v2106 = vshrl.u32 %v2105, 7
    %v2107 = vsub.s32 0, %v2106
    %v2108 = vrot.slane %v2103, %v2107
    %v2110 = vpack.i.b16 %v2077, %v2077
    %v2112 = vlaneseq
    %v2113 = vshrl.u32 %v2112, 7
    %v2114 = vsub.s32 0, %v2113
    %v2115 = vrot.slane %v2110, %v2114
    %v2117 = vpack.i.b16 %v2078, %v2078
    %v2119 = vlaneseq
    %v2120 = vshrl.u32 %v2119, 7
    %v2121 = vsub.s32 0, %v2120
    %v2122 = vrot.slane %v2117, %v2121
    %v2124 = vpack.i.b16 %v2079, %v2079
    %v2126 = vlaneseq
    %v2127 = vshrl.u32 %v2126, 7
    %v2128 = vsub.s32 0, %v2127
    %v2129 = vrot.slane %v2124, %v2128
    %v2131 = vpack.i.b16 %v2080, %v2080
    %v2133 = vlaneseq
    %v2134 = vshrl.u32 %v2133, 7
    %v2135 = vsub.s32 0, %v2134
    %v2136 = vrot.slane %v2131, %v2135
    %v2137 = vadd.bf16 %v2008, %v2087
    %v2138 = vadd.bf16 %v2009, %v2094
    %v2139 = vadd.bf16 %v2010, %v2101
    %v2140 = vadd.bf16 %v2011, %v2108
    %v2141 = vadd.bf16 %v2012, %v2115
    %v2142 = vadd.bf16 %v2013, %v2122
    %v2143 = vadd.bf16 %v2014, %v2129
    %v2144 = vadd.bf16 %v2015, %v2136
    %v2145 = vadd.bf16 %v2016, %v2087
    %v2146 = vadd.bf16 %v2017, %v2094
    %v2147 = vadd.bf16 %v2018, %v2101
    %v2148 = vadd.bf16 %v2019, %v2108
    %v2149 = vadd.bf16 %v2020, %v2115
    %v2150 = vadd.bf16 %v2021, %v2122
    %v2151 = vadd.bf16 %v2022, %v2129
    %v2152 = vadd.bf16 %v2023, %v2136
    %v2153 = vadd.bf16 %v2024, %v2087
    %v2154 = vadd.bf16 %v2025, %v2094
    %v2155 = vadd.bf16 %v2026, %v2101
    %v2156 = vadd.bf16 %v2027, %v2108
    %v2157 = vadd.bf16 %v2028, %v2115
    %v2158 = vadd.bf16 %v2029, %v2122
    %v2159 = vadd.bf16 %v2030, %v2129
    %v2160 = vadd.bf16 %v2031, %v2136
    %v2161 = vxor.u32 %v2137, 2147516416
    %v2162 = vxor.u32 %v2138, 2147516416
    %v2163 = vxor.u32 %v2139, 2147516416
    %v2164 = vxor.u32 %v2140, 2147516416
    %v2165 = vxor.u32 %v2141, 2147516416
    %v2166 = vxor.u32 %v2142, 2147516416
    %v2167 = vxor.u32 %v2143, 2147516416
    %v2168 = vxor.u32 %v2144, 2147516416
    %v2169 = vxor.u32 %v2145, 2147516416
    %v2170 = vxor.u32 %v2146, 2147516416
    %v2171 = vxor.u32 %v2147, 2147516416
    %v2172 = vxor.u32 %v2148, 2147516416
    %v2173 = vxor.u32 %v2149, 2147516416
    %v2174 = vxor.u32 %v2150, 2147516416
    %v2175 = vxor.u32 %v2151, 2147516416
    %v2176 = vxor.u32 %v2152, 2147516416
    %v2177 = vxor.u32 %v2153, 2147516416
    %v2178 = vxor.u32 %v2154, 2147516416
    %v2179 = vxor.u32 %v2155, 2147516416
    %v2180 = vxor.u32 %v2156, 2147516416
    %v2181 = vxor.u32 %v2157, 2147516416
    %v2182 = vxor.u32 %v2158, 2147516416
    %v2183 = vxor.u32 %v2159, 2147516416
    %v2184 = vxor.u32 %v2160, 2147516416
    %v2186 = vmul.bf16 %v2161, 1069105081
    %v2187 = vpow.bf16.pop %v2186
    %v2189 = vmul.bf16 %v2162, 1069105081
    %v2190 = vpow.bf16.pop %v2189
    %v2192 = vmul.bf16 %v2163, 1069105081
    %v2193 = vpow.bf16.pop %v2192
    %v2195 = vmul.bf16 %v2164, 1069105081
    %v2196 = vpow.bf16.pop %v2195
    %v2198 = vmul.bf16 %v2165, 1069105081
    %v2199 = vpow.bf16.pop %v2198
    %v2201 = vmul.bf16 %v2166, 1069105081
    %v2202 = vpow.bf16.pop %v2201
    %v2204 = vmul.bf16 %v2167, 1069105081
    %v2205 = vpow.bf16.pop %v2204
    %v2207 = vmul.bf16 %v2168, 1069105081
    %v2208 = vpow.bf16.pop %v2207
    %v2210 = vmul.bf16 %v2169, 1069105081
    %v2211 = vpow.bf16.pop %v2210
    %v2213 = vmul.bf16 %v2170, 1069105081
    %v2214 = vpow.bf16.pop %v2213
    %v2216 = vmul.bf16 %v2171, 1069105081
    %v2217 = vpow.bf16.pop %v2216
    %v2219 = vmul.bf16 %v2172, 1069105081
    %v2220 = vpow.bf16.pop %v2219
    %v2222 = vmul.bf16 %v2173, 1069105081
    %v2223 = vpow.bf16.pop %v2222
    %v2225 = vmul.bf16 %v2174, 1069105081
    %v2226 = vpow.bf16.pop %v2225
    %v2228 = vmul.bf16 %v2175, 1069105081
    %v2229 = vpow.bf16.pop %v2228
    %v2231 = vmul.bf16 %v2176, 1069105081
    %v2232 = vpow.bf16.pop %v2231
    %v2234 = vmul.bf16 %v2177, 1069105081
    %v2235 = vpow.bf16.pop %v2234
    %v2237 = vmul.bf16 %v2178, 1069105081
    %v2238 = vpow.bf16.pop %v2237
    %v2240 = vmul.bf16 %v2179, 1069105081
    %v2241 = vpow.bf16.pop %v2240
    %v2243 = vmul.bf16 %v2180, 1069105081
    %v2244 = vpow.bf16.pop %v2243
    %v2246 = vmul.bf16 %v2181, 1069105081
    %v2247 = vpow.bf16.pop %v2246
    %v2249 = vmul.bf16 %v2182, 1069105081
    %v2250 = vpow.bf16.pop %v2249
    %v2252 = vmul.bf16 %v2183, 1069105081
    %v2253 = vpow.bf16.pop %v2252
    %v2255 = vmul.bf16 %v2184, 1069105081
    %v2256 = vpow.bf16.pop %v2255
    %v2257 = vadd.bf16 %v2187, 1065369472
    %v2258 = vadd.bf16 %v2190, 1065369472
    %v2259 = vadd.bf16 %v2193, 1065369472
    %v2260 = vadd.bf16 %v2196, 1065369472
    %v2261 = vadd.bf16 %v2199, 1065369472
    %v2262 = vadd.bf16 %v2202, 1065369472
    %v2263 = vadd.bf16 %v2205, 1065369472
    %v2264 = vadd.bf16 %v2208, 1065369472
    %v2265 = vadd.bf16 %v2211, 1065369472
    %v2266 = vadd.bf16 %v2214, 1065369472
    %v2267 = vadd.bf16 %v2217, 1065369472
    %v2268 = vadd.bf16 %v2220, 1065369472
    %v2269 = vadd.bf16 %v2223, 1065369472
    %v2270 = vadd.bf16 %v2226, 1065369472
    %v2271 = vadd.bf16 %v2229, 1065369472
    %v2272 = vadd.bf16 %v2232, 1065369472
    %v2273 = vadd.bf16 %v2235, 1065369472
    %v2274 = vadd.bf16 %v2238, 1065369472
    %v2275 = vadd.bf16 %v2241, 1065369472
    %v2276 = vadd.bf16 %v2244, 1065369472
    %v2277 = vadd.bf16 %v2247, 1065369472
    %v2278 = vadd.bf16 %v2250, 1065369472
    %v2279 = vadd.bf16 %v2253, 1065369472
    %v2280 = vadd.bf16 %v2256, 1065369472
    %v2281 = vrcp.bf16.pop %v2257
    %v2282 = vmul.bf16 1065369472, %v2281
    %v2283 = vrcp.bf16.pop %v2258
    %v2284 = vmul.bf16 1065369472, %v2283
    %v2285 = vrcp.bf16.pop %v2259
    %v2286 = vmul.bf16 1065369472, %v2285
    %v2287 = vrcp.bf16.pop %v2260
    %v2288 = vmul.bf16 1065369472, %v2287
    %v2289 = vrcp.bf16.pop %v2261
    %v2290 = vmul.bf16 1065369472, %v2289
    %v2291 = vrcp.bf16.pop %v2262
    %v2292 = vmul.bf16 1065369472, %v2291
    %v2293 = vrcp.bf16.pop %v2263
    %v2294 = vmul.bf16 1065369472, %v2293
    %v2295 = vrcp.bf16.pop %v2264
    %v2296 = vmul.bf16 1065369472, %v2295
    %v2297 = vrcp.bf16.pop %v2265
    %v2298 = vmul.bf16 1065369472, %v2297
    %v2299 = vrcp.bf16.pop %v2266
    %v2300 = vmul.bf16 1065369472, %v2299
    %v2301 = vrcp.bf16.pop %v2267
    %v2302 = vmul.bf16 1065369472, %v2301
    %v2303 = vrcp.bf16.pop %v2268
    %v2304 = vmul.bf16 1065369472, %v2303
    %v2305 = vrcp.bf16.pop %v2269
    %v2306 = vmul.bf16 1065369472, %v2305
    %v2307 = vrcp.bf16.pop %v2270
    %v2308 = vmul.bf16 1065369472, %v2307
    %v2309 = vrcp.bf16.pop %v2271
    %v2310 = vmul.bf16 1065369472, %v2309
    %v2311 = vrcp.bf16.pop %v2272
    %v2312 = vmul.bf16 1065369472, %v2311
    %v2313 = vrcp.bf16.pop %v2273
    %v2314 = vmul.bf16 1065369472, %v2313
    %v2315 = vrcp.bf16.pop %v2274
    %v2316 = vmul.bf16 1065369472, %v2315
    %v2317 = vrcp.bf16.pop %v2275
    %v2318 = vmul.bf16 1065369472, %v2317
    %v2319 = vrcp.bf16.pop %v2276
    %v2320 = vmul.bf16 1065369472, %v2319
    %v2321 = vrcp.bf16.pop %v2277
    %v2322 = vmul.bf16 1065369472, %v2321
    %v2323 = vrcp.bf16.pop %v2278
    %v2324 = vmul.bf16 1065369472, %v2323
    %v2325 = vrcp.bf16.pop %v2279
    %v2326 = vmul.bf16 1065369472, %v2325
    %v2327 = vrcp.bf16.pop %v2280
    %v2328 = vmul.bf16 1065369472, %v2327
    %v2329 = vmul.bf16 %v2137, %v2282
    %v2330 = vmul.bf16 %v2138, %v2284
    %v2331 = vmul.bf16 %v2139, %v2286
    %v2332 = vmul.bf16 %v2140, %v2288
    %v2333 = vmul.bf16 %v2141, %v2290
    %v2334 = vmul.bf16 %v2142, %v2292
    %v2335 = vmul.bf16 %v2143, %v2294
    %v2336 = vmul.bf16 %v2144, %v2296
    %v2337 = vmul.bf16 %v2145, %v2298
    %v2338 = vmul.bf16 %v2146, %v2300
    %v2339 = vmul.bf16 %v2147, %v2302
    %v2340 = vmul.bf16 %v2148, %v2304
    %v2341 = vmul.bf16 %v2149, %v2306
    %v2342 = vmul.bf16 %v2150, %v2308
    %v2343 = vmul.bf16 %v2151, %v2310
    %v2344 = vmul.bf16 %v2152, %v2312
    %v2345 = vmul.bf16 %v2153, %v2314
    %v2346 = vmul.bf16 %v2154, %v2316
    %v2347 = vmul.bf16 %v2155, %v2318
    %v2348 = vmul.bf16 %v2156, %v2320
    %v2349 = vmul.bf16 %v2157, %v2322
    %v2350 = vmul.bf16 %v2158, %v2324
    %v2351 = vmul.bf16 %v2159, %v2326
    %v2352 = vmul.bf16 %v2160, %v2328
    %v2353 = vld [vmem:[#allocation14] sm:$0xff]
    %v2354 = vld [vmem:[#allocation14 + $0x8] sm:$0xff]
    %v2355 = vld [vmem:[#allocation14 + $0x10] sm:$0xff]
    %v2356 = vld [vmem:[#allocation14 + $0x18] sm:$0xff]
    %v2357 = vld [vmem:[#allocation14 + $0x20] sm:$0xff]
    %v2358 = vld [vmem:[#allocation14 + $0x28] sm:$0xff]
    %v2359 = vld [vmem:[#allocation14 + $0x30] sm:$0xff]
    %v2360 = vld [vmem:[#allocation14 + $0x38] sm:$0xff]
    %v2361 = vld [vmem:[#allocation14 + $0x40] sm:$0xff]
    %v2362 = vld [vmem:[#allocation14 + $0x48] sm:$0xff]
    %v2363 = vld [vmem:[#allocation14 + $0x50] sm:$0xff]
    %v2364 = vld [vmem:[#allocation14 + $0x58] sm:$0xff]
    %v2365 = vld [vmem:[#allocation14 + $0x60] sm:$0xff]
    %v2366 = vld [vmem:[#allocation14 + $0x68] sm:$0xff]
    %v2367 = vld [vmem:[#allocation14 + $0x70] sm:$0xff]
    %v2368 = vld [vmem:[#allocation14 + $0x78] sm:$0xff]
    %v2369 = vld [vmem:[#allocation14 + $0x80] sm:$0xff]
    %v2370 = vld [vmem:[#allocation14 + $0x88] sm:$0xff]
    %v2371 = vld [vmem:[#allocation14 + $0x90] sm:$0xff]
    %v2372 = vld [vmem:[#allocation14 + $0x98] sm:$0xff]
    %v2373 = vld [vmem:[#allocation14 + $0xa0] sm:$0xff]
    %v2374 = vld [vmem:[#allocation14 + $0xa8] sm:$0xff]
    %v2375 = vld [vmem:[#allocation14 + $0xb0] sm:$0xff]
    %v2376 = vld [vmem:[#allocation14 + $0xb8] sm:$0xff]
    %v2377 = vld [vmem:[#allocation14 + $0xc0] sm:$0xff]
    %v2378 = vld [vmem:[#allocation14 + $0xc8] sm:$0xff]
    %v2379 = vld [vmem:[#allocation14 + $0xd0] sm:$0xff]
    %v2380 = vld [vmem:[#allocation14 + $0xd8] sm:$0xff]
    %v2381 = vld [vmem:[#allocation14 + $0xe0] sm:$0xff]
    %v2382 = vld [vmem:[#allocation14 + $0xe8] sm:$0xff]
    %v2383 = vld [vmem:[#allocation14 + $0xf0] sm:$0xff]
    %v2384 = vld [vmem:[#allocation14 + $0xf8] sm:$0xff]
    %v2385 = vld [vmem:[#allocation14 + $0x100] sm:$0xff]
    %v2386 = vld [vmem:[#allocation14 + $0x108] sm:$0xff]
    %v2387 = vld [vmem:[#allocation14 + $0x110] sm:$0xff]
    %v2388 = vld [vmem:[#allocation14 + $0x118] sm:$0xff]
    %v2389 = vld [vmem:[#allocation14 + $0x120] sm:$0xff]
    %v2390 = vld [vmem:[#allocation14 + $0x128] sm:$0xff]
    %v2391 = vld [vmem:[#allocation14 + $0x130] sm:$0xff]
    %v2392 = vld [vmem:[#allocation14 + $0x138] sm:$0xff]
    %v2393 = vld [vmem:[#allocation14 + $0x140] sm:$0xff]
    %v2394 = vld [vmem:[#allocation14 + $0x148] sm:$0xff]
    %v2395 = vld [vmem:[#allocation14 + $0x150] sm:$0xff]
    %v2396 = vld [vmem:[#allocation14 + $0x158] sm:$0xff]
    %v2397 = vld [vmem:[#allocation14 + $0x160] sm:$0xff]
    %v2398 = vld [vmem:[#allocation14 + $0x168] sm:$0xff]
    %v2399 = vld [vmem:[#allocation14 + $0x170] sm:$0xff]
    %v2400 = vld [vmem:[#allocation14 + $0x178] sm:$0xff]
    %v2401 = vld [vmem:[#allocation14 + $0x180] sm:$0xff]
    %v2402 = vld [vmem:[#allocation14 + $0x188] sm:$0xff]
    %v2403 = vld [vmem:[#allocation14 + $0x190] sm:$0xff]
    %v2404 = vld [vmem:[#allocation14 + $0x198] sm:$0xff]
    %v2405 = vld [vmem:[#allocation14 + $0x1a0] sm:$0xff]
    %v2406 = vld [vmem:[#allocation14 + $0x1a8] sm:$0xff]
    %v2407 = vld [vmem:[#allocation14 + $0x1b0] sm:$0xff]
    %v2408 = vld [vmem:[#allocation14 + $0x1b8] sm:$0xff]
    %v2409 = vld [vmem:[#allocation14 + $0x1c0] sm:$0xff]
    %v2410 = vld [vmem:[#allocation14 + $0x1c8] sm:$0xff]
    %v2411 = vld [vmem:[#allocation14 + $0x1d0] sm:$0xff]
    %v2412 = vld [vmem:[#allocation14 + $0x1d8] sm:$0xff]
    %v2413 = vld [vmem:[#allocation14 + $0x1e0] sm:$0xff]
    %v2414 = vld [vmem:[#allocation14 + $0x1e8] sm:$0xff]
    %v2415 = vld [vmem:[#allocation14 + $0x1f0] sm:$0xff]
    %v2416 = vld [vmem:[#allocation14 + $0x1f8] sm:$0xff]
    %v2417 = vld [vmem:[#allocation14 + $0x200] sm:$0xff]
    %v2418 = vld [vmem:[#allocation14 + $0x208] sm:$0xff]
    %v2419 = vld [vmem:[#allocation14 + $0x210] sm:$0xff]
    %v2420 = vld [vmem:[#allocation14 + $0x218] sm:$0xff]
    %v2421 = vld [vmem:[#allocation14 + $0x220] sm:$0xff]
    %v2422 = vld [vmem:[#allocation14 + $0x228] sm:$0xff]
    %v2423 = vld [vmem:[#allocation14 + $0x230] sm:$0xff]
    %v2424 = vld [vmem:[#allocation14 + $0x238] sm:$0xff]
    %v2425 = vld [vmem:[#allocation14 + $0x240] sm:$0xff]
    %v2426 = vld [vmem:[#allocation14 + $0x248] sm:$0xff]
    %v2427 = vld [vmem:[#allocation14 + $0x250] sm:$0xff]
    %v2428 = vld [vmem:[#allocation14 + $0x258] sm:$0xff]
    %v2429 = vld [vmem:[#allocation14 + $0x260] sm:$0xff]
    %v2430 = vld [vmem:[#allocation14 + $0x268] sm:$0xff]
    %v2431 = vld [vmem:[#allocation14 + $0x270] sm:$0xff]
    %v2432 = vld [vmem:[#allocation14 + $0x278] sm:$0xff]
    %v2433 = vld [vmem:[#allocation14 + $0x280] sm:$0xff]
    %v2434 = vld [vmem:[#allocation14 + $0x288] sm:$0xff]
    %v2435 = vld [vmem:[#allocation14 + $0x290] sm:$0xff]
    %v2436 = vld [vmem:[#allocation14 + $0x298] sm:$0xff]
    %v2437 = vld [vmem:[#allocation14 + $0x2a0] sm:$0xff]
    %v2438 = vld [vmem:[#allocation14 + $0x2a8] sm:$0xff]
    %v2439 = vld [vmem:[#allocation14 + $0x2b0] sm:$0xff]
    %v2440 = vld [vmem:[#allocation14 + $0x2b8] sm:$0xff]
    %v2441 = vld [vmem:[#allocation14 + $0x2c0] sm:$0xff]
    %v2442 = vld [vmem:[#allocation14 + $0x2c8] sm:$0xff]
    %v2443 = vld [vmem:[#allocation14 + $0x2d0] sm:$0xff]
    %v2444 = vld [vmem:[#allocation14 + $0x2d8] sm:$0xff]
    %v2445 = vld [vmem:[#allocation14 + $0x2e0] sm:$0xff]
    %v2446 = vld [vmem:[#allocation14 + $0x2e8] sm:$0xff]
    %v2447 = vld [vmem:[#allocation14 + $0x2f0] sm:$0xff]
    %v2448 = vld [vmem:[#allocation14 + $0x2f8] sm:$0xff]
    %v2449 = vld [vmem:[#allocation14 + $0x300] sm:$0xff]
    %v2450 = vld [vmem:[#allocation14 + $0x308] sm:$0xff]
    %v2451 = vld [vmem:[#allocation14 + $0x310] sm:$0xff]
    %v2452 = vld [vmem:[#allocation14 + $0x318] sm:$0xff]
    %v2453 = vld [vmem:[#allocation14 + $0x320] sm:$0xff]
    %v2454 = vld [vmem:[#allocation14 + $0x328] sm:$0xff]
    %v2455 = vld [vmem:[#allocation14 + $0x330] sm:$0xff]
    %v2456 = vld [vmem:[#allocation14 + $0x338] sm:$0xff]
    %v2457 = vld [vmem:[#allocation14 + $0x340] sm:$0xff]
    %v2458 = vld [vmem:[#allocation14 + $0x348] sm:$0xff]
    %v2459 = vld [vmem:[#allocation14 + $0x350] sm:$0xff]
    %v2460 = vld [vmem:[#allocation14 + $0x358] sm:$0xff]
    %v2461 = vld [vmem:[#allocation14 + $0x360] sm:$0xff]
    %v2462 = vld [vmem:[#allocation14 + $0x368] sm:$0xff]
    %v2463 = vld [vmem:[#allocation14 + $0x370] sm:$0xff]
    %v2464 = vld [vmem:[#allocation14 + $0x378] sm:$0xff]
    %v2465 = vld [vmem:[#allocation14 + $0x380] sm:$0xff]
    %v2466 = vld [vmem:[#allocation14 + $0x388] sm:$0xff]
    %v2467 = vld [vmem:[#allocation14 + $0x390] sm:$0xff]
    %v2468 = vld [vmem:[#allocation14 + $0x398] sm:$0xff]
    %v2469 = vld [vmem:[#allocation14 + $0x3a0] sm:$0xff]
    %v2470 = vld [vmem:[#allocation14 + $0x3a8] sm:$0xff]
    %v2471 = vld [vmem:[#allocation14 + $0x3b0] sm:$0xff]
    %v2472 = vld [vmem:[#allocation14 + $0x3b8] sm:$0xff]
    %v2473 = vld [vmem:[#allocation14 + $0x3c0] sm:$0xff]
    %v2474 = vld [vmem:[#allocation14 + $0x3c8] sm:$0xff]
    %v2475 = vld [vmem:[#allocation14 + $0x3d0] sm:$0xff]
    %v2476 = vld [vmem:[#allocation14 + $0x3d8] sm:$0xff]
    %v2477 = vld [vmem:[#allocation14 + $0x3e0] sm:$0xff]
    %v2478 = vld [vmem:[#allocation14 + $0x3e8] sm:$0xff]
    %v2479 = vld [vmem:[#allocation14 + $0x3f0] sm:$0xff]
    %v2480 = vld [vmem:[#allocation14 + $0x3f8] sm:$0xff]
    %v2481 = vld [vmem:[#allocation14 + $0x400] sm:$0xff]
    %v2482 = vld [vmem:[#allocation14 + $0x408] sm:$0xff]
    %v2483 = vld [vmem:[#allocation14 + $0x410] sm:$0xff]
    %v2484 = vld [vmem:[#allocation14 + $0x418] sm:$0xff]
    %v2485 = vld [vmem:[#allocation14 + $0x420] sm:$0xff]
    %v2486 = vld [vmem:[#allocation14 + $0x428] sm:$0xff]
    %v2487 = vld [vmem:[#allocation14 + $0x430] sm:$0xff]
    %v2488 = vld [vmem:[#allocation14 + $0x438] sm:$0xff]
    %v2489 = vld [vmem:[#allocation14 + $0x440] sm:$0xff]
    %v2490 = vld [vmem:[#allocation14 + $0x448] sm:$0xff]
    %v2491 = vld [vmem:[#allocation14 + $0x450] sm:$0xff]
    %v2492 = vld [vmem:[#allocation14 + $0x458] sm:$0xff]
    %v2493 = vld [vmem:[#allocation14 + $0x460] sm:$0xff]
    %v2494 = vld [vmem:[#allocation14 + $0x468] sm:$0xff]
    %v2495 = vld [vmem:[#allocation14 + $0x470] sm:$0xff]
    %v2496 = vld [vmem:[#allocation14 + $0x478] sm:$0xff]
    %v2497 = vld [vmem:[#allocation14 + $0x480] sm:$0xff]
    %v2498 = vld [vmem:[#allocation14 + $0x488] sm:$0xff]
    %v2499 = vld [vmem:[#allocation14 + $0x490] sm:$0xff]
    %v2500 = vld [vmem:[#allocation14 + $0x498] sm:$0xff]
    %v2501 = vld [vmem:[#allocation14 + $0x4a0] sm:$0xff]
    %v2502 = vld [vmem:[#allocation14 + $0x4a8] sm:$0xff]
    %v2503 = vld [vmem:[#allocation14 + $0x4b0] sm:$0xff]
    %v2504 = vld [vmem:[#allocation14 + $0x4b8] sm:$0xff]
    %v2505 = vld [vmem:[#allocation14 + $0x4c0] sm:$0xff]
    %v2506 = vld [vmem:[#allocation14 + $0x4c8] sm:$0xff]
    %v2507 = vld [vmem:[#allocation14 + $0x4d0] sm:$0xff]
    %v2508 = vld [vmem:[#allocation14 + $0x4d8] sm:$0xff]
    %v2509 = vld [vmem:[#allocation14 + $0x4e0] sm:$0xff]
    %v2510 = vld [vmem:[#allocation14 + $0x4e8] sm:$0xff]
    %v2511 = vld [vmem:[#allocation14 + $0x4f0] sm:$0xff]
    %v2512 = vld [vmem:[#allocation14 + $0x4f8] sm:$0xff]
    %v2513 = vld [vmem:[#allocation14 + $0x500] sm:$0xff]
    %v2514 = vld [vmem:[#allocation14 + $0x508] sm:$0xff]
    %v2515 = vld [vmem:[#allocation14 + $0x510] sm:$0xff]
    %v2516 = vld [vmem:[#allocation14 + $0x518] sm:$0xff]
    %v2517 = vld [vmem:[#allocation14 + $0x520] sm:$0xff]
    %v2518 = vld [vmem:[#allocation14 + $0x528] sm:$0xff]
    %v2519 = vld [vmem:[#allocation14 + $0x530] sm:$0xff]
    %v2520 = vld [vmem:[#allocation14 + $0x538] sm:$0xff]
    %v2521 = vld [vmem:[#allocation14 + $0x540] sm:$0xff]
    %v2522 = vld [vmem:[#allocation14 + $0x548] sm:$0xff]
    %v2523 = vld [vmem:[#allocation14 + $0x550] sm:$0xff]
    %v2524 = vld [vmem:[#allocation14 + $0x558] sm:$0xff]
    %v2525 = vld [vmem:[#allocation14 + $0x560] sm:$0xff]
    %v2526 = vld [vmem:[#allocation14 + $0x568] sm:$0xff]
    %v2527 = vld [vmem:[#allocation14 + $0x570] sm:$0xff]
    %v2528 = vld [vmem:[#allocation14 + $0x578] sm:$0xff]
    %v2529 = vld [vmem:[#allocation14 + $0x580] sm:$0xff]
    %v2530 = vld [vmem:[#allocation14 + $0x588] sm:$0xff]
    %v2531 = vld [vmem:[#allocation14 + $0x590] sm:$0xff]
    %v2532 = vld [vmem:[#allocation14 + $0x598] sm:$0xff]
    %v2533 = vld [vmem:[#allocation14 + $0x5a0] sm:$0xff]
    %v2534 = vld [vmem:[#allocation14 + $0x5a8] sm:$0xff]
    %v2535 = vld [vmem:[#allocation14 + $0x5b0] sm:$0xff]
    %v2536 = vld [vmem:[#allocation14 + $0x5b8] sm:$0xff]
    %v2537 = vld [vmem:[#allocation14 + $0x5c0] sm:$0xff]
    %v2538 = vld [vmem:[#allocation14 + $0x5c8] sm:$0xff]
    %v2539 = vld [vmem:[#allocation14 + $0x5d0] sm:$0xff]
    %v2540 = vld [vmem:[#allocation14 + $0x5d8] sm:$0xff]
    %v2541 = vld [vmem:[#allocation14 + $0x5e0] sm:$0xff]
    %v2542 = vld [vmem:[#allocation14 + $0x5e8] sm:$0xff]
    %v2543 = vld [vmem:[#allocation14 + $0x5f0] sm:$0xff]
    %v2544 = vld [vmem:[#allocation14 + $0x5f8] sm:$0xff]
    %v2545 = vld [vmem:[#allocation14 + $0x600] sm:$0xff]
    %v2546 = vld [vmem:[#allocation14 + $0x608] sm:$0xff]
    %v2547 = vld [vmem:[#allocation14 + $0x610] sm:$0xff]
    %v2548 = vld [vmem:[#allocation14 + $0x618] sm:$0xff]
    %v2549 = vld [vmem:[#allocation14 + $0x620] sm:$0xff]
    %v2550 = vld [vmem:[#allocation14 + $0x628] sm:$0xff]
    %v2551 = vld [vmem:[#allocation14 + $0x630] sm:$0xff]
    %v2552 = vld [vmem:[#allocation14 + $0x638] sm:$0xff]
    %v2553 = vld [vmem:[#allocation14 + $0x640] sm:$0xff]
    %v2554 = vld [vmem:[#allocation14 + $0x648] sm:$0xff]
    %v2555 = vld [vmem:[#allocation14 + $0x650] sm:$0xff]
    %v2556 = vld [vmem:[#allocation14 + $0x658] sm:$0xff]
    %v2557 = vld [vmem:[#allocation14 + $0x660] sm:$0xff]
    %v2558 = vld [vmem:[#allocation14 + $0x668] sm:$0xff]
    %v2559 = vld [vmem:[#allocation14 + $0x670] sm:$0xff]
    %v2560 = vld [vmem:[#allocation14 + $0x678] sm:$0xff]
    %v2561 = vld [vmem:[#allocation14 + $0x680] sm:$0xff]
    %v2562 = vld [vmem:[#allocation14 + $0x688] sm:$0xff]
    %v2563 = vld [vmem:[#allocation14 + $0x690] sm:$0xff]
    %v2564 = vld [vmem:[#allocation14 + $0x698] sm:$0xff]
    %v2565 = vld [vmem:[#allocation14 + $0x6a0] sm:$0xff]
    %v2566 = vld [vmem:[#allocation14 + $0x6a8] sm:$0xff]
    %v2567 = vld [vmem:[#allocation14 + $0x6b0] sm:$0xff]
    %v2568 = vld [vmem:[#allocation14 + $0x6b8] sm:$0xff]
    %v2569 = vld [vmem:[#allocation14 + $0x6c0] sm:$0xff]
    %v2570 = vld [vmem:[#allocation14 + $0x6c8] sm:$0xff]
    %v2571 = vld [vmem:[#allocation14 + $0x6d0] sm:$0xff]
    %v2572 = vld [vmem:[#allocation14 + $0x6d8] sm:$0xff]
    %v2573 = vld [vmem:[#allocation14 + $0x6e0] sm:$0xff]
    %v2574 = vld [vmem:[#allocation14 + $0x6e8] sm:$0xff]
    %v2575 = vld [vmem:[#allocation14 + $0x6f0] sm:$0xff]
    %v2576 = vld [vmem:[#allocation14 + $0x6f8] sm:$0xff]
    %v2577 = vld [vmem:[#allocation14 + $0x700] sm:$0xff]
    %v2578 = vld [vmem:[#allocation14 + $0x708] sm:$0xff]
    %v2579 = vld [vmem:[#allocation14 + $0x710] sm:$0xff]
    %v2580 = vld [vmem:[#allocation14 + $0x718] sm:$0xff]
    %v2581 = vld [vmem:[#allocation14 + $0x720] sm:$0xff]
    %v2582 = vld [vmem:[#allocation14 + $0x728] sm:$0xff]
    %v2583 = vld [vmem:[#allocation14 + $0x730] sm:$0xff]
    %v2584 = vld [vmem:[#allocation14 + $0x738] sm:$0xff]
    %v2585 = vld [vmem:[#allocation14 + $0x740] sm:$0xff]
    %v2586 = vld [vmem:[#allocation14 + $0x748] sm:$0xff]
    %v2587 = vld [vmem:[#allocation14 + $0x750] sm:$0xff]
    %v2588 = vld [vmem:[#allocation14 + $0x758] sm:$0xff]
    %v2589 = vld [vmem:[#allocation14 + $0x760] sm:$0xff]
    %v2590 = vld [vmem:[#allocation14 + $0x768] sm:$0xff]
    %v2591 = vld [vmem:[#allocation14 + $0x770] sm:$0xff]
    %v2592 = vld [vmem:[#allocation14 + $0x778] sm:$0xff]
    %v2593 = vld [vmem:[#allocation14 + $0x780] sm:$0xff]
    %v2594 = vld [vmem:[#allocation14 + $0x788] sm:$0xff]
    %v2595 = vld [vmem:[#allocation14 + $0x790] sm:$0xff]
    %v2596 = vld [vmem:[#allocation14 + $0x798] sm:$0xff]
    %v2597 = vld [vmem:[#allocation14 + $0x7a0] sm:$0xff]
    %v2598 = vld [vmem:[#allocation14 + $0x7a8] sm:$0xff]
    %v2599 = vld [vmem:[#allocation14 + $0x7b0] sm:$0xff]
    %v2600 = vld [vmem:[#allocation14 + $0x7b8] sm:$0xff]
    %v2601 = vld [vmem:[#allocation14 + $0x7c0] sm:$0xff]
    %v2602 = vld [vmem:[#allocation14 + $0x7c8] sm:$0xff]
    %v2603 = vld [vmem:[#allocation14 + $0x7d0] sm:$0xff]
    %v2604 = vld [vmem:[#allocation14 + $0x7d8] sm:$0xff]
    %v2605 = vld [vmem:[#allocation14 + $0x7e0] sm:$0xff]
    %v2606 = vld [vmem:[#allocation14 + $0x7e8] sm:$0xff]
    %v2607 = vld [vmem:[#allocation14 + $0x7f0] sm:$0xff]
    %v2608 = vld [vmem:[#allocation14 + $0x7f8] sm:$0xff]
    %v2609 = vld [vmem:[#allocation16] sm:$0xf]
    %v2611 = vlaneseq
    %v2612 = vshrl.u32 %v2611, 7
    %v2613 = vsub.s32 0, %v2612
    %v2614 = vrot.slane %v2609, %v2613
    %v2615 = vlaneseq
    %v2616 = vshrl.u32 %v2615, 7
    %v2617 = vsub.s32 1, %v2616
    %v2618 = vrot.slane %v2609, %v2617
    %v2619 = vlaneseq
    %v2620 = vshrl.u32 %v2619, 7
    %v2621 = vsub.s32 2, %v2620
    %v2622 = vrot.slane %v2609, %v2621
    %v2623 = vlaneseq
    %v2624 = vshrl.u32 %v2623, 7
    %v2625 = vsub.s32 3, %v2624
    %v2626 = vrot.slane %v2609, %v2625
    %v2887 = vunpack.c.l.b16 %v2353
    %v2888 = vunpack.c.h.b16 %v2353
    %v2889 = vunpack.c.l.b16 %v2354
    %v2890 = vunpack.c.h.b16 %v2354
    %v2891 = vunpack.c.l.b16 %v2355
    %v2892 = vunpack.c.h.b16 %v2355
    %v2893 = vunpack.c.l.b16 %v2356
    %v2894 = vunpack.c.h.b16 %v2356
    %v2895 = vunpack.c.l.b16 %v2357
    %v2896 = vunpack.c.h.b16 %v2357
    %v2897 = vunpack.c.l.b16 %v2358
    %v2898 = vunpack.c.h.b16 %v2358
    %v2899 = vunpack.c.l.b16 %v2359
    %v2900 = vunpack.c.h.b16 %v2359
    %v2901 = vunpack.c.l.b16 %v2360
    %v2902 = vunpack.c.h.b16 %v2360
    %v2903 = vunpack.c.l.b16 %v2361
    %v2904 = vunpack.c.h.b16 %v2361
    %v2905 = vunpack.c.l.b16 %v2362
    %v2906 = vunpack.c.h.b16 %v2362
    %v2907 = vunpack.c.l.b16 %v2363
    %v2908 = vunpack.c.h.b16 %v2363
    %v2909 = vunpack.c.l.b16 %v2364
    %v2910 = vunpack.c.h.b16 %v2364
    %v2911 = vunpack.c.l.b16 %v2365
    %v2912 = vunpack.c.h.b16 %v2365
    %v2913 = vunpack.c.l.b16 %v2366
    %v2914 = vunpack.c.h.b16 %v2366
    %v2915 = vunpack.c.l.b16 %v2367
    %v2916 = vunpack.c.h.b16 %v2367
    %v2917 = vunpack.c.l.b16 %v2368
    %v2918 = vunpack.c.h.b16 %v2368
    %v2919 = vunpack.c.l.b16 %v2369
    %v2920 = vunpack.c.h.b16 %v2369
    %v2921 = vunpack.c.l.b16 %v2370
    %v2922 = vunpack.c.h.b16 %v2370
    %v2923 = vunpack.c.l.b16 %v2371
    %v2924 = vunpack.c.h.b16 %v2371
    %v2925 = vunpack.c.l.b16 %v2372
    %v2926 = vunpack.c.h.b16 %v2372
    %v2927 = vunpack.c.l.b16 %v2373
    %v2928 = vunpack.c.h.b16 %v2373
    %v2929 = vunpack.c.l.b16 %v2374
    %v2930 = vunpack.c.h.b16 %v2374
    %v2931 = vunpack.c.l.b16 %v2375
    %v2932 = vunpack.c.h.b16 %v2375
    %v2933 = vunpack.c.l.b16 %v2376
    %v2934 = vunpack.c.h.b16 %v2376
    %v2935 = vunpack.c.l.b16 %v2377
    %v2936 = vunpack.c.h.b16 %v2377
    %v2937 = vunpack.c.l.b16 %v2378
    %v2938 = vunpack.c.h.b16 %v2378
    %v2939 = vunpack.c.l.b16 %v2379
    %v2940 = vunpack.c.h.b16 %v2379
    %v2941 = vunpack.c.l.b16 %v2380
    %v2942 = vunpack.c.h.b16 %v2380
    %v2943 = vunpack.c.l.b16 %v2381
    %v2944 = vunpack.c.h.b16 %v2381
    %v2945 = vunpack.c.l.b16 %v2382
    %v2946 = vunpack.c.h.b16 %v2382
    %v2947 = vunpack.c.l.b16 %v2383
    %v2948 = vunpack.c.h.b16 %v2383
    %v2949 = vunpack.c.l.b16 %v2384
    %v2950 = vunpack.c.h.b16 %v2384
    %v2951 = vunpack.c.l.b16 %v2385
    %v2952 = vunpack.c.h.b16 %v2385
    %v2953 = vunpack.c.l.b16 %v2386
    %v2954 = vunpack.c.h.b16 %v2386
    %v2955 = vunpack.c.l.b16 %v2387
    %v2956 = vunpack.c.h.b16 %v2387
    %v2957 = vunpack.c.l.b16 %v2388
    %v2958 = vunpack.c.h.b16 %v2388
    %v2959 = vunpack.c.l.b16 %v2389
    %v2960 = vunpack.c.h.b16 %v2389
    %v2961 = vunpack.c.l.b16 %v2390
    %v2962 = vunpack.c.h.b16 %v2390
    %v2963 = vunpack.c.l.b16 %v2391
    %v2964 = vunpack.c.h.b16 %v2391
    %v2965 = vunpack.c.l.b16 %v2392
    %v2966 = vunpack.c.h.b16 %v2392
    %v2967 = vunpack.c.l.b16 %v2393
    %v2968 = vunpack.c.h.b16 %v2393
    %v2969 = vunpack.c.l.b16 %v2394
    %v2970 = vunpack.c.h.b16 %v2394
    %v2971 = vunpack.c.l.b16 %v2395
    %v2972 = vunpack.c.h.b16 %v2395
    %v2973 = vunpack.c.l.b16 %v2396
    %v2974 = vunpack.c.h.b16 %v2396
    %v2975 = vunpack.c.l.b16 %v2397
    %v2976 = vunpack.c.h.b16 %v2397
    %v2977 = vunpack.c.l.b16 %v2398
    %v2978 = vunpack.c.h.b16 %v2398
    %v2979 = vunpack.c.l.b16 %v2399
    %v2980 = vunpack.c.h.b16 %v2399
    %v2981 = vunpack.c.l.b16 %v2400
    %v2982 = vunpack.c.h.b16 %v2400
    %v2983 = vunpack.c.l.b16 %v2401
    %v2984 = vunpack.c.h.b16 %v2401
    %v2985 = vunpack.c.l.b16 %v2402
    %v2986 = vunpack.c.h.b16 %v2402
    %v2987 = vunpack.c.l.b16 %v2403
    %v2988 = vunpack.c.h.b16 %v2403
    %v2989 = vunpack.c.l.b16 %v2404
    %v2990 = vunpack.c.h.b16 %v2404
    %v2991 = vunpack.c.l.b16 %v2405
    %v2992 = vunpack.c.h.b16 %v2405
    %v2993 = vunpack.c.l.b16 %v2406
    %v2994 = vunpack.c.h.b16 %v2406
    %v2995 = vunpack.c.l.b16 %v2407
    %v2996 = vunpack.c.h.b16 %v2407
    %v2997 = vunpack.c.l.b16 %v2408
    %v2998 = vunpack.c.h.b16 %v2408
    %v2999 = vunpack.c.l.b16 %v2409
    %v3000 = vunpack.c.h.b16 %v2409
    %v3001 = vunpack.c.l.b16 %v2410
    %v3002 = vunpack.c.h.b16 %v2410
    %v3003 = vunpack.c.l.b16 %v2411
    %v3004 = vunpack.c.h.b16 %v2411
    %v3005 = vunpack.c.l.b16 %v2412
    %v3006 = vunpack.c.h.b16 %v2412
    %v3007 = vunpack.c.l.b16 %v2413
    %v3008 = vunpack.c.h.b16 %v2413
    %v3009 = vunpack.c.l.b16 %v2414
    %v3010 = vunpack.c.h.b16 %v2414
    %v3011 = vunpack.c.l.b16 %v2415
    %v3012 = vunpack.c.h.b16 %v2415
    %v3013 = vunpack.c.l.b16 %v2416
    %v3014 = vunpack.c.h.b16 %v2416
    %v3015 = vunpack.c.l.b16 %v2417
    %v3016 = vunpack.c.h.b16 %v2417
    %v3017 = vunpack.c.l.b16 %v2418
    %v3018 = vunpack.c.h.b16 %v2418
    %v3019 = vunpack.c.l.b16 %v2419
    %v3020 = vunpack.c.h.b16 %v2419
    %v3021 = vunpack.c.l.b16 %v2420
    %v3022 = vunpack.c.h.b16 %v2420
    %v3023 = vunpack.c.l.b16 %v2421
    %v3024 = vunpack.c.h.b16 %v2421
    %v3025 = vunpack.c.l.b16 %v2422
    %v3026 = vunpack.c.h.b16 %v2422
    %v3027 = vunpack.c.l.b16 %v2423
    %v3028 = vunpack.c.h.b16 %v2423
    %v3029 = vunpack.c.l.b16 %v2424
    %v3030 = vunpack.c.h.b16 %v2424
    %v3031 = vunpack.c.l.b16 %v2425
    %v3032 = vunpack.c.h.b16 %v2425
    %v3033 = vunpack.c.l.b16 %v2426
    %v3034 = vunpack.c.h.b16 %v2426
    %v3035 = vunpack.c.l.b16 %v2427
    %v3036 = vunpack.c.h.b16 %v2427
    %v3037 = vunpack.c.l.b16 %v2428
    %v3038 = vunpack.c.h.b16 %v2428
    %v3039 = vunpack.c.l.b16 %v2429
    %v3040 = vunpack.c.h.b16 %v2429
    %v3041 = vunpack.c.l.b16 %v2430
    %v3042 = vunpack.c.h.b16 %v2430
    %v3043 = vunpack.c.l.b16 %v2431
    %v3044 = vunpack.c.h.b16 %v2431
    %v3045 = vunpack.c.l.b16 %v2432
    %v3046 = vunpack.c.h.b16 %v2432
    %v3047 = vunpack.c.l.b16 %v2433
    %v3048 = vunpack.c.h.b16 %v2433
    %v3049 = vunpack.c.l.b16 %v2434
    %v3050 = vunpack.c.h.b16 %v2434
    %v3051 = vunpack.c.l.b16 %v2435
    %v3052 = vunpack.c.h.b16 %v2435
    %v3053 = vunpack.c.l.b16 %v2436
    %v3054 = vunpack.c.h.b16 %v2436
    %v3055 = vunpack.c.l.b16 %v2437
    %v3056 = vunpack.c.h.b16 %v2437
    %v3057 = vunpack.c.l.b16 %v2438
    %v3058 = vunpack.c.h.b16 %v2438
    %v3059 = vunpack.c.l.b16 %v2439
    %v3060 = vunpack.c.h.b16 %v2439
    %v3061 = vunpack.c.l.b16 %v2440
    %v3062 = vunpack.c.h.b16 %v2440
    %v3063 = vunpack.c.l.b16 %v2441
    %v3064 = vunpack.c.h.b16 %v2441
    %v3065 = vunpack.c.l.b16 %v2442
    %v3066 = vunpack.c.h.b16 %v2442
    %v3067 = vunpack.c.l.b16 %v2443
    %v3068 = vunpack.c.h.b16 %v2443
    %v3069 = vunpack.c.l.b16 %v2444
    %v3070 = vunpack.c.h.b16 %v2444
    %v3071 = vunpack.c.l.b16 %v2445
    %v3072 = vunpack.c.h.b16 %v2445
    %v3073 = vunpack.c.l.b16 %v2446
    %v3074 = vunpack.c.h.b16 %v2446
    %v3075 = vunpack.c.l.b16 %v2447
    %v3076 = vunpack.c.h.b16 %v2447
    %v3077 = vunpack.c.l.b16 %v2448
    %v3078 = vunpack.c.h.b16 %v2448
    %v3079 = vunpack.c.l.b16 %v2449
    %v3080 = vunpack.c.h.b16 %v2449
    %v3081 = vunpack.c.l.b16 %v2450
    %v3082 = vunpack.c.h.b16 %v2450
    %v3083 = vunpack.c.l.b16 %v2451
    %v3084 = vunpack.c.h.b16 %v2451
    %v3085 = vunpack.c.l.b16 %v2452
    %v3086 = vunpack.c.h.b16 %v2452
    %v3087 = vunpack.c.l.b16 %v2453
    %v3088 = vunpack.c.h.b16 %v2453
    %v3089 = vunpack.c.l.b16 %v2454
    %v3090 = vunpack.c.h.b16 %v2454
    %v3091 = vunpack.c.l.b16 %v2455
    %v3092 = vunpack.c.h.b16 %v2455
    %v3093 = vunpack.c.l.b16 %v2456
    %v3094 = vunpack.c.h.b16 %v2456
    %v3095 = vunpack.c.l.b16 %v2457
    %v3096 = vunpack.c.h.b16 %v2457
    %v3097 = vunpack.c.l.b16 %v2458
    %v3098 = vunpack.c.h.b16 %v2458
    %v3099 = vunpack.c.l.b16 %v2459
    %v3100 = vunpack.c.h.b16 %v2459
    %v3101 = vunpack.c.l.b16 %v2460
    %v3102 = vunpack.c.h.b16 %v2460
    %v3103 = vunpack.c.l.b16 %v2461
    %v3104 = vunpack.c.h.b16 %v2461
    %v3105 = vunpack.c.l.b16 %v2462
    %v3106 = vunpack.c.h.b16 %v2462
    %v3107 = vunpack.c.l.b16 %v2463
    %v3108 = vunpack.c.h.b16 %v2463
    %v3109 = vunpack.c.l.b16 %v2464
    %v3110 = vunpack.c.h.b16 %v2464
    %v3111 = vunpack.c.l.b16 %v2465
    %v3112 = vunpack.c.h.b16 %v2465
    %v3113 = vunpack.c.l.b16 %v2466
    %v3114 = vunpack.c.h.b16 %v2466
    %v3115 = vunpack.c.l.b16 %v2467
    %v3116 = vunpack.c.h.b16 %v2467
    %v3117 = vunpack.c.l.b16 %v2468
    %v3118 = vunpack.c.h.b16 %v2468
    %v3119 = vunpack.c.l.b16 %v2469
    %v3120 = vunpack.c.h.b16 %v2469
    %v3121 = vunpack.c.l.b16 %v2470
    %v3122 = vunpack.c.h.b16 %v2470
    %v3123 = vunpack.c.l.b16 %v2471
    %v3124 = vunpack.c.h.b16 %v2471
    %v3125 = vunpack.c.l.b16 %v2472
    %v3126 = vunpack.c.h.b16 %v2472
    %v3127 = vunpack.c.l.b16 %v2473
    %v3128 = vunpack.c.h.b16 %v2473
    %v3129 = vunpack.c.l.b16 %v2474
    %v3130 = vunpack.c.h.b16 %v2474
    %v3131 = vunpack.c.l.b16 %v2475
    %v3132 = vunpack.c.h.b16 %v2475
    %v3133 = vunpack.c.l.b16 %v2476
    %v3134 = vunpack.c.h.b16 %v2476
    %v3135 = vunpack.c.l.b16 %v2477
    %v3136 = vunpack.c.h.b16 %v2477
    %v3137 = vunpack.c.l.b16 %v2478
    %v3138 = vunpack.c.h.b16 %v2478
    %v3139 = vunpack.c.l.b16 %v2479
    %v3140 = vunpack.c.h.b16 %v2479
    %v3141 = vunpack.c.l.b16 %v2480
    %v3142 = vunpack.c.h.b16 %v2480
    %v3143 = vunpack.c.l.b16 %v2481
    %v3144 = vunpack.c.h.b16 %v2481
    %v3145 = vunpack.c.l.b16 %v2482
    %v3146 = vunpack.c.h.b16 %v2482
    %v3147 = vunpack.c.l.b16 %v2483
    %v3148 = vunpack.c.h.b16 %v2483
    %v3149 = vunpack.c.l.b16 %v2484
    %v3150 = vunpack.c.h.b16 %v2484
    %v3151 = vunpack.c.l.b16 %v2485
    %v3152 = vunpack.c.h.b16 %v2485
    %v3153 = vunpack.c.l.b16 %v2486
    %v3154 = vunpack.c.h.b16 %v2486
    %v3155 = vunpack.c.l.b16 %v2487
    %v3156 = vunpack.c.h.b16 %v2487
    %v3157 = vunpack.c.l.b16 %v2488
    %v3158 = vunpack.c.h.b16 %v2488
    %v3159 = vunpack.c.l.b16 %v2489
    %v3160 = vunpack.c.h.b16 %v2489
    %v3161 = vunpack.c.l.b16 %v2490
    %v3162 = vunpack.c.h.b16 %v2490
    %v3163 = vunpack.c.l.b16 %v2491
    %v3164 = vunpack.c.h.b16 %v2491
    %v3165 = vunpack.c.l.b16 %v2492
    %v3166 = vunpack.c.h.b16 %v2492
    %v3167 = vunpack.c.l.b16 %v2493
    %v3168 = vunpack.c.h.b16 %v2493
    %v3169 = vunpack.c.l.b16 %v2494
    %v3170 = vunpack.c.h.b16 %v2494
    %v3171 = vunpack.c.l.b16 %v2495
    %v3172 = vunpack.c.h.b16 %v2495
    %v3173 = vunpack.c.l.b16 %v2496
    %v3174 = vunpack.c.h.b16 %v2496
    %v3175 = vunpack.c.l.b16 %v2497
    %v3176 = vunpack.c.h.b16 %v2497
    %v3177 = vunpack.c.l.b16 %v2498
    %v3178 = vunpack.c.h.b16 %v2498
    %v3179 = vunpack.c.l.b16 %v2499
    %v3180 = vunpack.c.h.b16 %v2499
    %v3181 = vunpack.c.l.b16 %v2500
    %v3182 = vunpack.c.h.b16 %v2500
    %v3183 = vunpack.c.l.b16 %v2501
    %v3184 = vunpack.c.h.b16 %v2501
    %v3185 = vunpack.c.l.b16 %v2502
    %v3186 = vunpack.c.h.b16 %v2502
    %v3187 = vunpack.c.l.b16 %v2503
    %v3188 = vunpack.c.h.b16 %v2503
    %v3189 = vunpack.c.l.b16 %v2504
    %v3190 = vunpack.c.h.b16 %v2504
    %v3191 = vunpack.c.l.b16 %v2505
    %v3192 = vunpack.c.h.b16 %v2505
    %v3193 = vunpack.c.l.b16 %v2506
    %v3194 = vunpack.c.h.b16 %v2506
    %v3195 = vunpack.c.l.b16 %v2507
    %v3196 = vunpack.c.h.b16 %v2507
    %v3197 = vunpack.c.l.b16 %v2508
    %v3198 = vunpack.c.h.b16 %v2508
    %v3199 = vunpack.c.l.b16 %v2509
    %v3200 = vunpack.c.h.b16 %v2509
    %v3201 = vunpack.c.l.b16 %v2510
    %v3202 = vunpack.c.h.b16 %v2510
    %v3203 = vunpack.c.l.b16 %v2511
    %v3204 = vunpack.c.h.b16 %v2511
    %v3205 = vunpack.c.l.b16 %v2512
    %v3206 = vunpack.c.h.b16 %v2512
    %v3207 = vunpack.c.l.b16 %v2513
    %v3208 = vunpack.c.h.b16 %v2513
    %v3209 = vunpack.c.l.b16 %v2514
    %v3210 = vunpack.c.h.b16 %v2514
    %v3211 = vunpack.c.l.b16 %v2515
    %v3212 = vunpack.c.h.b16 %v2515
    %v3213 = vunpack.c.l.b16 %v2516
    %v3214 = vunpack.c.h.b16 %v2516
    %v3215 = vunpack.c.l.b16 %v2517
    %v3216 = vunpack.c.h.b16 %v2517
    %v3217 = vunpack.c.l.b16 %v2518
    %v3218 = vunpack.c.h.b16 %v2518
    %v3219 = vunpack.c.l.b16 %v2519
    %v3220 = vunpack.c.h.b16 %v2519
    %v3221 = vunpack.c.l.b16 %v2520
    %v3222 = vunpack.c.h.b16 %v2520
    %v3223 = vunpack.c.l.b16 %v2521
    %v3224 = vunpack.c.h.b16 %v2521
    %v3225 = vunpack.c.l.b16 %v2522
    %v3226 = vunpack.c.h.b16 %v2522
    %v3227 = vunpack.c.l.b16 %v2523
    %v3228 = vunpack.c.h.b16 %v2523
    %v3229 = vunpack.c.l.b16 %v2524
    %v3230 = vunpack.c.h.b16 %v2524
    %v3231 = vunpack.c.l.b16 %v2525
    %v3232 = vunpack.c.h.b16 %v2525
    %v3233 = vunpack.c.l.b16 %v2526
    %v3234 = vunpack.c.h.b16 %v2526
    %v3235 = vunpack.c.l.b16 %v2527
    %v3236 = vunpack.c.h.b16 %v2527
    %v3237 = vunpack.c.l.b16 %v2528
    %v3238 = vunpack.c.h.b16 %v2528
    %v3239 = vunpack.c.l.b16 %v2529
    %v3240 = vunpack.c.h.b16 %v2529
    %v3241 = vunpack.c.l.b16 %v2530
    %v3242 = vunpack.c.h.b16 %v2530
    %v3243 = vunpack.c.l.b16 %v2531
    %v3244 = vunpack.c.h.b16 %v2531
    %v3245 = vunpack.c.l.b16 %v2532
    %v3246 = vunpack.c.h.b16 %v2532
    %v3247 = vunpack.c.l.b16 %v2533
    %v3248 = vunpack.c.h.b16 %v2533
    %v3249 = vunpack.c.l.b16 %v2534
    %v3250 = vunpack.c.h.b16 %v2534
    %v3251 = vunpack.c.l.b16 %v2535
    %v3252 = vunpack.c.h.b16 %v2535
    %v3253 = vunpack.c.l.b16 %v2536
    %v3254 = vunpack.c.h.b16 %v2536
    %v3255 = vunpack.c.l.b16 %v2537
    %v3256 = vunpack.c.h.b16 %v2537
    %v3257 = vunpack.c.l.b16 %v2538
    %v3258 = vunpack.c.h.b16 %v2538
    %v3259 = vunpack.c.l.b16 %v2539
    %v3260 = vunpack.c.h.b16 %v2539
    %v3261 = vunpack.c.l.b16 %v2540
    %v3262 = vunpack.c.h.b16 %v2540
    %v3263 = vunpack.c.l.b16 %v2541
    %v3264 = vunpack.c.h.b16 %v2541
    %v3265 = vunpack.c.l.b16 %v2542
    %v3266 = vunpack.c.h.b16 %v2542
    %v3267 = vunpack.c.l.b16 %v2543
    %v3268 = vunpack.c.h.b16 %v2543
    %v3269 = vunpack.c.l.b16 %v2544
    %v3270 = vunpack.c.h.b16 %v2544
    %v3271 = vunpack.c.l.b16 %v2545
    %v3272 = vunpack.c.h.b16 %v2545
    %v3273 = vunpack.c.l.b16 %v2546
    %v3274 = vunpack.c.h.b16 %v2546
    %v3275 = vunpack.c.l.b16 %v2547
    %v3276 = vunpack.c.h.b16 %v2547
    %v3277 = vunpack.c.l.b16 %v2548
    %v3278 = vunpack.c.h.b16 %v2548
    %v3279 = vunpack.c.l.b16 %v2549
    %v3280 = vunpack.c.h.b16 %v2549
    %v3281 = vunpack.c.l.b16 %v2550
    %v3282 = vunpack.c.h.b16 %v2550
    %v3283 = vunpack.c.l.b16 %v2551
    %v3284 = vunpack.c.h.b16 %v2551
    %v3285 = vunpack.c.l.b16 %v2552
    %v3286 = vunpack.c.h.b16 %v2552
    %v3287 = vunpack.c.l.b16 %v2553
    %v3288 = vunpack.c.h.b16 %v2553
    %v3289 = vunpack.c.l.b16 %v2554
    %v3290 = vunpack.c.h.b16 %v2554
    %v3291 = vunpack.c.l.b16 %v2555
    %v3292 = vunpack.c.h.b16 %v2555
    %v3293 = vunpack.c.l.b16 %v2556
    %v3294 = vunpack.c.h.b16 %v2556
    %v3295 = vunpack.c.l.b16 %v2557
    %v3296 = vunpack.c.h.b16 %v2557
    %v3297 = vunpack.c.l.b16 %v2558
    %v3298 = vunpack.c.h.b16 %v2558
    %v3299 = vunpack.c.l.b16 %v2559
    %v3300 = vunpack.c.h.b16 %v2559
    %v3301 = vunpack.c.l.b16 %v2560
    %v3302 = vunpack.c.h.b16 %v2560
    %v3303 = vunpack.c.l.b16 %v2561
    %v3304 = vunpack.c.h.b16 %v2561
    %v3305 = vunpack.c.l.b16 %v2562
    %v3306 = vunpack.c.h.b16 %v2562
    %v3307 = vunpack.c.l.b16 %v2563
    %v3308 = vunpack.c.h.b16 %v2563
    %v3309 = vunpack.c.l.b16 %v2564
    %v3310 = vunpack.c.h.b16 %v2564
    %v3311 = vunpack.c.l.b16 %v2565
    %v3312 = vunpack.c.h.b16 %v2565
    %v3313 = vunpack.c.l.b16 %v2566
    %v3314 = vunpack.c.h.b16 %v2566
    %v3315 = vunpack.c.l.b16 %v2567
    %v3316 = vunpack.c.h.b16 %v2567
    %v3317 = vunpack.c.l.b16 %v2568
    %v3318 = vunpack.c.h.b16 %v2568
    %v3319 = vunpack.c.l.b16 %v2569
    %v3320 = vunpack.c.h.b16 %v2569
    %v3321 = vunpack.c.l.b16 %v2570
    %v3322 = vunpack.c.h.b16 %v2570
    %v3323 = vunpack.c.l.b16 %v2571
    %v3324 = vunpack.c.h.b16 %v2571
    %v3325 = vunpack.c.l.b16 %v2572
    %v3326 = vunpack.c.h.b16 %v2572
    %v3327 = vunpack.c.l.b16 %v2573
    %v3328 = vunpack.c.h.b16 %v2573
    %v3329 = vunpack.c.l.b16 %v2574
    %v3330 = vunpack.c.h.b16 %v2574
    %v3331 = vunpack.c.l.b16 %v2575
    %v3332 = vunpack.c.h.b16 %v2575
    %v3333 = vunpack.c.l.b16 %v2576
    %v3334 = vunpack.c.h.b16 %v2576
    %v3335 = vunpack.c.l.b16 %v2577
    %v3336 = vunpack.c.h.b16 %v2577
    %v3337 = vunpack.c.l.b16 %v2578
    %v3338 = vunpack.c.h.b16 %v2578
    %v3339 = vunpack.c.l.b16 %v2579
    %v3340 = vunpack.c.h.b16 %v2579
    %v3341 = vunpack.c.l.b16 %v2580
    %v3342 = vunpack.c.h.b16 %v2580
    %v3343 = vunpack.c.l.b16 %v2581
    %v3344 = vunpack.c.h.b16 %v2581
    %v3345 = vunpack.c.l.b16 %v2582
    %v3346 = vunpack.c.h.b16 %v2582
    %v3347 = vunpack.c.l.b16 %v2583
    %v3348 = vunpack.c.h.b16 %v2583
    %v3349 = vunpack.c.l.b16 %v2584
    %v3350 = vunpack.c.h.b16 %v2584
    %v3351 = vunpack.c.l.b16 %v2585
    %v3352 = vunpack.c.h.b16 %v2585
    %v3353 = vunpack.c.l.b16 %v2586
    %v3354 = vunpack.c.h.b16 %v2586
    %v3355 = vunpack.c.l.b16 %v2587
    %v3356 = vunpack.c.h.b16 %v2587
    %v3357 = vunpack.c.l.b16 %v2588
    %v3358 = vunpack.c.h.b16 %v2588
    %v3359 = vunpack.c.l.b16 %v2589
    %v3360 = vunpack.c.h.b16 %v2589
    %v3361 = vunpack.c.l.b16 %v2590
    %v3362 = vunpack.c.h.b16 %v2590
    %v3363 = vunpack.c.l.b16 %v2591
    %v3364 = vunpack.c.h.b16 %v2591
    %v3365 = vunpack.c.l.b16 %v2592
    %v3366 = vunpack.c.h.b16 %v2592
    %v3367 = vunpack.c.l.b16 %v2593
    %v3368 = vunpack.c.h.b16 %v2593
    %v3369 = vunpack.c.l.b16 %v2594
    %v3370 = vunpack.c.h.b16 %v2594
    %v3371 = vunpack.c.l.b16 %v2595
    %v3372 = vunpack.c.h.b16 %v2595
    %v3373 = vunpack.c.l.b16 %v2596
    %v3374 = vunpack.c.h.b16 %v2596
    %v3375 = vunpack.c.l.b16 %v2597
    %v3376 = vunpack.c.h.b16 %v2597
    %v3377 = vunpack.c.l.b16 %v2598
    %v3378 = vunpack.c.h.b16 %v2598
    %v3379 = vunpack.c.l.b16 %v2599
    %v3380 = vunpack.c.h.b16 %v2599
    %v3381 = vunpack.c.l.b16 %v2600
    %v3382 = vunpack.c.h.b16 %v2600
    %v3383 = vunpack.c.l.b16 %v2601
    %v3384 = vunpack.c.h.b16 %v2601
    %v3385 = vunpack.c.l.b16 %v2602
    %v3386 = vunpack.c.h.b16 %v2602
    %v3387 = vunpack.c.l.b16 %v2603
    %v3388 = vunpack.c.h.b16 %v2603
    %v3389 = vunpack.c.l.b16 %v2604
    %v3390 = vunpack.c.h.b16 %v2604
    %v3391 = vunpack.c.l.b16 %v2605
    %v3392 = vunpack.c.h.b16 %v2605
    %v3393 = vunpack.c.l.b16 %v2606
    %v3394 = vunpack.c.h.b16 %v2606
    %v3395 = vunpack.c.l.b16 %v2607
    %v3396 = vunpack.c.h.b16 %v2607
    %v3397 = vunpack.c.l.b16 %v2608
    %v3398 = vunpack.c.h.b16 %v2608
    %v3399 = vpack.c.b16 %v2891, %v2887
    %v3400 = vpack.c.b16 %v2892, %v2888
    %v3401 = vpack.c.b16 %v2893, %v2889
    %v3402 = vpack.c.b16 %v2894, %v2890
    %v3403 = vpack.c.b16 %v2899, %v2895
    %v3404 = vpack.c.b16 %v2900, %v2896
    %v3405 = vpack.c.b16 %v2901, %v2897
    %v3406 = vpack.c.b16 %v2902, %v2898
    %v3407 = vpack.c.b16 %v2907, %v2903
    %v3408 = vpack.c.b16 %v2908, %v2904
    %v3409 = vpack.c.b16 %v2909, %v2905
    %v3410 = vpack.c.b16 %v2910, %v2906
    %v3411 = vpack.c.b16 %v2915, %v2911
    %v3412 = vpack.c.b16 %v2916, %v2912
    %v3413 = vpack.c.b16 %v2917, %v2913
    %v3414 = vpack.c.b16 %v2918, %v2914
    %v3415 = vpack.c.b16 %v2923, %v2919
    %v3416 = vpack.c.b16 %v2924, %v2920
    %v3417 = vpack.c.b16 %v2925, %v2921
    %v3418 = vpack.c.b16 %v2926, %v2922
    %v3419 = vpack.c.b16 %v2931, %v2927
    %v3420 = vpack.c.b16 %v2932, %v2928
    %v3421 = vpack.c.b16 %v2933, %v2929
    %v3422 = vpack.c.b16 %v2934, %v2930
    %v3423 = vpack.c.b16 %v2939, %v2935
    %v3424 = vpack.c.b16 %v2940, %v2936
    %v3425 = vpack.c.b16 %v2941, %v2937
    %v3426 = vpack.c.b16 %v2942, %v2938
    %v3427 = vpack.c.b16 %v2947, %v2943
    %v3428 = vpack.c.b16 %v2948, %v2944
    %v3429 = vpack.c.b16 %v2949, %v2945
    %v3430 = vpack.c.b16 %v2950, %v2946
    %v3431 = vpack.c.b16 %v2955, %v2951
    %v3432 = vpack.c.b16 %v2956, %v2952
    %v3433 = vpack.c.b16 %v2957, %v2953
    %v3434 = vpack.c.b16 %v2958, %v2954
    %v3435 = vpack.c.b16 %v2963, %v2959
    %v3436 = vpack.c.b16 %v2964, %v2960
    %v3437 = vpack.c.b16 %v2965, %v2961
    %v3438 = vpack.c.b16 %v2966, %v2962
    %v3439 = vpack.c.b16 %v2971, %v2967
    %v3440 = vpack.c.b16 %v2972, %v2968
    %v3441 = vpack.c.b16 %v2973, %v2969
    %v3442 = vpack.c.b16 %v2974, %v2970
    %v3443 = vpack.c.b16 %v2979, %v2975
    %v3444 = vpack.c.b16 %v2980, %v2976
    %v3445 = vpack.c.b16 %v2981, %v2977
    %v3446 = vpack.c.b16 %v2982, %v2978
    %v3447 = vpack.c.b16 %v2987, %v2983
    %v3448 = vpack.c.b16 %v2988, %v2984
    %v3449 = vpack.c.b16 %v2989, %v2985
    %v3450 = vpack.c.b16 %v2990, %v2986
    %v3451 = vpack.c.b16 %v2995, %v2991
    %v3452 = vpack.c.b16 %v2996, %v2992
    %v3453 = vpack.c.b16 %v2997, %v2993
    %v3454 = vpack.c.b16 %v2998, %v2994
    %v3455 = vpack.c.b16 %v3003, %v2999
    %v3456 = vpack.c.b16 %v3004, %v3000
    %v3457 = vpack.c.b16 %v3005, %v3001
    %v3458 = vpack.c.b16 %v3006, %v3002
    %v3459 = vpack.c.b16 %v3011, %v3007
    %v3460 = vpack.c.b16 %v3012, %v3008
    %v3461 = vpack.c.b16 %v3013, %v3009
    %v3462 = vpack.c.b16 %v3014, %v3010
    %v3463 = vpack.c.b16 %v3019, %v3015
    %v3464 = vpack.c.b16 %v3020, %v3016
    %v3465 = vpack.c.b16 %v3021, %v3017
    %v3466 = vpack.c.b16 %v3022, %v3018
    %v3467 = vpack.c.b16 %v3027, %v3023
    %v3468 = vpack.c.b16 %v3028, %v3024
    %v3469 = vpack.c.b16 %v3029, %v3025
    %v3470 = vpack.c.b16 %v3030, %v3026
    %v3471 = vpack.c.b16 %v3035, %v3031
    %v3472 = vpack.c.b16 %v3036, %v3032
    %v3473 = vpack.c.b16 %v3037, %v3033
    %v3474 = vpack.c.b16 %v3038, %v3034
    %v3475 = vpack.c.b16 %v3043, %v3039
    %v3476 = vpack.c.b16 %v3044, %v3040
    %v3477 = vpack.c.b16 %v3045, %v3041
    %v3478 = vpack.c.b16 %v3046, %v3042
    %v3479 = vpack.c.b16 %v3051, %v3047
    %v3480 = vpack.c.b16 %v3052, %v3048
    %v3481 = vpack.c.b16 %v3053, %v3049
    %v3482 = vpack.c.b16 %v3054, %v3050
    %v3483 = vpack.c.b16 %v3059, %v3055
    %v3484 = vpack.c.b16 %v3060, %v3056
    %v3485 = vpack.c.b16 %v3061, %v3057
    %v3486 = vpack.c.b16 %v3062, %v3058
    %v3487 = vpack.c.b16 %v3067, %v3063
    %v3488 = vpack.c.b16 %v3068, %v3064
    %v3489 = vpack.c.b16 %v3069, %v3065
    %v3490 = vpack.c.b16 %v3070, %v3066
    %v3491 = vpack.c.b16 %v3075, %v3071
    %v3492 = vpack.c.b16 %v3076, %v3072
    %v3493 = vpack.c.b16 %v3077, %v3073
    %v3494 = vpack.c.b16 %v3078, %v3074
    %v3495 = vpack.c.b16 %v3083, %v3079
    %v3496 = vpack.c.b16 %v3084, %v3080
    %v3497 = vpack.c.b16 %v3085, %v3081
    %v3498 = vpack.c.b16 %v3086, %v3082
    %v3499 = vpack.c.b16 %v3091, %v3087
    %v3500 = vpack.c.b16 %v3092, %v3088
    %v3501 = vpack.c.b16 %v3093, %v3089
    %v3502 = vpack.c.b16 %v3094, %v3090
    %v3503 = vpack.c.b16 %v3099, %v3095
    %v3504 = vpack.c.b16 %v3100, %v3096
    %v3505 = vpack.c.b16 %v3101, %v3097
    %v3506 = vpack.c.b16 %v3102, %v3098
    %v3507 = vpack.c.b16 %v3107, %v3103
    %v3508 = vpack.c.b16 %v3108, %v3104
    %v3509 = vpack.c.b16 %v3109, %v3105
    %v3510 = vpack.c.b16 %v3110, %v3106
    %v3511 = vpack.c.b16 %v3115, %v3111
    %v3512 = vpack.c.b16 %v3116, %v3112
    %v3513 = vpack.c.b16 %v3117, %v3113
    %v3514 = vpack.c.b16 %v3118, %v3114
    %v3515 = vpack.c.b16 %v3123, %v3119
    %v3516 = vpack.c.b16 %v3124, %v3120
    %v3517 = vpack.c.b16 %v3125, %v3121
    %v3518 = vpack.c.b16 %v3126, %v3122
    %v3519 = vpack.c.b16 %v3131, %v3127
    %v3520 = vpack.c.b16 %v3132, %v3128
    %v3521 = vpack.c.b16 %v3133, %v3129
    %v3522 = vpack.c.b16 %v3134, %v3130
    %v3523 = vpack.c.b16 %v3139, %v3135
    %v3524 = vpack.c.b16 %v3140, %v3136
    %v3525 = vpack.c.b16 %v3141, %v3137
    %v3526 = vpack.c.b16 %v3142, %v3138
    %v3527 = vpack.c.b16 %v3147, %v3143
    %v3528 = vpack.c.b16 %v3148, %v3144
    %v3529 = vpack.c.b16 %v3149, %v3145
    %v3530 = vpack.c.b16 %v3150, %v3146
    %v3531 = vpack.c.b16 %v3155, %v3151
    %v3532 = vpack.c.b16 %v3156, %v3152
    %v3533 = vpack.c.b16 %v3157, %v3153
    %v3534 = vpack.c.b16 %v3158, %v3154
    %v3535 = vpack.c.b16 %v3163, %v3159
    %v3536 = vpack.c.b16 %v3164, %v3160
    %v3537 = vpack.c.b16 %v3165, %v3161
    %v3538 = vpack.c.b16 %v3166, %v3162
    %v3539 = vpack.c.b16 %v3171, %v3167
    %v3540 = vpack.c.b16 %v3172, %v3168
    %v3541 = vpack.c.b16 %v3173, %v3169
    %v3542 = vpack.c.b16 %v3174, %v3170
    %v3543 = vpack.c.b16 %v3179, %v3175
    %v3544 = vpack.c.b16 %v3180, %v3176
    %v3545 = vpack.c.b16 %v3181, %v3177
    %v3546 = vpack.c.b16 %v3182, %v3178
    %v3547 = vpack.c.b16 %v3187, %v3183
    %v3548 = vpack.c.b16 %v3188, %v3184
    %v3549 = vpack.c.b16 %v3189, %v3185
    %v3550 = vpack.c.b16 %v3190, %v3186
    %v3551 = vpack.c.b16 %v3195, %v3191
    %v3552 = vpack.c.b16 %v3196, %v3192
    %v3553 = vpack.c.b16 %v3197, %v3193
    %v3554 = vpack.c.b16 %v3198, %v3194
    %v3555 = vpack.c.b16 %v3203, %v3199
    %v3556 = vpack.c.b16 %v3204, %v3200
    %v3557 = vpack.c.b16 %v3205, %v3201
    %v3558 = vpack.c.b16 %v3206, %v3202
    %v3559 = vpack.c.b16 %v3211, %v3207
    %v3560 = vpack.c.b16 %v3212, %v3208
    %v3561 = vpack.c.b16 %v3213, %v3209
    %v3562 = vpack.c.b16 %v3214, %v3210
    %v3563 = vpack.c.b16 %v3219, %v3215
    %v3564 = vpack.c.b16 %v3220, %v3216
    %v3565 = vpack.c.b16 %v3221, %v3217
    %v3566 = vpack.c.b16 %v3222, %v3218
    %v3567 = vpack.c.b16 %v3227, %v3223
    %v3568 = vpack.c.b16 %v3228, %v3224
    %v3569 = vpack.c.b16 %v3229, %v3225
    %v3570 = vpack.c.b16 %v3230, %v3226
    %v3571 = vpack.c.b16 %v3235, %v3231
    %v3572 = vpack.c.b16 %v3236, %v3232
    %v3573 = vpack.c.b16 %v3237, %v3233
    %v3574 = vpack.c.b16 %v3238, %v3234
    %v3575 = vpack.c.b16 %v3243, %v3239
    %v3576 = vpack.c.b16 %v3244, %v3240
    %v3577 = vpack.c.b16 %v3245, %v3241
    %v3578 = vpack.c.b16 %v3246, %v3242
    %v3579 = vpack.c.b16 %v3251, %v3247
    %v3580 = vpack.c.b16 %v3252, %v3248
    %v3581 = vpack.c.b16 %v3253, %v3249
    %v3582 = vpack.c.b16 %v3254, %v3250
    %v3583 = vpack.c.b16 %v3259, %v3255
    %v3584 = vpack.c.b16 %v3260, %v3256
    %v3585 = vpack.c.b16 %v3261, %v3257
    %v3586 = vpack.c.b16 %v3262, %v3258
    %v3587 = vpack.c.b16 %v3267, %v3263
    %v3588 = vpack.c.b16 %v3268, %v3264
    %v3589 = vpack.c.b16 %v3269, %v3265
    %v3590 = vpack.c.b16 %v3270, %v3266
    %v3591 = vpack.c.b16 %v3275, %v3271
    %v3592 = vpack.c.b16 %v3276, %v3272
    %v3593 = vpack.c.b16 %v3277, %v3273
    %v3594 = vpack.c.b16 %v3278, %v3274
    %v3595 = vpack.c.b16 %v3283, %v3279
    %v3596 = vpack.c.b16 %v3284, %v3280
    %v3597 = vpack.c.b16 %v3285, %v3281
    %v3598 = vpack.c.b16 %v3286, %v3282
    %v3599 = vpack.c.b16 %v3291, %v3287
    %v3600 = vpack.c.b16 %v3292, %v3288
    %v3601 = vpack.c.b16 %v3293, %v3289
    %v3602 = vpack.c.b16 %v3294, %v3290
    %v3603 = vpack.c.b16 %v3299, %v3295
    %v3604 = vpack.c.b16 %v3300, %v3296
    %v3605 = vpack.c.b16 %v3301, %v3297
    %v3606 = vpack.c.b16 %v3302, %v3298
    %v3607 = vpack.c.b16 %v3307, %v3303
    %v3608 = vpack.c.b16 %v3308, %v3304
    %v3609 = vpack.c.b16 %v3309, %v3305
    %v3610 = vpack.c.b16 %v3310, %v3306
    %v3611 = vpack.c.b16 %v3315, %v3311
    %v3612 = vpack.c.b16 %v3316, %v3312
    %v3613 = vpack.c.b16 %v3317, %v3313
    %v3614 = vpack.c.b16 %v3318, %v3314
    %v3615 = vpack.c.b16 %v3323, %v3319
    %v3616 = vpack.c.b16 %v3324, %v3320
    %v3617 = vpack.c.b16 %v3325, %v3321
    %v3618 = vpack.c.b16 %v3326, %v3322
    %v3619 = vpack.c.b16 %v3331, %v3327
    %v3620 = vpack.c.b16 %v3332, %v3328
    %v3621 = vpack.c.b16 %v3333, %v3329
    %v3622 = vpack.c.b16 %v3334, %v3330
    %v3623 = vpack.c.b16 %v3339, %v3335
    %v3624 = vpack.c.b16 %v3340, %v3336
    %v3625 = vpack.c.b16 %v3341, %v3337
    %v3626 = vpack.c.b16 %v3342, %v3338
    %v3627 = vpack.c.b16 %v3347, %v3343
    %v3628 = vpack.c.b16 %v3348, %v3344
    %v3629 = vpack.c.b16 %v3349, %v3345
    %v3630 = vpack.c.b16 %v3350, %v3346
    %v3631 = vpack.c.b16 %v3355, %v3351
    %v3632 = vpack.c.b16 %v3356, %v3352
    %v3633 = vpack.c.b16 %v3357, %v3353
    %v3634 = vpack.c.b16 %v3358, %v3354
    %v3635 = vpack.c.b16 %v3363, %v3359
    %v3636 = vpack.c.b16 %v3364, %v3360
    %v3637 = vpack.c.b16 %v3365, %v3361
    %v3638 = vpack.c.b16 %v3366, %v3362
    %v3639 = vpack.c.b16 %v3371, %v3367
    %v3640 = vpack.c.b16 %v3372, %v3368
    %v3641 = vpack.c.b16 %v3373, %v3369
    %v3642 = vpack.c.b16 %v3374, %v3370
    %v3643 = vpack.c.b16 %v3379, %v3375
    %v3644 = vpack.c.b16 %v3380, %v3376
    %v3645 = vpack.c.b16 %v3381, %v3377
    %v3646 = vpack.c.b16 %v3382, %v3378
    %v3647 = vpack.c.b16 %v3387, %v3383
    %v3648 = vpack.c.b16 %v3388, %v3384
    %v3649 = vpack.c.b16 %v3389, %v3385
    %v3650 = vpack.c.b16 %v3390, %v3386
    %v3651 = vpack.c.b16 %v3395, %v3391
    %v3652 = vpack.c.b16 %v3396, %v3392
    %v3653 = vpack.c.b16 %v3397, %v3393
    %v3654 = vpack.c.b16 %v3398, %v3394
    %3911 = vmatprep.subr.bf16.mxu0 %v3400
    %3912 = vmatpush1.bf16.msra.mxu0 %v3399
    %3913 = vmatprep.subr.bf16.mxu0 %v3404
    %3914 = vmatpush1.bf16.msra.mxu0 %v3403
    %3915 = vmatprep.subr.bf16.mxu0 %v3408
    %3916 = vmatpush1.bf16.msra.mxu0 %v3407
    %3917 = vmatprep.subr.bf16.mxu0 %v3412
    %3918 = vmatpush1.bf16.msra.mxu0 %v3411
    %3919 = vmatprep.subr.bf16.mxu0 %v3416
    %3920 = vmatpush1.bf16.msra.mxu0 %v3415
    %3921 = vmatprep.subr.bf16.mxu0 %v3420
    %3922 = vmatpush1.bf16.msra.mxu0 %v3419
    %3923 = vmatprep.subr.bf16.mxu0 %v3424
    %3924 = vmatpush1.bf16.msra.mxu0 %v3423
    %3925 = vmatprep.subr.bf16.mxu0 %v3428
    %3926 = vmatpush1.bf16.msra.mxu0 %v3427
    %3927 = vmatprep.subr.bf16.mxu0 %v3432
    %3928 = vmatpush1.bf16.msra.mxu0 %v3431
    %3929 = vmatprep.subr.bf16.mxu0 %v3436
    %3930 = vmatpush1.bf16.msra.mxu0 %v3435
    %3931 = vmatprep.subr.bf16.mxu0 %v3440
    %3932 = vmatpush1.bf16.msra.mxu0 %v3439
    %3933 = vmatprep.subr.bf16.mxu0 %v3444
    %3934 = vmatpush1.bf16.msra.mxu0 %v3443
    %3935 = vmatprep.subr.bf16.mxu0 %v3448
    %3936 = vmatpush1.bf16.msra.mxu0 %v3447
    %3937 = vmatprep.subr.bf16.mxu0 %v3452
    %3938 = vmatpush1.bf16.msra.mxu0 %v3451
    %3939 = vmatprep.subr.bf16.mxu0 %v3456
    %3940 = vmatpush1.bf16.msra.mxu0 %v3455
    %3941 = vmatprep.subr.bf16.mxu0 %v3460
    %3942 = vmatpush1.bf16.msra.mxu0 %v3459
    %3943 = vmatprep.mubr.bf16.mxu0 %v2330
    %3944 = vmatmul.mubr.bf16.gmra.mrb[0].mxu0 %v2329
    %v3945 = vpop.f32.mrb[0].mxu0
    %v3946 = vadd.f32 %v2614, %v3945
    %v3947 = vpop.f32.mrb[0].mxu0
    %v3948 = vadd.f32 %v2618, %v3947
    %v3949 = vpop.f32.mrb[0].mxu0
    %v3950 = vadd.f32 %v2614, %v3949
    %v3951 = vpop.f32.mrb[0].mxu0
    %v3952 = vadd.f32 %v2618, %v3951
    %3953 = vmatprep.mubr.bf16.mxu0 %v2338
    %3954 = vmatmul.mubr.bf16.gmra.mrb[0].mxu0 %v2337
    %v3955 = vpop.f32.mrb[0].mxu0
    %v3956 = vadd.f32 %v2614, %v3955
    %v3957 = vpop.f32.mrb[0].mxu0
    %v3958 = vadd.f32 %v2618, %v3957
    %v3959 = vpop.f32.mrb[0].mxu0
    %v3960 = vadd.f32 %v2614, %v3959
    %v3961 = vpop.f32.mrb[0].mxu0
    %v3962 = vadd.f32 %v2618, %v3961
    %3963 = vmatprep.mubr.bf16.mxu0 %v2346
    %3964 = vmatmul.mubr.bf16.gmra.mrb[0].mxu0 %v2345
    %v3965 = vpop.f32.mrb[0].mxu0
    %v3966 = vadd.f32 %v2614, %v3965
    %v3967 = vpop.f32.mrb[0].mxu0
    %v3968 = vadd.f32 %v2618, %v3967
    %v3969 = vpop.f32.mrb[0].mxu0
    %v3970 = vadd.f32 %v2614, %v3969
    %v3971 = vpop.f32.mrb[0].mxu0
    %v3972 = vadd.f32 %v2618, %v3971
    %3973 = vdwg.mxu0
    %3974 = vmatprep.subr.bf16.mxu0 %v3464
    %3975 = vmatpush1.bf16.msra.mxu0 %v3463
    %3976 = vmatprep.subr.bf16.mxu0 %v3468
    %3977 = vmatpush1.bf16.msra.mxu0 %v3467
    %3978 = vmatprep.subr.bf16.mxu0 %v3472
    %3979 = vmatpush1.bf16.msra.mxu0 %v3471
    %3980 = vmatprep.subr.bf16.mxu0 %v3476
    %3981 = vmatpush1.bf16.msra.mxu0 %v3475
    %3982 = vmatprep.subr.bf16.mxu0 %v3480
    %3983 = vmatpush1.bf16.msra.mxu0 %v3479
    %3984 = vmatprep.subr.bf16.mxu0 %v3484
    %3985 = vmatpush1.bf16.msra.mxu0 %v3483
    %3986 = vmatprep.subr.bf16.mxu0 %v3488
    %3987 = vmatpush1.bf16.msra.mxu0 %v3487
    %3988 = vmatprep.subr.bf16.mxu0 %v3492
    %3989 = vmatpush1.bf16.msra.mxu0 %v3491
    %3990 = vmatprep.subr.bf16.mxu0 %v3496
    %3991 = vmatpush1.bf16.msra.mxu0 %v3495
    %3992 = vmatprep.subr.bf16.mxu0 %v3500
    %3993 = vmatpush1.bf16.msra.mxu0 %v3499
    %3994 = vmatprep.subr.bf16.mxu0 %v3504
    %3995 = vmatpush1.bf16.msra.mxu0 %v3503
    %3996 = vmatprep.subr.bf16.mxu0 %v3508
    %3997 = vmatpush1.bf16.msra.mxu0 %v3507
    %3998 = vmatprep.subr.bf16.mxu0 %v3512
    %3999 = vmatpush1.bf16.msra.mxu0 %v3511
    %4000 = vmatprep.subr.bf16.mxu0 %v3516
    %4001 = vmatpush1.bf16.msra.mxu0 %v3515
    %4002 = vmatprep.subr.bf16.mxu0 %v3520
    %4003 = vmatpush1.bf16.msra.mxu0 %v3519
    %4004 = vmatprep.subr.bf16.mxu0 %v3524
    %4005 = vmatpush1.bf16.msra.mxu0 %v3523
    %4006 = vmatprep.mubr.bf16.mxu0 %v2332
    %4007 = vmatmul.mubr.bf16.gmra.mrb[0].mxu0 %v2331
    %v4008 = vpop.f32.mrb[0].mxu0
    %v4009 = vadd.f32 %v3946, %v4008
    %v4010 = vpop.f32.mrb[0].mxu0
    %v4011 = vadd.f32 %v3948, %v4010
    %v4012 = vpop.f32.mrb[0].mxu0
    %v4013 = vadd.f32 %v3950, %v4012
    %v4014 = vpop.f32.mrb[0].mxu0
    %v4015 = vadd.f32 %v3952, %v4014
    %4016 = vmatprep.mubr.bf16.mxu0 %v2340
    %4017 = vmatmul.mubr.bf16.gmra.mrb[0].mxu0 %v2339
    %v4018 = vpop.f32.mrb[0].mxu0
    %v4019 = vadd.f32 %v3956, %v4018
    %v4020 = vpop.f32.mrb[0].mxu0
    %v4021 = vadd.f32 %v3958, %v4020
    %v4022 = vpop.f32.mrb[0].mxu0
    %v4023 = vadd.f32 %v3960, %v4022
    %v4024 = vpop.f32.mrb[0].mxu0
    %v4025 = vadd.f32 %v3962, %v4024
    %4026 = vmatprep.mubr.bf16.mxu0 %v2348
    %4027 = vmatmul.mubr.bf16.gmra.mrb[0].mxu0 %v2347
    %v4028 = vpop.f32.mrb[0].mxu0
    %v4029 = vadd.f32 %v3966, %v4028
    %v4030 = vpop.f32.mrb[0].mxu0
    %v4031 = vadd.f32 %v3968, %v4030
    %v4032 = vpop.f32.mrb[0].mxu0
    %v4033 = vadd.f32 %v3970, %v4032
    %v4034 = vpop.f32.mrb[0].mxu0
    %v4035 = vadd.f32 %v3972, %v4034
    %4036 = vdwg.mxu0
    %4037 = vmatprep.subr.bf16.mxu0 %v3528
    %4038 = vmatpush1.bf16.msra.mxu0 %v3527
    %4039 = vmatprep.subr.bf16.mxu0 %v3532
    %4040 = vmatpush1.bf16.msra.mxu0 %v3531
    %4041 = vmatprep.subr.bf16.mxu0 %v3536
    %4042 = vmatpush1.bf16.msra.mxu0 %v3535
    %4043 = vmatprep.subr.bf16.mxu0 %v3540
    %4044 = vmatpush1.bf16.msra.mxu0 %v3539
    %4045 = vmatprep.subr.bf16.mxu0 %v3544
    %4046 = vmatpush1.bf16.msra.mxu0 %v3543
    %4047 = vmatprep.subr.bf16.mxu0 %v3548
    %4048 = vmatpush1.bf16.msra.mxu0 %v3547
    %4049 = vmatprep.subr.bf16.mxu0 %v3552
    %4050 = vmatpush1.bf16.msra.mxu0 %v3551
    %4051 = vmatprep.subr.bf16.mxu0 %v3556
    %4052 = vmatpush1.bf16.msra.mxu0 %v3555
    %4053 = vmatprep.subr.bf16.mxu0 %v3560
    %4054 = vmatpush1.bf16.msra.mxu0 %v3559
    %4055 = vmatprep.subr.bf16.mxu0 %v3564
    %4056 = vmatpush1.bf16.msra.mxu0 %v3563
    %4057 = vmatprep.subr.bf16.mxu0 %v3568
    %4058 = vmatpush1.bf16.msra.mxu0 %v3567
    %4059 = vmatprep.subr.bf16.mxu0 %v3572
    %4060 = vmatpush1.bf16.msra.mxu0 %v3571
    %4061 = vmatprep.subr.bf16.mxu0 %v3576
    %4062 = vmatpush1.bf16.msra.mxu0 %v3575
    %4063 = vmatprep.subr.bf16.mxu0 %v3580
    %4064 = vmatpush1.bf16.msra.mxu0 %v3579
    %4065 = vmatprep.subr.bf16.mxu0 %v3584
    %4066 = vmatpush1.bf16.msra.mxu0 %v3583
    %4067 = vmatprep.subr.bf16.mxu0 %v3588
    %4068 = vmatpush1.bf16.msra.mxu0 %v3587
    %4069 = vmatprep.mubr.bf16.mxu0 %v2334
    %4070 = vmatmul.mubr.bf16.gmra.mrb[0].mxu0 %v2333
    %v4071 = vpop.f32.mrb[0].mxu0
    %v4072 = vadd.f32 %v4009, %v4071
    %v4073 = vpop.f32.mrb[0].mxu0
    %v4074 = vadd.f32 %v4011, %v4073
    %v4075 = vpop.f32.mrb[0].mxu0
    %v4076 = vadd.f32 %v4013, %v4075
    %v4077 = vpop.f32.mrb[0].mxu0
    %v4078 = vadd.f32 %v4015, %v4077
    %4079 = vmatprep.mubr.bf16.mxu0 %v2342
    %4080 = vmatmul.mubr.bf16.gmra.mrb[0].mxu0 %v2341
    %v4081 = vpop.f32.mrb[0].mxu0
    %v4082 = vadd.f32 %v4019, %v4081
    %v4083 = vpop.f32.mrb[0].mxu0
    %v4084 = vadd.f32 %v4021, %v4083
    %v4085 = vpop.f32.mrb[0].mxu0
    %v4086 = vadd.f32 %v4023, %v4085
    %v4087 = vpop.f32.mrb[0].mxu0
    %v4088 = vadd.f32 %v4025, %v4087
    %4089 = vmatprep.mubr.bf16.mxu0 %v2350
    %4090 = vmatmul.mubr.bf16.gmra.mrb[0].mxu0 %v2349
    %v4091 = vpop.f32.mrb[0].mxu0
    %v4092 = vadd.f32 %v4029, %v4091
    %v4093 = vpop.f32.mrb[0].mxu0
    %v4094 = vadd.f32 %v4031, %v4093
    %v4095 = vpop.f32.mrb[0].mxu0
    %v4096 = vadd.f32 %v4033, %v4095
    %v4097 = vpop.f32.mrb[0].mxu0
    %v4098 = vadd.f32 %v4035, %v4097
    %4099 = vdwg.mxu0
    %4100 = vmatprep.subr.bf16.mxu0 %v3592
    %4101 = vmatpush1.bf16.msra.mxu0 %v3591
    %4102 = vmatprep.subr.bf16.mxu0 %v3596
    %4103 = vmatpush1.bf16.msra.mxu0 %v3595
    %4104 = vmatprep.subr.bf16.mxu0 %v3600
    %4105 = vmatpush1.bf16.msra.mxu0 %v3599
    %4106 = vmatprep.subr.bf16.mxu0 %v3604
    %4107 = vmatpush1.bf16.msra.mxu0 %v3603
    %4108 = vmatprep.subr.bf16.mxu0 %v3608
    %4109 = vmatpush1.bf16.msra.mxu0 %v3607
    %4110 = vmatprep.subr.bf16.mxu0 %v3612
    %4111 = vmatpush1.bf16.msra.mxu0 %v3611
    %4112 = vmatprep.subr.bf16.mxu0 %v3616
    %4113 = vmatpush1.bf16.msra.mxu0 %v3615
    %4114 = vmatprep.subr.bf16.mxu0 %v3620
    %4115 = vmatpush1.bf16.msra.mxu0 %v3619
    %4116 = vmatprep.subr.bf16.mxu0 %v3624
    %4117 = vmatpush1.bf16.msra.mxu0 %v3623
    %4118 = vmatprep.subr.bf16.mxu0 %v3628
    %4119 = vmatpush1.bf16.msra.mxu0 %v3627
    %4120 = vmatprep.subr.bf16.mxu0 %v3632
    %4121 = vmatpush1.bf16.msra.mxu0 %v3631
    %4122 = vmatprep.subr.bf16.mxu0 %v3636
    %4123 = vmatpush1.bf16.msra.mxu0 %v3635
    %4124 = vmatprep.subr.bf16.mxu0 %v3640
    %4125 = vmatpush1.bf16.msra.mxu0 %v3639
    %4126 = vmatprep.subr.bf16.mxu0 %v3644
    %4127 = vmatpush1.bf16.msra.mxu0 %v3643
    %4128 = vmatprep.subr.bf16.mxu0 %v3648
    %4129 = vmatpush1.bf16.msra.mxu0 %v3647
    %4130 = vmatprep.subr.bf16.mxu0 %v3652
    %4131 = vmatpush1.bf16.msra.mxu0 %v3651
    %4132 = vmatprep.mubr.bf16.mxu0 %v2336
    %4133 = vmatmul.mubr.bf16.gmra.mrb[0].mxu0 %v2335
    %v4134 = vpop.f32.mrb[0].mxu0
    %v4135 = vadd.f32 %v4072, %v4134
    %v4136 = vpop.f32.mrb[0].mxu0
    %v4137 = vadd.f32 %v4074, %v4136
    %v4138 = vpop.f32.mrb[0].mxu0
    %v4139 = vadd.f32 %v4076, %v4138
    %v4140 = vpop.f32.mrb[0].mxu0
    %v4141 = vadd.f32 %v4078, %v4140
    %4142 = vmatprep.mubr.bf16.mxu0 %v2344
    %4143 = vmatmul.mubr.bf16.gmra.mrb[0].mxu0 %v2343
    %v4144 = vpop.f32.mrb[0].mxu0
    %v4145 = vadd.f32 %v4082, %v4144
    %v4146 = vpop.f32.mrb[0].mxu0
    %v4147 = vadd.f32 %v4084, %v4146
    %v4148 = vpop.f32.mrb[0].mxu0
    %v4149 = vadd.f32 %v4086, %v4148
    %v4150 = vpop.f32.mrb[0].mxu0
    %v4151 = vadd.f32 %v4088, %v4150
    %4152 = vmatprep.mubr.bf16.mxu0 %v2352
    %4153 = vmatmul.mubr.bf16.gmra.mrb[0].mxu0 %v2351
    %v4154 = vpop.f32.mrb[0].mxu0
    %v4155 = vadd.f32 %v4092, %v4154
    %v4156 = vpop.f32.mrb[0].mxu0
    %v4157 = vadd.f32 %v4094, %v4156
    %v4158 = vpop.f32.mrb[0].mxu0
    %v4159 = vadd.f32 %v4096, %v4158
    %v4160 = vpop.f32.mrb[0].mxu0
    %v4161 = vadd.f32 %v4098, %v4160
    %4162 = vdwg.mxu0
    %4163 = vmatprep.subr.bf16.mxu0 %v3402
    %4164 = vmatpush1.bf16.msra.mxu0 %v3401
    %4165 = vmatprep.subr.bf16.mxu0 %v3406
    %4166 = vmatpush1.bf16.msra.mxu0 %v3405
    %4167 = vmatprep.subr.bf16.mxu0 %v3410
    %4168 = vmatpush1.bf16.msra.mxu0 %v3409
    %4169 = vmatprep.subr.bf16.mxu0 %v3414
    %4170 = vmatpush1.bf16.msra.mxu0 %v3413
    %4171 = vmatprep.subr.bf16.mxu0 %v3418
    %4172 = vmatpush1.bf16.msra.mxu0 %v3417
    %4173 = vmatprep.subr.bf16.mxu0 %v3422
    %4174 = vmatpush1.bf16.msra.mxu0 %v3421
    %4175 = vmatprep.subr.bf16.mxu0 %v3426
    %4176 = vmatpush1.bf16.msra.mxu0 %v3425
    %4177 = vmatprep.subr.bf16.mxu0 %v3430
    %4178 = vmatpush1.bf16.msra.mxu0 %v3429
    %4179 = vmatprep.subr.bf16.mxu0 %v3434
    %4180 = vmatpush1.bf16.msra.mxu0 %v3433
    %4181 = vmatprep.subr.bf16.mxu0 %v3438
    %4182 = vmatpush1.bf16.msra.mxu0 %v3437
    %4183 = vmatprep.subr.bf16.mxu0 %v3442
    %4184 = vmatpush1.bf16.msra.mxu0 %v3441
    %4185 = vmatprep.subr.bf16.mxu0 %v3446
    %4186 = vmatpush1.bf16.msra.mxu0 %v3445
    %4187 = vmatprep.subr.bf16.mxu0 %v3450
    %4188 = vmatpush1.bf16.msra.mxu0 %v3449
    %4189 = vmatprep.subr.bf16.mxu0 %v3454
    %4190 = vmatpush1.bf16.msra.mxu0 %v3453
    %4191 = vmatprep.subr.bf16.mxu0 %v3458
    %4192 = vmatpush1.bf16.msra.mxu0 %v3457
    %4193 = vmatprep.subr.bf16.mxu0 %v3462
    %4194 = vmatpush1.bf16.msra.mxu0 %v3461
    %4195 = vmatprep.mubr.bf16.mxu0 %v2330
    %4196 = vmatmul.mubr.bf16.gmra.mrb[0].mxu0 %v2329
    %v4197 = vpop.f32.mrb[0].mxu0
    %v4198 = vadd.f32 %v2622, %v4197
    %v4199 = vpop.f32.mrb[0].mxu0
    %v4200 = vadd.f32 %v2626, %v4199
    %v4201 = vpop.f32.mrb[0].mxu0
    %v4202 = vadd.f32 %v2622, %v4201
    %v4203 = vpop.f32.mrb[0].mxu0
    %v4204 = vadd.f32 %v2626, %v4203
    %4205 = vmatprep.mubr.bf16.mxu0 %v2338
    %4206 = vmatmul.mubr.bf16.gmra.mrb[0].mxu0 %v2337
    %v4207 = vpop.f32.mrb[0].mxu0
    %v4208 = vadd.f32 %v2622, %v4207
    %v4209 = vpop.f32.mrb[0].mxu0
    %v4210 = vadd.f32 %v2626, %v4209
    %v4211 = vpop.f32.mrb[0].mxu0
    %v4212 = vadd.f32 %v2622, %v4211
    %v4213 = vpop.f32.mrb[0].mxu0
    %v4214 = vadd.f32 %v2626, %v4213
    %4215 = vmatprep.mubr.bf16.mxu0 %v2346
    %4216 = vmatmul.mubr.bf16.gmra.mrb[0].mxu0 %v2345
    %v4217 = vpop.f32.mrb[0].mxu0
    %v4218 = vadd.f32 %v2622, %v4217
    %v4219 = vpop.f32.mrb[0].mxu0
    %v4220 = vadd.f32 %v2626, %v4219
    %v4221 = vpop.f32.mrb[0].mxu0
    %v4222 = vadd.f32 %v2622, %v4221
    %v4223 = vpop.f32.mrb[0].mxu0
    %v4224 = vadd.f32 %v2626, %v4223
    %4225 = vdwg.mxu0
    %4226 = vmatprep.subr.bf16.mxu0 %v3466
    %4227 = vmatpush1.bf16.msra.mxu0 %v3465
    %4228 = vmatprep.subr.bf16.mxu0 %v3470
    %4229 = vmatpush1.bf16.msra.mxu0 %v3469
    %4230 = vmatprep.subr.bf16.mxu0 %v3474
    %4231 = vmatpush1.bf16.msra.mxu0 %v3473
    %4232 = vmatprep.subr.bf16.mxu0 %v3478
    %4233 = vmatpush1.bf16.msra.mxu0 %v3477
    %4234 = vmatprep.subr.bf16.mxu0 %v3482
    %4235 = vmatpush1.bf16.msra.mxu0 %v3481
    %4236 = vmatprep.subr.bf16.mxu0 %v3486
    %4237 = vmatpush1.bf16.msra.mxu0 %v3485
    %4238 = vmatprep.subr.bf16.mxu0 %v3490
    %4239 = vmatpush1.bf16.msra.mxu0 %v3489
    %4240 = vmatprep.subr.bf16.mxu0 %v3494
    %4241 = vmatpush1.bf16.msra.mxu0 %v3493
    %4242 = vmatprep.subr.bf16.mxu0 %v3498
    %4243 = vmatpush1.bf16.msra.mxu0 %v3497
    %4244 = vmatprep.subr.bf16.mxu0 %v3502
    %4245 = vmatpush1.bf16.msra.mxu0 %v3501
    %4246 = vmatprep.subr.bf16.mxu0 %v3506
    %4247 = vmatpush1.bf16.msra.mxu0 %v3505
    %4248 = vmatprep.subr.bf16.mxu0 %v3510
    %4249 = vmatpush1.bf16.msra.mxu0 %v3509
    %4250 = vmatprep.subr.bf16.mxu0 %v3514
    %4251 = vmatpush1.bf16.msra.mxu0 %v3513
    %4252 = vmatprep.subr.bf16.mxu0 %v3518
    %4253 = vmatpush1.bf16.msra.mxu0 %v3517
    %4254 = vmatprep.subr.bf16.mxu0 %v3522
    %4255 = vmatpush1.bf16.msra.mxu0 %v3521
    %4256 = vmatprep.subr.bf16.mxu0 %v3526
    %4257 = vmatpush1.bf16.msra.mxu0 %v3525
    %4258 = vmatprep.mubr.bf16.mxu0 %v2332
    %4259 = vmatmul.mubr.bf16.gmra.mrb[0].mxu0 %v2331
    %v4260 = vpop.f32.mrb[0].mxu0
    %v4261 = vadd.f32 %v4198, %v4260
    %v4262 = vpop.f32.mrb[0].mxu0
    %v4263 = vadd.f32 %v4200, %v4262
    %v4264 = vpop.f32.mrb[0].mxu0
    %v4265 = vadd.f32 %v4202, %v4264
    %v4266 = vpop.f32.mrb[0].mxu0
    %v4267 = vadd.f32 %v4204, %v4266
    %4268 = vmatprep.mubr.bf16.mxu0 %v2340
    %4269 = vmatmul.mubr.bf16.gmra.mrb[0].mxu0 %v2339
    %v4270 = vpop.f32.mrb[0].mxu0
    %v4271 = vadd.f32 %v4208, %v4270
    %v4272 = vpop.f32.mrb[0].mxu0
    %v4273 = vadd.f32 %v4210, %v4272
    %v4274 = vpop.f32.mrb[0].mxu0
    %v4275 = vadd.f32 %v4212, %v4274
    %v4276 = vpop.f32.mrb[0].mxu0
    %v4277 = vadd.f32 %v4214, %v4276
    %4278 = vmatprep.mubr.bf16.mxu0 %v2348
    %4279 = vmatmul.mubr.bf16.gmra.mrb[0].mxu0 %v2347
    %v4280 = vpop.f32.mrb[0].mxu0
    %v4281 = vadd.f32 %v4218, %v4280
    %v4282 = vpop.f32.mrb[0].mxu0
    %v4283 = vadd.f32 %v4220, %v4282
    %v4284 = vpop.f32.mrb[0].mxu0
    %v4285 = vadd.f32 %v4222, %v4284
    %v4286 = vpop.f32.mrb[0].mxu0
    %v4287 = vadd.f32 %v4224, %v4286
    %4288 = vdwg.mxu0
    %4289 = vmatprep.subr.bf16.mxu0 %v3530
    %4290 = vmatpush1.bf16.msra.mxu0 %v3529
    %4291 = vmatprep.subr.bf16.mxu0 %v3534
    %4292 = vmatpush1.bf16.msra.mxu0 %v3533
    %4293 = vmatprep.subr.bf16.mxu0 %v3538
    %4294 = vmatpush1.bf16.msra.mxu0 %v3537
    %4295 = vmatprep.subr.bf16.mxu0 %v3542
    %4296 = vmatpush1.bf16.msra.mxu0 %v3541
    %4297 = vmatprep.subr.bf16.mxu0 %v3546
    %4298 = vmatpush1.bf16.msra.mxu0 %v3545
    %4299 = vmatprep.subr.bf16.mxu0 %v3550
    %4300 = vmatpush1.bf16.msra.mxu0 %v3549
    %4301 = vmatprep.subr.bf16.mxu0 %v3554
    %4302 = vmatpush1.bf16.msra.mxu0 %v3553
    %4303 = vmatprep.subr.bf16.mxu0 %v3558
    %4304 = vmatpush1.bf16.msra.mxu0 %v3557
    %4305 = vmatprep.subr.bf16.mxu0 %v3562
    %4306 = vmatpush1.bf16.msra.mxu0 %v3561
    %4307 = vmatprep.subr.bf16.mxu0 %v3566
    %4308 = vmatpush1.bf16.msra.mxu0 %v3565
    %4309 = vmatprep.subr.bf16.mxu0 %v3570
    %4310 = vmatpush1.bf16.msra.mxu0 %v3569
    %4311 = vmatprep.subr.bf16.mxu0 %v3574
    %4312 = vmatpush1.bf16.msra.mxu0 %v3573
    %4313 = vmatprep.subr.bf16.mxu0 %v3578
    %4314 = vmatpush1.bf16.msra.mxu0 %v3577
    %4315 = vmatprep.subr.bf16.mxu0 %v3582
    %4316 = vmatpush1.bf16.msra.mxu0 %v3581
    %4317 = vmatprep.subr.bf16.mxu0 %v3586
    %4318 = vmatpush1.bf16.msra.mxu0 %v3585
    %4319 = vmatprep.subr.bf16.mxu0 %v3590
    %4320 = vmatpush1.bf16.msra.mxu0 %v3589
    %4321 = vmatprep.mubr.bf16.mxu0 %v2334
    %4322 = vmatmul.mubr.bf16.gmra.mrb[0].mxu0 %v2333
    %v4323 = vpop.f32.mrb[0].mxu0
    %v4324 = vadd.f32 %v4261, %v4323
    %v4325 = vpop.f32.mrb[0].mxu0
    %v4326 = vadd.f32 %v4263, %v4325
    %v4327 = vpop.f32.mrb[0].mxu0
    %v4328 = vadd.f32 %v4265, %v4327
    %v4329 = vpop.f32.mrb[0].mxu0
    %v4330 = vadd.f32 %v4267, %v4329
    %4331 = vmatprep.mubr.bf16.mxu0 %v2342
    %4332 = vmatmul.mubr.bf16.gmra.mrb[0].mxu0 %v2341
    %v4333 = vpop.f32.mrb[0].mxu0
    %v4334 = vadd.f32 %v4271, %v4333
    %v4335 = vpop.f32.mrb[0].mxu0
    %v4336 = vadd.f32 %v4273, %v4335
    %v4337 = vpop.f32.mrb[0].mxu0
    %v4338 = vadd.f32 %v4275, %v4337
    %v4339 = vpop.f32.mrb[0].mxu0
    %v4340 = vadd.f32 %v4277, %v4339
    %4341 = vmatprep.mubr.bf16.mxu0 %v2350
    %4342 = vmatmul.mubr.bf16.gmra.mrb[0].mxu0 %v2349
    %v4343 = vpop.f32.mrb[0].mxu0
    %v4344 = vadd.f32 %v4281, %v4343
    %v4345 = vpop.f32.mrb[0].mxu0
    %v4346 = vadd.f32 %v4283, %v4345
    %v4347 = vpop.f32.mrb[0].mxu0
    %v4348 = vadd.f32 %v4285, %v4347
    %v4349 = vpop.f32.mrb[0].mxu0
    %v4350 = vadd.f32 %v4287, %v4349
    %4351 = vdwg.mxu0
    %4352 = vmatprep.subr.bf16.mxu0 %v3594
    %4353 = vmatpush1.bf16.msra.mxu0 %v3593
    %4354 = vmatprep.subr.bf16.mxu0 %v3598
    %4355 = vmatpush1.bf16.msra.mxu0 %v3597
    %4356 = vmatprep.subr.bf16.mxu0 %v3602
    %4357 = vmatpush1.bf16.msra.mxu0 %v3601
    %4358 = vmatprep.subr.bf16.mxu0 %v3606
    %4359 = vmatpush1.bf16.msra.mxu0 %v3605
    %4360 = vmatprep.subr.bf16.mxu0 %v3610
    %4361 = vmatpush1.bf16.msra.mxu0 %v3609
    %4362 = vmatprep.subr.bf16.mxu0 %v3614
    %4363 = vmatpush1.bf16.msra.mxu0 %v3613
    %4364 = vmatprep.subr.bf16.mxu0 %v3618
    %4365 = vmatpush1.bf16.msra.mxu0 %v3617
    %4366 = vmatprep.subr.bf16.mxu0 %v3622
    %4367 = vmatpush1.bf16.msra.mxu0 %v3621
    %4368 = vmatprep.subr.bf16.mxu0 %v3626
    %4369 = vmatpush1.bf16.msra.mxu0 %v3625
    %4370 = vmatprep.subr.bf16.mxu0 %v3630
    %4371 = vmatpush1.bf16.msra.mxu0 %v3629
    %4372 = vmatprep.subr.bf16.mxu0 %v3634
    %4373 = vmatpush1.bf16.msra.mxu0 %v3633
    %4374 = vmatprep.subr.bf16.mxu0 %v3638
    %4375 = vmatpush1.bf16.msra.mxu0 %v3637
    %4376 = vmatprep.subr.bf16.mxu0 %v3642
    %4377 = vmatpush1.bf16.msra.mxu0 %v3641
    %4378 = vmatprep.subr.bf16.mxu0 %v3646
    %4379 = vmatpush1.bf16.msra.mxu0 %v3645
    %4380 = vmatprep.subr.bf16.mxu0 %v3650
    %4381 = vmatpush1.bf16.msra.mxu0 %v3649
    %4382 = vmatprep.subr.bf16.mxu0 %v3654
    %4383 = vmatpush1.bf16.msra.mxu0 %v3653
    %4384 = vmatprep.mubr.bf16.mxu0 %v2336
    %4385 = vmatmul.mubr.bf16.gmra.mrb[0].mxu0 %v2335
    %v4386 = vpop.f32.mrb[0].mxu0
    %v4387 = vadd.f32 %v4324, %v4386
    %v4388 = vpop.f32.mrb[0].mxu0
    %v4389 = vadd.f32 %v4326, %v4388
    %v4390 = vpop.f32.mrb[0].mxu0
    %v4391 = vadd.f32 %v4328, %v4390
    %v4392 = vpop.f32.mrb[0].mxu0
    %v4393 = vadd.f32 %v4330, %v4392
    %4394 = vmatprep.mubr.bf16.mxu0 %v2344
    %4395 = vmatmul.mubr.bf16.gmra.mrb[0].mxu0 %v2343
    %v4396 = vpop.f32.mrb[0].mxu0
    %v4397 = vadd.f32 %v4334, %v4396
    %v4398 = vpop.f32.mrb[0].mxu0
    %v4399 = vadd.f32 %v4336, %v4398
    %v4400 = vpop.f32.mrb[0].mxu0
    %v4401 = vadd.f32 %v4338, %v4400
    %v4402 = vpop.f32.mrb[0].mxu0
    %v4403 = vadd.f32 %v4340, %v4402
    %4404 = vmatprep.mubr.bf16.mxu0 %v2352
    %4405 = vmatmul.mubr.bf16.gmra.mrb[0].mxu0 %v2351
    %v4406 = vpop.f32.mrb[0].mxu0
    %v4407 = vadd.f32 %v4344, %v4406
    %v4408 = vpop.f32.mrb[0].mxu0
    %v4409 = vadd.f32 %v4346, %v4408
    %v4410 = vpop.f32.mrb[0].mxu0
    %v4411 = vadd.f32 %v4348, %v4410
    %v4412 = vpop.f32.mrb[0].mxu0
    %v4413 = vadd.f32 %v4350, %v4412
    %4414 = vdwg.mxu0
    %v4415 = vld [vmem:[#allocation17] sm:$0xf]
    %v4416 = vld [vmem:[#allocation19] sm:$0xf]
    %v4417 = vadd.f32 %v4135, %v4137
    %v4418 = vadd.f32 %v4417, %v4387
    %v4419 = vadd.f32 %v4418, %v4389
    %4420 = vadd.xlane.f32.xlu0 %v4419
    %v4421 = vpop.xlane.xlu0 %4420
    %v4422 = vadd.f32 %v4139, %v4141
    %v4423 = vadd.f32 %v4422, %v4391
    %v4424 = vadd.f32 %v4423, %v4393
    %4425 = vadd.xlane.f32.xlu0 %v4424
    %v4426 = vpop.xlane.xlu0 %4425
    %v4427 = vadd.f32 %v4145, %v4147
    %v4428 = vadd.f32 %v4427, %v4397
    %v4429 = vadd.f32 %v4428, %v4399
    %4430 = vadd.xlane.f32.xlu0 %v4429
    %v4431 = vpop.xlane.xlu0 %4430
    %v4432 = vadd.f32 %v4149, %v4151
    %v4433 = vadd.f32 %v4432, %v4401
    %v4434 = vadd.f32 %v4433, %v4403
    %4435 = vadd.xlane.f32.xlu0 %v4434
    %v4436 = vpop.xlane.xlu0 %4435
    %v4437 = vadd.f32 %v4155, %v4157
    %v4438 = vadd.f32 %v4437, %v4407
    %v4439 = vadd.f32 %v4438, %v4409
    %4440 = vadd.xlane.f32.xlu0 %v4439
    %v4441 = vpop.xlane.xlu0 %4440
    %v4442 = vadd.f32 %v4159, %v4161
    %v4443 = vadd.f32 %v4442, %v4411
    %v4444 = vadd.f32 %v4443, %v4413
    %4445 = vadd.xlane.f32.xlu0 %v4444
    %v4446 = vpop.xlane.xlu0 %4445
    %v4447 = vmul.f32 %v4135, %v4135
    %v4448 = vmul.f32 %v4137, %v4137
    %v4449 = vmul.f32 %v4387, %v4387
    %v4450 = vmul.f32 %v4389, %v4389
    %v4451 = vmul.f32 %v4139, %v4139
    %v4452 = vmul.f32 %v4141, %v4141
    %v4453 = vmul.f32 %v4391, %v4391
    %v4454 = vmul.f32 %v4393, %v4393
    %v4455 = vmul.f32 %v4145, %v4145
    %v4456 = vmul.f32 %v4147, %v4147
    %v4457 = vmul.f32 %v4397, %v4397
    %v4458 = vmul.f32 %v4399, %v4399
    %v4459 = vmul.f32 %v4149, %v4149
    %v4460 = vmul.f32 %v4151, %v4151
    %v4461 = vmul.f32 %v4401, %v4401
    %v4462 = vmul.f32 %v4403, %v4403
    %v4463 = vmul.f32 %v4155, %v4155
    %v4464 = vmul.f32 %v4157, %v4157
    %v4465 = vmul.f32 %v4407, %v4407
    %v4466 = vmul.f32 %v4409, %v4409
    %v4467 = vmul.f32 %v4159, %v4159
    %v4468 = vmul.f32 %v4161, %v4161
    %v4469 = vmul.f32 %v4411, %v4411
    %v4470 = vmul.f32 %v4413, %v4413
    %v4471 = vadd.f32 %v4447, %v4448
    %v4472 = vadd.f32 %v4471, %v4449
    %v4473 = vadd.f32 %v4472, %v4450
    %4474 = vadd.xlane.f32.xlu0 %v4473
    %v4475 = vpop.xlane.xlu0 %4474
    %v4476 = vadd.f32 %v4451, %v4452
    %v4477 = vadd.f32 %v4476, %v4453
    %v4478 = vadd.f32 %v4477, %v4454
    %4479 = vadd.xlane.f32.xlu0 %v4478
    %v4480 = vpop.xlane.xlu0 %4479
    %v4481 = vadd.f32 %v4455, %v4456
    %v4482 = vadd.f32 %v4481, %v4457
    %v4483 = vadd.f32 %v4482, %v4458
    %4484 = vadd.xlane.f32.xlu0 %v4483
    %v4485 = vpop.xlane.xlu0 %4484
    %v4486 = vadd.f32 %v4459, %v4460
    %v4487 = vadd.f32 %v4486, %v4461
    %v4488 = vadd.f32 %v4487, %v4462
    %4489 = vadd.xlane.f32.xlu0 %v4488
    %v4490 = vpop.xlane.xlu0 %4489
    %v4491 = vadd.f32 %v4463, %v4464
    %v4492 = vadd.f32 %v4491, %v4465
    %v4493 = vadd.f32 %v4492, %v4466
    %4494 = vadd.xlane.f32.xlu0 %v4493
    %v4495 = vpop.xlane.xlu0 %4494
    %v4496 = vadd.f32 %v4467, %v4468
    %v4497 = vadd.f32 %v4496, %v4469
    %v4498 = vadd.f32 %v4497, %v4470
    %4499 = vadd.xlane.f32.xlu0 %v4498
    %v4500 = vpop.xlane.xlu0 %4499
    %v4501 = vmul.f32 %v4421, 0.001953125
    %v4502 = vmul.f32 %v4426, 0.001953125
    %v4503 = vmul.f32 %v4431, 0.001953125
    %v4504 = vmul.f32 %v4436, 0.001953125
    %v4505 = vmul.f32 %v4441, 0.001953125
    %v4506 = vmul.f32 %v4446, 0.001953125
    %v4507 = vmul.f32 %v4475, 0.001953125
    %v4508 = vmul.f32 %v4480, 0.001953125
    %v4509 = vmul.f32 %v4485, 0.001953125
    %v4510 = vmul.f32 %v4490, 0.001953125
    %v4511 = vmul.f32 %v4495, 0.001953125
    %v4512 = vmul.f32 %v4500, 0.001953125
    %v4513 = vmul.f32 %v4501, %v4501
    %v4514 = vmul.f32 %v4502, %v4502
    %v4515 = vmul.f32 %v4503, %v4503
    %v4516 = vmul.f32 %v4504, %v4504
    %v4517 = vmul.f32 %v4505, %v4505
    %v4518 = vmul.f32 %v4506, %v4506
    %v4519 = vsub.f32 %v4507, %v4513
    %v4520 = vsub.f32 %v4508, %v4514
    %v4521 = vsub.f32 %v4509, %v4515
    %v4522 = vsub.f32 %v4510, %v4516
    %v4523 = vsub.f32 %v4511, %v4517
    %v4524 = vsub.f32 %v4512, %v4518
    %v4525 = vadd.f32 %v4519, 1e-05
    %v4526 = vadd.f32 %v4520, 1e-05
    %v4527 = vadd.f32 %v4521, 1e-05
    %v4528 = vadd.f32 %v4522, 1e-05
    %v4529 = vadd.f32 %v4523, 1e-05
    %v4530 = vadd.f32 %v4524, 1e-05
    %v4531 = vrsqrt.pop %v4525
    %v4532 = vrsqrt.pop %v4526
    %v4533 = vrsqrt.pop %v4527
    %v4534 = vrsqrt.pop %v4528
    %v4535 = vrsqrt.pop %v4529
    %v4536 = vrsqrt.pop %v4530
    %v4537 = vsub.f32 %v4135, %v4501
    %v4538 = vsub.f32 %v4137, %v4501
    %v4539 = vsub.f32 %v4387, %v4501
    %v4540 = vsub.f32 %v4389, %v4501
    %v4541 = vsub.f32 %v4139, %v4502
    %v4542 = vsub.f32 %v4141, %v4502
    %v4543 = vsub.f32 %v4391, %v4502
    %v4544 = vsub.f32 %v4393, %v4502
    %v4545 = vsub.f32 %v4145, %v4503
    %v4546 = vsub.f32 %v4147, %v4503
    %v4547 = vsub.f32 %v4397, %v4503
    %v4548 = vsub.f32 %v4399, %v4503
    %v4549 = vsub.f32 %v4149, %v4504
    %v4550 = vsub.f32 %v4151, %v4504
    %v4551 = vsub.f32 %v4401, %v4504
    %v4552 = vsub.f32 %v4403, %v4504
    %v4553 = vsub.f32 %v4155, %v4505
    %v4554 = vsub.f32 %v4157, %v4505
    %v4555 = vsub.f32 %v4407, %v4505
    %v4556 = vsub.f32 %v4409, %v4505
    %v4557 = vsub.f32 %v4159, %v4506
    %v4558 = vsub.f32 %v4161, %v4506
    %v4559 = vsub.f32 %v4411, %v4506
    %v4560 = vsub.f32 %v4413, %v4506
    %v4561 = vmul.f32 %v4537, %v4531
    %v4562 = vmul.f32 %v4538, %v4531
    %v4563 = vmul.f32 %v4539, %v4531
    %v4564 = vmul.f32 %v4540, %v4531
    %v4565 = vmul.f32 %v4541, %v4532
    %v4566 = vmul.f32 %v4542, %v4532
    %v4567 = vmul.f32 %v4543, %v4532
    %v4568 = vmul.f32 %v4544, %v4532
    %v4569 = vmul.f32 %v4545, %v4533
    %v4570 = vmul.f32 %v4546, %v4533
    %v4571 = vmul.f32 %v4547, %v4533
    %v4572 = vmul.f32 %v4548, %v4533
    %v4573 = vmul.f32 %v4549, %v4534
    %v4574 = vmul.f32 %v4550, %v4534
    %v4575 = vmul.f32 %v4551, %v4534
    %v4576 = vmul.f32 %v4552, %v4534
    %v4577 = vmul.f32 %v4553, %v4535
    %v4578 = vmul.f32 %v4554, %v4535
    %v4579 = vmul.f32 %v4555, %v4535
    %v4580 = vmul.f32 %v4556, %v4535
    %v4581 = vmul.f32 %v4557, %v4536
    %v4582 = vmul.f32 %v4558, %v4536
    %v4583 = vmul.f32 %v4559, %v4536
    %v4584 = vmul.f32 %v4560, %v4536
    %v4585 = vpack.c.bf16 %v4565, %v4561
    %v4586 = vpack.c.bf16 %v4566, %v4562
    %v4587 = vpack.c.bf16 %v4567, %v4563
    %v4588 = vpack.c.bf16 %v4568, %v4564
    %v4589 = vpack.c.bf16 %v4573, %v4569
    %v4590 = vpack.c.bf16 %v4574, %v4570
    %v4591 = vpack.c.bf16 %v4575, %v4571
    %v4592 = vpack.c.bf16 %v4576, %v4572
    %v4593 = vpack.c.bf16 %v4581, %v4577
    %v4594 = vpack.c.bf16 %v4582, %v4578
    %v4595 = vpack.c.bf16 %v4583, %v4579
    %v4596 = vpack.c.bf16 %v4584, %v4580
    %v4598 = vlaneseq
    %v4599 = vshrl.u32 %v4598, 7
    %v4600 = vsub.s32 0, %v4599
    %v4601 = vrot.slane %v4415, %v4600
    %v4602 = vlaneseq
    %v4603 = vshrl.u32 %v4602, 7
    %v4604 = vsub.s32 1, %v4603
    %v4605 = vrot.slane %v4415, %v4604
    %v4606 = vlaneseq
    %v4607 = vshrl.u32 %v4606, 7
    %v4608 = vsub.s32 2, %v4607
    %v4609 = vrot.slane %v4415, %v4608
    %v4610 = vlaneseq
    %v4611 = vshrl.u32 %v4610, 7
    %v4612 = vsub.s32 3, %v4611
    %v4613 = vrot.slane %v4415, %v4612
    %v4618 = vpack.c.bf16 %v4601, %v4601
    %v4619 = vpack.c.bf16 %v4605, %v4605
    %v4620 = vpack.c.bf16 %v4609, %v4609
    %v4621 = vpack.c.bf16 %v4613, %v4613
    %v4623 = vpack.i.b16 %v4618, %v4618
    %v4625 = vlaneseq
    %v4626 = vshrl.u32 %v4625, 7
    %v4627 = vsub.s32 0, %v4626
    %v4628 = vrot.slane %v4623, %v4627
    %v4630 = vpack.i.b16 %v4619, %v4619
    %v4632 = vlaneseq
    %v4633 = vshrl.u32 %v4632, 7
    %v4634 = vsub.s32 0, %v4633
    %v4635 = vrot.slane %v4630, %v4634
    %v4637 = vpack.i.b16 %v4620, %v4620
    %v4639 = vlaneseq
    %v4640 = vshrl.u32 %v4639, 7
    %v4641 = vsub.s32 0, %v4640
    %v4642 = vrot.slane %v4637, %v4641
    %v4644 = vpack.i.b16 %v4621, %v4621
    %v4646 = vlaneseq
    %v4647 = vshrl.u32 %v4646, 7
    %v4648 = vsub.s32 0, %v4647
    %v4649 = vrot.slane %v4644, %v4648
    %v4650 = vmul.bf16 %v4585, %v4628
    %v4651 = vmul.bf16 %v4586, %v4635
    %v4652 = vmul.bf16 %v4587, %v4642
    %v4653 = vmul.bf16 %v4588, %v4649
    %v4654 = vmul.bf16 %v4589, %v4628
    %v4655 = vmul.bf16 %v4590, %v4635
    %v4656 = vmul.bf16 %v4591, %v4642
    %v4657 = vmul.bf16 %v4592, %v4649
    %v4658 = vmul.bf16 %v4593, %v4628
    %v4659 = vmul.bf16 %v4594, %v4635
    %v4660 = vmul.bf16 %v4595, %v4642
    %v4661 = vmul.bf16 %v4596, %v4649
    %v4663 = vlaneseq
    %v4664 = vshrl.u32 %v4663, 7
    %v4665 = vsub.s32 0, %v4664
    %v4666 = vrot.slane %v4416, %v4665
    %v4667 = vlaneseq
    %v4668 = vshrl.u32 %v4667, 7
    %v4669 = vsub.s32 1, %v4668
    %v4670 = vrot.slane %v4416, %v4669
    %v4671 = vlaneseq
    %v4672 = vshrl.u32 %v4671, 7
    %v4673 = vsub.s32 2, %v4672
    %v4674 = vrot.slane %v4416, %v4673
    %v4675 = vlaneseq
    %v4676 = vshrl.u32 %v4675, 7
    %v4677 = vsub.s32 3, %v4676
    %v4678 = vrot.slane %v4416, %v4677
    %v4683 = vpack.c.bf16 %v4666, %v4666
    %v4684 = vpack.c.bf16 %v4670, %v4670
    %v4685 = vpack.c.bf16 %v4674, %v4674
    %v4686 = vpack.c.bf16 %v4678, %v4678
    %v4688 = vpack.i.b16 %v4683, %v4683
    %v4690 = vlaneseq
    %v4691 = vshrl.u32 %v4690, 7
    %v4692 = vsub.s32 0, %v4691
    %v4693 = vrot.slane %v4688, %v4692
    %v4695 = vpack.i.b16 %v4684, %v4684
    %v4697 = vlaneseq
    %v4698 = vshrl.u32 %v4697, 7
    %v4699 = vsub.s32 0, %v4698
    %v4700 = vrot.slane %v4695, %v4699
    %v4702 = vpack.i.b16 %v4685, %v4685
    %v4704 = vlaneseq
    %v4705 = vshrl.u32 %v4704, 7
    %v4706 = vsub.s32 0, %v4705
    %v4707 = vrot.slane %v4702, %v4706
    %v4709 = vpack.i.b16 %v4686, %v4686
    %v4711 = vlaneseq
    %v4712 = vshrl.u32 %v4711, 7
    %v4713 = vsub.s32 0, %v4712
    %v4714 = vrot.slane %v4709, %v4713
    %v4715 = vadd.bf16 %v4650, %v4693
    %v4716 = vadd.bf16 %v4651, %v4700
    %v4717 = vadd.bf16 %v4652, %v4707
    %v4718 = vadd.bf16 %v4653, %v4714
    %v4719 = vadd.bf16 %v4654, %v4693
    %v4720 = vadd.bf16 %v4655, %v4700
    %v4721 = vadd.bf16 %v4656, %v4707
    %v4722 = vadd.bf16 %v4657, %v4714
    %v4723 = vadd.bf16 %v4658, %v4693
    %v4724 = vadd.bf16 %v4659, %v4700
    %v4725 = vadd.bf16 %v4660, %v4707
    %v4726 = vadd.bf16 %v4661, %v4714
    %v4727 = vxor.u32 %v4715, 2147516416
    %v4728 = vxor.u32 %v4716, 2147516416
    %v4729 = vxor.u32 %v4717, 2147516416
    %v4730 = vxor.u32 %v4718, 2147516416
    %v4731 = vxor.u32 %v4719, 2147516416
    %v4732 = vxor.u32 %v4720, 2147516416
    %v4733 = vxor.u32 %v4721, 2147516416
    %v4734 = vxor.u32 %v4722, 2147516416
    %v4735 = vxor.u32 %v4723, 2147516416
    %v4736 = vxor.u32 %v4724, 2147516416
    %v4737 = vxor.u32 %v4725, 2147516416
    %v4738 = vxor.u32 %v4726, 2147516416
    %v4740 = vmul.bf16 %v4727, 1069105081
    %v4741 = vpow.bf16.pop %v4740
    %v4743 = vmul.bf16 %v4728, 1069105081
    %v4744 = vpow.bf16.pop %v4743
    %v4746 = vmul.bf16 %v4729, 1069105081
    %v4747 = vpow.bf16.pop %v4746
    %v4749 = vmul.bf16 %v4730, 1069105081
    %v4750 = vpow.bf16.pop %v4749
    %v4752 = vmul.bf16 %v4731, 1069105081
    %v4753 = vpow.bf16.pop %v4752
    %v4755 = vmul.bf16 %v4732, 1069105081
    %v4756 = vpow.bf16.pop %v4755
    %v4758 = vmul.bf16 %v4733, 1069105081
    %v4759 = vpow.bf16.pop %v4758
    %v4761 = vmul.bf16 %v4734, 1069105081
    %v4762 = vpow.bf16.pop %v4761
    %v4764 = vmul.bf16 %v4735, 1069105081
    %v4765 = vpow.bf16.pop %v4764
    %v4767 = vmul.bf16 %v4736, 1069105081
    %v4768 = vpow.bf16.pop %v4767
    %v4770 = vmul.bf16 %v4737, 1069105081
    %v4771 = vpow.bf16.pop %v4770
    %v4773 = vmul.bf16 %v4738, 1069105081
    %v4774 = vpow.bf16.pop %v4773
    %v4775 = vadd.bf16 %v4741, 1065369472
    %v4776 = vadd.bf16 %v4744, 1065369472
    %v4777 = vadd.bf16 %v4747, 1065369472
    %v4778 = vadd.bf16 %v4750, 1065369472
    %v4779 = vadd.bf16 %v4753, 1065369472
    %v4780 = vadd.bf16 %v4756, 1065369472
    %v4781 = vadd.bf16 %v4759, 1065369472
    %v4782 = vadd.bf16 %v4762, 1065369472
    %v4783 = vadd.bf16 %v4765, 1065369472
    %v4784 = vadd.bf16 %v4768, 1065369472
    %v4785 = vadd.bf16 %v4771, 1065369472
    %v4786 = vadd.bf16 %v4774, 1065369472
    %v4787 = vrcp.bf16.pop %v4775
    %v4788 = vmul.bf16 1065369472, %v4787
    %v4789 = vrcp.bf16.pop %v4776
    %v4790 = vmul.bf16 1065369472, %v4789
    %v4791 = vrcp.bf16.pop %v4777
    %v4792 = vmul.bf16 1065369472, %v4791
    %v4793 = vrcp.bf16.pop %v4778
    %v4794 = vmul.bf16 1065369472, %v4793
    %v4795 = vrcp.bf16.pop %v4779
    %v4796 = vmul.bf16 1065369472, %v4795
    %v4797 = vrcp.bf16.pop %v4780
    %v4798 = vmul.bf16 1065369472, %v4797
    %v4799 = vrcp.bf16.pop %v4781
    %v4800 = vmul.bf16 1065369472, %v4799
    %v4801 = vrcp.bf16.pop %v4782
    %v4802 = vmul.bf16 1065369472, %v4801
    %v4803 = vrcp.bf16.pop %v4783
    %v4804 = vmul.bf16 1065369472, %v4803
    %v4805 = vrcp.bf16.pop %v4784
    %v4806 = vmul.bf16 1065369472, %v4805
    %v4807 = vrcp.bf16.pop %v4785
    %v4808 = vmul.bf16 1065369472, %v4807
    %v4809 = vrcp.bf16.pop %v4786
    %v4810 = vmul.bf16 1065369472, %v4809
    %v4811 = vmul.bf16 %v4715, %v4788
    %v4812 = vmul.bf16 %v4716, %v4790
    %v4813 = vmul.bf16 %v4717, %v4792
    %v4814 = vmul.bf16 %v4718, %v4794
    %v4815 = vmul.bf16 %v4719, %v4796
    %v4816 = vmul.bf16 %v4720, %v4798
    %v4817 = vmul.bf16 %v4721, %v4800
    %v4818 = vmul.bf16 %v4722, %v4802
    %v4819 = vmul.bf16 %v4723, %v4804
    %v4820 = vmul.bf16 %v4724, %v4806
    %v4821 = vmul.bf16 %v4725, %v4808
    %v4822 = vmul.bf16 %v4726, %v4810
    %v4823 = vld [vmem:[#allocation20] sm:$0xf]
    %v4824 = vld [vmem:[#allocation20 + $0x4] sm:$0xf]
    %v4825 = vld [vmem:[#allocation20 + $0x8] sm:$0xf]
    %v4826 = vld [vmem:[#allocation20 + $0xc] sm:$0xf]
    %v4827 = vld [vmem:[#allocation20 + $0x10] sm:$0xf]
    %v4828 = vld [vmem:[#allocation20 + $0x14] sm:$0xf]
    %v4829 = vld [vmem:[#allocation20 + $0x18] sm:$0xf]
    %v4830 = vld [vmem:[#allocation20 + $0x1c] sm:$0xf]
    %v4831 = vld [vmem:[#allocation20 + $0x20] sm:$0xf]
    %v4832 = vld [vmem:[#allocation20 + $0x24] sm:$0xf]
    %v4833 = vld [vmem:[#allocation20 + $0x28] sm:$0xf]
    %v4834 = vld [vmem:[#allocation20 + $0x2c] sm:$0xf]
    %v4835 = vld [vmem:[#allocation20 + $0x30] sm:$0xf]
    %v4836 = vld [vmem:[#allocation20 + $0x34] sm:$0xf]
    %v4837 = vld [vmem:[#allocation20 + $0x38] sm:$0xf]
    %v4838 = vld [vmem:[#allocation20 + $0x3c] sm:$0xf]
    %v4839 = vld [vmem:[#allocation20 + $0x40] sm:$0xf]
    %v4840 = vld [vmem:[#allocation20 + $0x44] sm:$0xf]
    %v4841 = vld [vmem:[#allocation20 + $0x48] sm:$0xf]
    %v4842 = vld [vmem:[#allocation20 + $0x4c] sm:$0xf]
    %v4843 = vld [vmem:[#allocation20 + $0x50] sm:$0xf]
    %v4844 = vld [vmem:[#allocation20 + $0x54] sm:$0xf]
    %v4845 = vld [vmem:[#allocation20 + $0x58] sm:$0xf]
    %v4846 = vld [vmem:[#allocation20 + $0x5c] sm:$0xf]
    %v4847 = vld [vmem:[#allocation20 + $0x60] sm:$0xf]
    %v4848 = vld [vmem:[#allocation20 + $0x64] sm:$0xf]
    %v4849 = vld [vmem:[#allocation20 + $0x68] sm:$0xf]
    %v4850 = vld [vmem:[#allocation20 + $0x6c] sm:$0xf]
    %v4851 = vld [vmem:[#allocation20 + $0x70] sm:$0xf]
    %v4852 = vld [vmem:[#allocation20 + $0x74] sm:$0xf]
    %v4853 = vld [vmem:[#allocation20 + $0x78] sm:$0xf]
    %v4854 = vld [vmem:[#allocation20 + $0x7c] sm:$0xf]
    %v4855 = vld [vmem:[#allocation20 + $0x80] sm:$0xf]
    %v4856 = vld [vmem:[#allocation20 + $0x84] sm:$0xf]
    %v4857 = vld [vmem:[#allocation20 + $0x88] sm:$0xf]
    %v4858 = vld [vmem:[#allocation20 + $0x8c] sm:$0xf]
    %v4859 = vld [vmem:[#allocation20 + $0x90] sm:$0xf]
    %v4860 = vld [vmem:[#allocation20 + $0x94] sm:$0xf]
    %v4861 = vld [vmem:[#allocation20 + $0x98] sm:$0xf]
    %v4862 = vld [vmem:[#allocation20 + $0x9c] sm:$0xf]
    %v4863 = vld [vmem:[#allocation20 + $0xa0] sm:$0xf]
    %v4864 = vld [vmem:[#allocation20 + $0xa4] sm:$0xf]
    %v4865 = vld [vmem:[#allocation20 + $0xa8] sm:$0xf]
    %v4866 = vld [vmem:[#allocation20 + $0xac] sm:$0xf]
    %v4867 = vld [vmem:[#allocation20 + $0xb0] sm:$0xf]
    %v4868 = vld [vmem:[#allocation20 + $0xb4] sm:$0xf]
    %v4869 = vld [vmem:[#allocation20 + $0xb8] sm:$0xf]
    %v4870 = vld [vmem:[#allocation20 + $0xbc] sm:$0xf]
    %v4871 = vld [vmem:[#allocation20 + $0xc0] sm:$0xf]
    %v4872 = vld [vmem:[#allocation20 + $0xc4] sm:$0xf]
    %v4873 = vld [vmem:[#allocation20 + $0xc8] sm:$0xf]
    %v4874 = vld [vmem:[#allocation20 + $0xcc] sm:$0xf]
    %v4875 = vld [vmem:[#allocation20 + $0xd0] sm:$0xf]
    %v4876 = vld [vmem:[#allocation20 + $0xd4] sm:$0xf]
    %v4877 = vld [vmem:[#allocation20 + $0xd8] sm:$0xf]
    %v4878 = vld [vmem:[#allocation20 + $0xdc] sm:$0xf]
    %v4879 = vld [vmem:[#allocation20 + $0xe0] sm:$0xf]
    %v4880 = vld [vmem:[#allocation20 + $0xe4] sm:$0xf]
    %v4881 = vld [vmem:[#allocation20 + $0xe8] sm:$0xf]
    %v4882 = vld [vmem:[#allocation20 + $0xec] sm:$0xf]
    %v4883 = vld [vmem:[#allocation20 + $0xf0] sm:$0xf]
    %v4884 = vld [vmem:[#allocation20 + $0xf4] sm:$0xf]
    %v4885 = vld [vmem:[#allocation20 + $0xf8] sm:$0xf]
    %v4886 = vld [vmem:[#allocation20 + $0xfc] sm:$0xf]
    %v4887 = vld [vmem:[#allocation22] sm:$0x1]
    %v4889 = vlaneseq
    %v4890 = vshrl.u32 %v4889, 7
    %v4891 = vsub.s32 0, %v4890
    %v4892 = vrot.slane %v4887, %v4891
    %v4958 = vunpack.c.l.b16 %v4823
    %v4959 = vunpack.c.l.b16 %v4824
    %v4960 = vunpack.c.l.b16 %v4825
    %v4961 = vunpack.c.l.b16 %v4826
    %v4962 = vunpack.c.l.b16 %v4827
    %v4963 = vunpack.c.l.b16 %v4828
    %v4964 = vunpack.c.l.b16 %v4829
    %v4965 = vunpack.c.l.b16 %v4830
    %v4966 = vunpack.c.l.b16 %v4831
    %v4967 = vunpack.c.l.b16 %v4832
    %v4968 = vunpack.c.l.b16 %v4833
    %v4969 = vunpack.c.l.b16 %v4834
    %v4970 = vunpack.c.l.b16 %v4835
    %v4971 = vunpack.c.l.b16 %v4836
    %v4972 = vunpack.c.l.b16 %v4837
    %v4973 = vunpack.c.l.b16 %v4838
    %v4974 = vunpack.c.l.b16 %v4839
    %v4975 = vunpack.c.l.b16 %v4840
    %v4976 = vunpack.c.l.b16 %v4841
    %v4977 = vunpack.c.l.b16 %v4842
    %v4978 = vunpack.c.l.b16 %v4843
    %v4979 = vunpack.c.l.b16 %v4844
    %v4980 = vunpack.c.l.b16 %v4845
    %v4981 = vunpack.c.l.b16 %v4846
    %v4982 = vunpack.c.l.b16 %v4847
    %v4983 = vunpack.c.l.b16 %v4848
    %v4984 = vunpack.c.l.b16 %v4849
    %v4985 = vunpack.c.l.b16 %v4850
    %v4986 = vunpack.c.l.b16 %v4851
    %v4987 = vunpack.c.l.b16 %v4852
    %v4988 = vunpack.c.l.b16 %v4853
    %v4989 = vunpack.c.l.b16 %v4854
    %v4990 = vunpack.c.l.b16 %v4855
    %v4991 = vunpack.c.l.b16 %v4856
    %v4992 = vunpack.c.l.b16 %v4857
    %v4993 = vunpack.c.l.b16 %v4858
    %v4994 = vunpack.c.l.b16 %v4859
    %v4995 = vunpack.c.l.b16 %v4860
    %v4996 = vunpack.c.l.b16 %v4861
    %v4997 = vunpack.c.l.b16 %v4862
    %v4998 = vunpack.c.l.b16 %v4863
    %v4999 = vunpack.c.l.b16 %v4864
    %v5000 = vunpack.c.l.b16 %v4865
    %v5001 = vunpack.c.l.b16 %v4866
    %v5002 = vunpack.c.l.b16 %v4867
    %v5003 = vunpack.c.l.b16 %v4868
    %v5004 = vunpack.c.l.b16 %v4869
    %v5005 = vunpack.c.l.b16 %v4870
    %v5006 = vunpack.c.l.b16 %v4871
    %v5007 = vunpack.c.l.b16 %v4872
    %v5008 = vunpack.c.l.b16 %v4873
    %v5009 = vunpack.c.l.b16 %v4874
    %v5010 = vunpack.c.l.b16 %v4875
    %v5011 = vunpack.c.l.b16 %v4876
    %v5012 = vunpack.c.l.b16 %v4877
    %v5013 = vunpack.c.l.b16 %v4878
    %v5014 = vunpack.c.l.b16 %v4879
    %v5015 = vunpack.c.l.b16 %v4880
    %v5016 = vunpack.c.l.b16 %v4881
    %v5017 = vunpack.c.l.b16 %v4882
    %v5018 = vunpack.c.l.b16 %v4883
    %v5019 = vunpack.c.l.b16 %v4884
    %v5020 = vunpack.c.l.b16 %v4885
    %v5021 = vunpack.c.l.b16 %v4886
    %v5022 = vpack.c.b16 %v4959, %v4958
    %v5023 = vpack.c.b16 %v4961, %v4960
    %v5024 = vpack.c.b16 %v4963, %v4962
    %v5025 = vpack.c.b16 %v4965, %v4964
    %v5026 = vpack.c.b16 %v4967, %v4966
    %v5027 = vpack.c.b16 %v4969, %v4968
    %v5028 = vpack.c.b16 %v4971, %v4970
    %v5029 = vpack.c.b16 %v4973, %v4972
    %v5030 = vpack.c.b16 %v4975, %v4974
    %v5031 = vpack.c.b16 %v4977, %v4976
    %v5032 = vpack.c.b16 %v4979, %v4978
    %v5033 = vpack.c.b16 %v4981, %v4980
    %v5034 = vpack.c.b16 %v4983, %v4982
    %v5035 = vpack.c.b16 %v4985, %v4984
    %v5036 = vpack.c.b16 %v4987, %v4986
    %v5037 = vpack.c.b16 %v4989, %v4988
    %v5038 = vpack.c.b16 %v4991, %v4990
    %v5039 = vpack.c.b16 %v4993, %v4992
    %v5040 = vpack.c.b16 %v4995, %v4994
    %v5041 = vpack.c.b16 %v4997, %v4996
    %v5042 = vpack.c.b16 %v4999, %v4998
    %v5043 = vpack.c.b16 %v5001, %v5000
    %v5044 = vpack.c.b16 %v5003, %v5002
    %v5045 = vpack.c.b16 %v5005, %v5004
    %v5046 = vpack.c.b16 %v5007, %v5006
    %v5047 = vpack.c.b16 %v5009, %v5008
    %v5048 = vpack.c.b16 %v5011, %v5010
    %v5049 = vpack.c.b16 %v5013, %v5012
    %v5050 = vpack.c.b16 %v5015, %v5014
    %v5051 = vpack.c.b16 %v5017, %v5016
    %v5052 = vpack.c.b16 %v5019, %v5018
    %v5053 = vpack.c.b16 %v5021, %v5020
    %5086 = vmatprep.subr.bf16.mxu0 0
    %5087 = vmatpush1.bf16.msra.mxu0 %v5022
    %5088 = vmatprep.subr.bf16.mxu0 0
    %5089 = vmatpush1.bf16.msra.mxu0 %v5023
    %5090 = vmatprep.subr.bf16.mxu0 0
    %5091 = vmatpush1.bf16.msra.mxu0 %v5024
    %5092 = vmatprep.subr.bf16.mxu0 0
    %5093 = vmatpush1.bf16.msra.mxu0 %v5025
    %5094 = vmatprep.subr.bf16.mxu0 0
    %5095 = vmatpush1.bf16.msra.mxu0 %v5026
    %5096 = vmatprep.subr.bf16.mxu0 0
    %5097 = vmatpush1.bf16.msra.mxu0 %v5027
    %5098 = vmatprep.subr.bf16.mxu0 0
    %5099 = vmatpush1.bf16.msra.mxu0 %v5028
    %5100 = vmatprep.subr.bf16.mxu0 0
    %5101 = vmatpush1.bf16.msra.mxu0 %v5029
    %5102 = vmatprep.subr.bf16.mxu0 0
    %5103 = vmatpush1.bf16.msra.mxu0 %v5030
    %5104 = vmatprep.subr.bf16.mxu0 0
    %5105 = vmatpush1.bf16.msra.mxu0 %v5031
    %5106 = vmatprep.subr.bf16.mxu0 0
    %5107 = vmatpush1.bf16.msra.mxu0 %v5032
    %5108 = vmatprep.subr.bf16.mxu0 0
    %5109 = vmatpush1.bf16.msra.mxu0 %v5033
    %5110 = vmatprep.subr.bf16.mxu0 0
    %5111 = vmatpush1.bf16.msra.mxu0 %v5034
    %5112 = vmatprep.subr.bf16.mxu0 0
    %5113 = vmatpush1.bf16.msra.mxu0 %v5035
    %5114 = vmatprep.subr.bf16.mxu0 0
    %5115 = vmatpush1.bf16.msra.mxu0 %v5036
    %5116 = vmatprep.subr.bf16.mxu0 0
    %5117 = vmatpush1.bf16.msra.mxu0 %v5037
    %5118 = vmatprep.mubr.bf16.mxu0 %v4812
    %5119 = vmatmul.mubr.bf16.gmra.mrb[0].mxu0 %v4811
    %v5120 = vpop.f32.mrb[0].mxu0
    %v5121 = vadd.f32 %v4892, %v5120
    %v5122 = vpop.f32.mrb[0].mxu0
    %v5123 = vpop.f32.mrb[0].mxu0
    %v5124 = vadd.f32 %v4892, %v5123
    %v5125 = vpop.f32.mrb[0].mxu0
    %5126 = vmatprep.mubr.bf16.mxu0 %v4816
    %5127 = vmatmul.mubr.bf16.gmra.mrb[0].mxu0 %v4815
    %v5128 = vpop.f32.mrb[0].mxu0
    %v5129 = vadd.f32 %v4892, %v5128
    %v5130 = vpop.f32.mrb[0].mxu0
    %v5131 = vpop.f32.mrb[0].mxu0
    %v5132 = vadd.f32 %v4892, %v5131
    %v5133 = vpop.f32.mrb[0].mxu0
    %5134 = vmatprep.mubr.bf16.mxu0 %v4820
    %5135 = vmatmul.mubr.bf16.gmra.mrb[0].mxu0 %v4819
    %v5136 = vpop.f32.mrb[0].mxu0
    %v5137 = vadd.f32 %v4892, %v5136
    %v5138 = vpop.f32.mrb[0].mxu0
    %v5139 = vpop.f32.mrb[0].mxu0
    %v5140 = vadd.f32 %v4892, %v5139
    %v5141 = vpop.f32.mrb[0].mxu0
    %5142 = vdwg.mxu0
    %5143 = vmatprep.subr.bf16.mxu0 0
    %5144 = vmatpush1.bf16.msra.mxu0 %v5038
    %5145 = vmatprep.subr.bf16.mxu0 0
    %5146 = vmatpush1.bf16.msra.mxu0 %v5039
    %5147 = vmatprep.subr.bf16.mxu0 0
    %5148 = vmatpush1.bf16.msra.mxu0 %v5040
    %5149 = vmatprep.subr.bf16.mxu0 0
    %5150 = vmatpush1.bf16.msra.mxu0 %v5041
    %5151 = vmatprep.subr.bf16.mxu0 0
    %5152 = vmatpush1.bf16.msra.mxu0 %v5042
    %5153 = vmatprep.subr.bf16.mxu0 0
    %5154 = vmatpush1.bf16.msra.mxu0 %v5043
    %5155 = vmatprep.subr.bf16.mxu0 0
    %5156 = vmatpush1.bf16.msra.mxu0 %v5044
    %5157 = vmatprep.subr.bf16.mxu0 0
    %5158 = vmatpush1.bf16.msra.mxu0 %v5045
    %5159 = vmatprep.subr.bf16.mxu0 0
    %5160 = vmatpush1.bf16.msra.mxu0 %v5046
    %5161 = vmatprep.subr.bf16.mxu0 0
    %5162 = vmatpush1.bf16.msra.mxu0 %v5047
    %5163 = vmatprep.subr.bf16.mxu0 0
    %5164 = vmatpush1.bf16.msra.mxu0 %v5048
    %5165 = vmatprep.subr.bf16.mxu0 0
    %5166 = vmatpush1.bf16.msra.mxu0 %v5049
    %5167 = vmatprep.subr.bf16.mxu0 0
    %5168 = vmatpush1.bf16.msra.mxu0 %v5050
    %5169 = vmatprep.subr.bf16.mxu0 0
    %5170 = vmatpush1.bf16.msra.mxu0 %v5051
    %5171 = vmatprep.subr.bf16.mxu0 0
    %5172 = vmatpush1.bf16.msra.mxu0 %v5052
    %5173 = vmatprep.subr.bf16.mxu0 0
    %5174 = vmatpush1.bf16.msra.mxu0 %v5053
    %5175 = vmatprep.mubr.bf16.mxu0 %v4814
    %5176 = vmatmul.mubr.bf16.gmra.mrb[0].mxu0 %v4813
    %v5177 = vpop.f32.mrb[0].mxu0
    %v5178 = vadd.f32 %v5121, %v5177
    %v5179 = vpop.f32.mrb[0].mxu0
    %v5180 = vpop.f32.mrb[0].mxu0
    %v5181 = vadd.f32 %v5124, %v5180
    %v5182 = vpop.f32.mrb[0].mxu0
    %5183 = vmatprep.mubr.bf16.mxu0 %v4818
    %5184 = vmatmul.mubr.bf16.gmra.mrb[0].mxu0 %v4817
    %v5185 = vpop.f32.mrb[0].mxu0
    %v5186 = vadd.f32 %v5129, %v5185
    %v5187 = vpop.f32.mrb[0].mxu0
    %v5188 = vpop.f32.mrb[0].mxu0
    %v5189 = vadd.f32 %v5132, %v5188
    %v5190 = vpop.f32.mrb[0].mxu0
    %5191 = vmatprep.mubr.bf16.mxu0 %v4822
    %5192 = vmatmul.mubr.bf16.gmra.mrb[0].mxu0 %v4821
    %v5193 = vpop.f32.mrb[0].mxu0
    %v5194 = vadd.f32 %v5137, %v5193
    %v5195 = vpop.f32.mrb[0].mxu0
    %v5196 = vpop.f32.mrb[0].mxu0
    %v5197 = vadd.f32 %v5140, %v5196
    %v5198 = vpop.f32.mrb[0].mxu0
    %5199 = vdwg.mxu0
    %v5200 = vtanh.pop %v5178
    %v5201 = vtanh.pop %v5181
    %v5202 = vtanh.pop %v5186
    %v5203 = vtanh.pop %v5189
    %v5204 = vtanh.pop %v5194
    %v5205 = vtanh.pop %v5197
    %v5206 = vmul.f32 %v5200, %v5200
    %v5207 = vmul.f32 %v5201, %v5201
    %v5208 = vmul.f32 %v5202, %v5202
    %v5209 = vmul.f32 %v5203, %v5203
    %v5210 = vmul.f32 %v5204, %v5204
    %v5211 = vmul.f32 %v5205, %v5205
    %5212 = vadd.xlane.f32.xlu0 %v5206
    %v5213 = vpop.xlane.xlu0 %5212
    %5214 = vadd.xlane.f32.xlu0 %v5207
    %v5215 = vpop.xlane.xlu0 %5214
    %5216 = vadd.xlane.f32.xlu0 %v5208
    %v5217 = vpop.xlane.xlu0 %5216
    %5218 = vadd.xlane.f32.xlu0 %v5209
    %v5219 = vpop.xlane.xlu0 %5218
    %5220 = vadd.xlane.f32.xlu0 %v5210
    %v5221 = vpop.xlane.xlu0 %5220
    %5222 = vadd.xlane.f32.xlu0 %v5211
    %v5223 = vpop.xlane.xlu0 %5222
    %v5224 = vmax.f32 %v5213, 1e-24
    %v5225 = vmax.f32 %v5215, 1e-24
    %v5226 = vmax.f32 %v5217, 1e-24
    %v5227 = vmax.f32 %v5219, 1e-24
    %v5228 = vmax.f32 %v5221, 1e-24
    %v5229 = vmax.f32 %v5223, 1e-24
    %v5230 = vrsqrt.pop %v5224
    %v5231 = vrsqrt.pop %v5225
    %v5232 = vrsqrt.pop %v5226
    %v5233 = vrsqrt.pop %v5227
    %v5234 = vrsqrt.pop %v5228
    %v5235 = vrsqrt.pop %v5229
    %v5236 = vmul.f32 %v5200, %v5230
    %v5237 = vmul.f32 %v5201, %v5231
    %v5238 = vmul.f32 %v5202, %v5232
    %v5239 = vmul.f32 %v5203, %v5233
    %v5240 = vmul.f32 %v5204, %v5234
    %v5241 = vmul.f32 %v5205, %v5235
    %5242 = vst [vmem:[#allocation23] sm:$0xff] %v5236
    %5243 = vst [vmem:[#allocation23 + $0x8] sm:$0xff] %v5237
    %5244 = vst [vmem:[#allocation23 + $0x10] sm:$0xff] %v5238
    %5245 = vst [vmem:[#allocation23 + $0x18] sm:$0xff] %v5239
    %5246 = vst [vmem:[#allocation23 + $0x20] sm:$0xff] %v5240
    %5247 = vst [vmem:[#allocation23 + $0x28] sm:$0xff] %v5241
    // Predicated region
    $region106: #{fwd.1} parent=1 // pred_check
      _
    $region107: #{fwd.1} parent=1 // pred_check_branch
      %5249 = sbr.rel (0) target = $region109
    $region108: #{fwd.1} parent=1 // pred_region
      %s5251 = ssub.s32 768, 768
      %5252 = vsyncadd [#allocation4], %s5251
      %s5253 = sshll.u32 [#allocation23], 4
      %s5254 = int_to_ptr.vmem [resolvable:$true] %s5253
      %5259 = dma.vmem_to_hbm [thread:$0]  %s5254, 768, %s13, [#allocation4], 128, 128, 8
    $region109: #{fwd.1} parent=1 // pred_fallthru
      _
    // Predicated region
    $region110: #{fwd.1} parent=1 // pred_check
      _
    $region111: #{fwd.1} parent=1 // pred_check_branch
      %5261 = sbr.rel (0) target = $region113
    $region112: #{fwd.1} parent=1 // pred_region
      %5262 = dma.done [#allocation4], 768
    $region113: #{fwd.1} parent=1 // pred_fallthru
      _
    %5263 = vsyncpa [#allocation3], 1
    %5264 = vsyncpa [#allocation6], 1
    %5265 = vsyncpa [#allocation9], 1
    %5266 = vsyncpa [#allocation12], 1
    %5267 = vsyncpa [#allocation15], 1
    %5268 = vsyncpa [#allocation18], 1
    %5269 = vsyncpa [#allocation21], 1
    %5270 = vsyncpa [#allocation4], 1

</llo_original>
